<compile_context>
chip_gen: v7x
topology: tpu7x:2x2x1
jax: 0.10.0
libtpu: 0.0.40
codegen_flags: <defaults>
</compile_context>

<pallas_src>
import jax
import jax.numpy as jnp
from jax.experimental import pallas as pl
from jax.experimental.pallas import tpu as pltpu

EPS = 1e-5


def _round_up(n, m):
    return ((n + m - 1) // m) * m


# --------------------------------------------------------------------------------------
# Kernel
# --------------------------------------------------------------------------------------
def mlp_adapter_kernel(
    x_ref,                  # (tm, HC)   input dtype
    pool_ref, bcast_ref,    # (HC, Hp) / (Hp, HC)  factored per-C-group averaging (MXU)
    ln1_g_ref, ln1_b_ref,   # (1, HC)    f32 gamma/beta, tiled H times (lane-dense)
    w1_ref, b1_ref,         # (HC, hidp) compute dtype, (1, hidp) f32
    w2_ref, b2_ref,         # (hidp, hidp), (1, hidp)
    w3_ref, b3_ref,         # (hidp, HC), (1, HC)
    ln2_g_ref, ln2_b_ref,   # (1, HC)
    o_ref,                  # (tm, HC)
):
    f32 = jnp.float32
    ln_dt = pool_ref.dtype          # bf16 on the perf path, f32 on the bit-faithful path
    mm_dt = w1_ref.dtype
    exact = ln_dt == f32

    pool = pool_ref[...]
    bcast = bcast_ref[...]

    def group_mean(v):
        # Per-C-group row mean broadcast back to (tm, HC); both stages on the MXU, f32 acc.
        pooled = jnp.dot(v.astype(ln_dt), pool, preferred_element_type=f32)
        return jnp.dot(pooled.astype(ln_dt), bcast, preferred_element_type=f32)

    def layer_norm(v, g_ref, b_ref):
        mean = group_mean(v)
        if exact:
            vc = v - mean
            var = group_mean(vc * vc)          # two-pass: numerically faithful f32 path
        else:
            # E[x^2] - mean^2: both pooling matmuls issue back-to-back (no MXU->VPU->MXU
            # round trip).  Clamp to guard the rare cancellation case.
            var = jnp.maximum(group_mean(v * v) - mean * mean, 0.0)
            vc = v - mean
        return vc * jax.lax.rsqrt(var + EPS) * g_ref[...] + b_ref[...]

    x = x_ref[...].astype(f32)

    # ---- LayerNorm #1 (over each C-sized group, lane-dense) ----
    h = layer_norm(x, ln1_g_ref, ln1_b_ref)

    # ---- MLP: Linear -> ReLU -> Linear -> ReLU -> Linear (f32 accumulation, f32 bias) ----
    h = jnp.dot(h.astype(mm_dt), w1_ref[...], preferred_element_type=f32) + b1_ref[...]
    h = jnp.maximum(h, 0.0)
    h = jnp.dot(h.astype(mm_dt), w2_ref[...], preferred_element_type=f32) + b2_ref[...]
    h = jnp.maximum(h, 0.0)
    h = jnp.dot(h.astype(mm_dt), w3_ref[...], preferred_element_type=f32) + b3_ref[...]

    # ---- LayerNorm #2 ----
    y = layer_norm(h, ln2_g_ref, ln2_b_ref)
    o_ref[...] = y.astype(o_ref.dtype)


# --------------------------------------------------------------------------------------
# One-time parameter preparation (hoisted off the per-call critical path)
# --------------------------------------------------------------------------------------
def prepare_params(params, H, C, compute_dtype=jnp.bfloat16):
    """compute_dtype=bfloat16: perf path (bf16 MXU, f32 accumulation / LN math).
    compute_dtype=float32: numerically faithful path."""
    f32 = jnp.float32
    HC = H * C
    hid = params["w1"].shape[1]
    hidp = _round_up(hid, 128)        # pad hidden dim to full 128 lanes (exact: ReLU(0)=0)
    Hp = _round_up(H, 128)            # lane-padded pooling width

    def pad2(a, rows, cols):
        return jnp.pad(a, ((0, rows - a.shape[0]), (0, cols - a.shape[1])))

    eye_h = jnp.eye(H, dtype=f32)
    # pool: column h = mean of that row's h-th C-group; bcast: spreads it back over C lanes.
    pool = pad2(jnp.kron(eye_h, jnp.full((C, 1), 1.0 / C, f32)), HC, Hp)      # (HC, Hp)
    bcast = pad2(jnp.kron(eye_h, jnp.ones((1, C), f32)), Hp, HC)              # (Hp, HC)
    # 1/C is exact in bf16 for power-of-two C; otherwise the rounding sits well inside the
    # perf path's tolerance.  The f32 path keeps these matrices in f32.
    pool = pool.astype(compute_dtype)
    bcast = bcast.astype(compute_dtype)

    return {
        "H": H, "C": C, "HC": HC, "Hp": Hp, "hid": hid, "hidp": hidp,
        "pool": pool, "bcast": bcast,
        "ln1_g": jnp.tile(params["ln1_g"].reshape(1, C).astype(f32), (1, H)),
        "ln1_b": jnp.tile(params["ln1_b"].reshape(1, C).astype(f32), (1, H)),
        "ln2_g": jnp.tile(params["ln2_g"].reshape(1, C).astype(f32), (1, H)),
        "ln2_b": jnp.tile(params["ln2_b"].reshape(1, C).astype(f32), (1, H)),
        "w1": pad2(params["w1"], HC, hidp).astype(compute_dtype),
        "b1": pad2(params["b1"], 1, hidp).astype(f32),
        "w2": pad2(params["w2"], hidp, hidp).astype(compute_dtype),
        "b2": pad2(params["b2"], 1, hidp).astype(f32),
        "w3": pad2(params["w3"], hidp, HC).astype(compute_dtype),
        "b3": pad2(params["b3"], 1, HC).astype(f32),
    }


# --------------------------------------------------------------------------------------
# Wrapper
# --------------------------------------------------------------------------------------
def _vmem_budget_bytes():
    cap = 64 * 1024 * 1024                      # conservative default (v7x per-core VMEM)
    try:
        cap = int(pltpu.get_tpu_info().vmem_capacity_bytes)
    except Exception:
        pass
    cap = min(cap, 128 * 1024 * 1024)
    return (cap * 3) // 4                       # headroom for compiler-internal scratch


def _forward(x2, prepped, tm_eff, vmem_limit, single_buffer_consts):
    M, HC = x2.shape
    Hp, hidp = prepped["Hp"], prepped["hidp"]

    def cspec(shape):
        if single_buffer_consts:
            # Grid-invariant block: one VMEM copy is enough (no double buffering).
            return pl.BlockSpec(shape, lambda i: (0, 0), pipeline_mode=pl.Buffered(1))
        return pl.BlockSpec(shape, lambda i: (0, 0))

    return pl.pallas_call(
        mlp_adapter_kernel,
        out_shape=jax.ShapeDtypeStruct((M, HC), x2.dtype),
        grid_spec=pltpu.PrefetchScalarGridSpec(
            num_scalar_prefetch=0,
            grid=(pl.cdiv(M, tm_eff),),
            in_specs=[
                pl.BlockSpec((tm_eff, HC), lambda i: (i, 0)),   # x rows
                cspec((HC, Hp)), cspec((Hp, HC)),               # pooling / broadcast
                cspec((1, HC)), cspec((1, HC)),                 # ln1 gamma / beta
                cspec((HC, hidp)), cspec((1, hidp)),            # linear1
                cspec((hidp, hidp)), cspec((1, hidp)),          # linear2
                cspec((hidp, HC)), cspec((1, HC)),              # linear3
                cspec((1, HC)), cspec((1, HC)),                 # ln2 gamma / beta
            ],
            out_specs=pl.BlockSpec((tm_eff, HC), lambda i: (i, 0)),
        ),
        compiler_params=pltpu.CompilerParams(
            dimension_semantics=("parallel",),
            vmem_limit_bytes=vmem_limit,
        ),
    )(
        x2,
        prepped["pool"], prepped["bcast"],
        prepped["ln1_g"], prepped["ln1_b"],
        prepped["w1"], prepped["b1"],
        prepped["w2"], prepped["b2"],
        prepped["w3"], prepped["b3"],
        prepped["ln2_g"], prepped["ln2_b"],
    )


def mlp_adapter_head(x, prepped, *, tm=512):
    """x: [B, T, H, C] -> [B, T, H, C].  `prepped` comes from prepare_params()."""
    B, T, H, C = x.shape
    assert H == prepped["H"] and C == prepped["C"]
    M, HC = B * T, H * C
    Hp, hidp = prepped["Hp"], prepped["hidp"]
    x2 = x.reshape(M, HC)           # free view: h outer, c inner (matches the rearrange)

    # ---- VMEM-footprint-driven row-tile / vmem_limit sizing ----
    x_b = jnp.dtype(x.dtype).itemsize
    mm_b = jnp.dtype(prepped["w1"].dtype).itemsize
    ln_b = jnp.dtype(prepped["pool"].dtype).itemsize
    const_bytes = (
        2 * HC * Hp * ln_b                                    # pooling + broadcast matrices
        + (HC * hidp + hidp * hidp + hidp * HC) * mm_b        # w1, w2, w3
        + 8 * (2 * hidp + 5 * HC) * 4                         # biases + gammas/betas (sublane-padded)
    )
    per_row_bytes = (
        2 * HC * x_b + 2 * HC * x_b                           # double-buffered in / out tiles
        + 4 * max(HC, hidp) * 4 + 2 * Hp * 4                  # live f32 intermediates
    )
    budget = _vmem_budget_bytes()
    tm_eff = min(tm, max(8, (budget - const_bytes) // per_row_bytes))
    tm_eff = max(8, (tm_eff // 8) * 8)
    if M > 8:                                                 # >= 2 grid steps: megacore + pipeline overlap
        tm_eff = min(tm_eff, _round_up((M + 1) // 2, 8))
    if tm_eff >= M:                                           # single full block (legal for any M)
        tm_eff = M
    vmem_limit = int(min(max(budget, const_bytes + 8 * per_row_bytes + (2 << 20)),
                         128 * 1024 * 1024))

    try:
        out = _forward(x2, prepped, tm_eff, vmem_limit, single_buffer_consts=True)
        out = jax.block_until_ready(out)
    except Exception:
        # pipeline_mode=pl.Buffered(1) on pallas_call operands is JAX-version dependent;
        # fall back to default double-buffered constants (still correct, slightly more VMEM).
        out = _forward(x2, prepped, tm_eff, vmem_limit, single_buffer_consts=False)
    return out.reshape(B, T, H, C)


# --------------------------------------------------------------------------------------
# Synthetic parameters + pure-JAX reference
# --------------------------------------------------------------------------------------
def init_params(key, H, C, hidden_size_factor=1.0):
    """Deterministic synthetic parameters matching MLPAdapterHead.__init__ shapes."""
    HC = H * C
    hid = int(C * hidden_size_factor)
    ks = jax.random.split(key, 6)
    scale = 0.02
    return {
        "ln1_g": jnp.ones((1, C), jnp.float32),
        "ln1_b": jnp.zeros((1, C), jnp.float32),
        "w1": scale * jax.random.normal(ks[0], (HC, hid), jnp.float32),
        "b1": scale * jax.random.normal(ks[1], (1, hid), jnp.float32),
        "w2": scale * jax.random.normal(ks[2], (hid, hid), jnp.float32),
        "b2": scale * jax.random.normal(ks[3], (1, hid), jnp.float32),
        "w3": scale * jax.random.normal(ks[4], (hid, HC), jnp.float32),
        "b3": scale * jax.random.normal(ks[5], (1, HC), jnp.float32),
        "ln2_g": jnp.ones((1, C), jnp.float32),
        "ln2_b": jnp.zeros((1, C), jnp.float32),
    }


def _layernorm_last(x, gamma, beta):
    mean = jnp.mean(x, axis=-1, keepdims=True)
    xc = x - mean
    var = jnp.mean(xc * xc, axis=-1, keepdims=True)
    return xc * jax.lax.rsqrt(var + EPS) * gamma + beta


def reference(x, p):
    """Pure-JAX f32 reference of the adapter Sequential (true-f32 matmuls)."""
    HI = jax.lax.Precision.HIGHEST
    B, T, H, C = x.shape
    h = _layernorm_last(x, p["ln1_g"].reshape(C), p["ln1_b"].reshape(C))
    h = h.reshape(B, T, H * C)
    h = jnp.maximum(jnp.dot(h, p["w1"], precision=HI) + p["b1"].reshape(-1), 0.0)
    h = jnp.maximum(jnp.dot(h, p["w2"], precision=HI) + p["b2"].reshape(-1), 0.0)
    h = jnp.dot(h, p["w3"], precision=HI) + p["b3"].reshape(-1)
    h = h.reshape(B, T, H, C)
    return _layernorm_last(h, p["ln2_g"].reshape(C), p["ln2_b"].reshape(C))


if __name__ == "__main__":
    # Small shapes consistent with [B, T, H, C]; source_size[-2]=H, source_size[-1]=C.
    B, T, H, C = 2, 8, 4, 32     # hidden_dim = int(C * 1.0) = 32, H*C = 128
    key = jax.random.PRNGKey(0)
    kx, kp = jax.random.split(key)
    x = jax.random.normal(kx, (B, T, H, C), jnp.float32)
    params = init_params(kp, H, C, hidden_size_factor=1.0)

    ref = reference(x, params)

    # f32 path: numerically faithful to the PyTorch module.
    prep_f32 = prepare_params(params, H, C, compute_dtype=jnp.float32)
    out_f32 = jax.block_until_ready(mlp_adapter_head(x, prep_f32))
    assert out_f32.shape == (B, T, H, C)
    assert jnp.allclose(out_f32, ref, rtol=5e-3, atol=5e-3)

    # bf16 path (bf16 MXU matmuls incl. LN reductions, f32 accumulation): perf default.
    prep_bf16 = prepare_params(params, H, C)
    out_bf16 = jax.block_until_ready(mlp_adapter_head(x, prep_bf16))
    assert jnp.allclose(out_bf16, ref, rtol=3e-2, atol=3e-2)

    # Odd row count (M not a multiple of 8, single full block) + hidden_size_factor != 1.
    B2, T2 = 1, 5
    x_b = jax.random.normal(jax.random.PRNGKey(1), (B2, T2, H, C), jnp.float32)
    params_b = init_params(jax.random.PRNGKey(2), H, C, hidden_size_factor=2.0)
    prep_b = prepare_params(params_b, H, C, compute_dtype=jnp.float32)
    out_b = jax.block_until_ready(mlp_adapter_head(x_b, prep_b))
    assert jnp.allclose(out_b, reference(x_b, params_b), rtol=5e-3, atol=5e-3)

    print("KERNEL_OK")
</pallas_src>

<mosaic_0001>
module attributes {stable_mosaic.version = 11 : i64} {
  func.func @mlp_adapter_kernel(%arg0: i32, %arg1: memref<8x128xf32, #tpu.memory_space<vmem>>, %arg2: memref<128x128xf32, #tpu.memory_space<vmem>>, %arg3: memref<128x128xf32, #tpu.memory_space<vmem>>, %arg4: memref<1x128xf32, #tpu.memory_space<vmem>>, %arg5: memref<1x128xf32, #tpu.memory_space<vmem>>, %arg6: memref<128x128xf32, #tpu.memory_space<vmem>>, %arg7: memref<1x128xf32, #tpu.memory_space<vmem>>, %arg8: memref<128x128xf32, #tpu.memory_space<vmem>>, %arg9: memref<1x128xf32, #tpu.memory_space<vmem>>, %arg10: memref<128x128xf32, #tpu.memory_space<vmem>>, %arg11: memref<1x128xf32, #tpu.memory_space<vmem>>, %arg12: memref<1x128xf32, #tpu.memory_space<vmem>>, %arg13: memref<1x128xf32, #tpu.memory_space<vmem>>, %arg14: memref<8x128xf32, #tpu.memory_space<vmem>>) attributes {dimension_semantics = [#tpu.dimension_semantics<parallel>], iteration_bounds = array<i64: 2>, scalar_prefetch = 0 : i64, scratch_operands = 0 : i64, tpu.core_type = #tpu.core_type<tc>, window_params = [{transform_indices = @transform_0, window_bounds = array<i64: 8, 128>}, {pipeline_mode = #tpu.pipeline_mode<synchronous>, transform_indices = @transform_1, window_bounds = array<i64: 128, 128>}, {pipeline_mode = #tpu.pipeline_mode<synchronous>, transform_indices = @transform_2, window_bounds = array<i64: 128, 128>}, {pipeline_mode = #tpu.pipeline_mode<synchronous>, transform_indices = @transform_3, window_bounds = array<i64: 1, 128>}, {pipeline_mode = #tpu.pipeline_mode<synchronous>, transform_indices = @transform_4, window_bounds = array<i64: 1, 128>}, {pipeline_mode = #tpu.pipeline_mode<synchronous>, transform_indices = @transform_5, window_bounds = array<i64: 128, 128>}, {pipeline_mode = #tpu.pipeline_mode<synchronous>, transform_indices = @transform_6, window_bounds = array<i64: 1, 128>}, {pipeline_mode = #tpu.pipeline_mode<synchronous>, transform_indices = @transform_7, window_bounds = array<i64: 128, 128>}, {pipeline_mode = #tpu.pipeline_mode<synchronous>, transform_indices = @transform_8, window_bounds = array<i64: 1, 128>}, {pipeline_mode = #tpu.pipeline_mode<synchronous>, transform_indices = @transform_9, window_bounds = array<i64: 128, 128>}, {pipeline_mode = #tpu.pipeline_mode<synchronous>, transform_indices = @transform_10, window_bounds = array<i64: 1, 128>}, {pipeline_mode = #tpu.pipeline_mode<synchronous>, transform_indices = @transform_11, window_bounds = array<i64: 1, 128>}, {pipeline_mode = #tpu.pipeline_mode<synchronous>, transform_indices = @transform_12, window_bounds = array<i64: 1, 128>}, {transform_indices = @transform_13, window_bounds = array<i64: 8, 128>}]} {
    %c0 = arith.constant 0 : index
    %c0_0 = arith.constant 0 : index
    %0 = vector.load %arg2[%c0, %c0_0] : memref<128x128xf32, #tpu.memory_space<vmem>>, vector<128x128xf32>
    %c0_1 = arith.constant 0 : index
    %c0_2 = arith.constant 0 : index
    %1 = vector.load %arg3[%c0_1, %c0_2] : memref<128x128xf32, #tpu.memory_space<vmem>>, vector<128x128xf32>
    %c0_3 = arith.constant 0 : index
    %c0_4 = arith.constant 0 : index
    %2 = vector.load %arg1[%c0_3, %c0_4] : memref<8x128xf32, #tpu.memory_space<vmem>>, vector<8x128xf32>
    %cst = arith.constant dense<0.000000e+00> : vector<8x128xf32>
    %3 = tpu.matmul %2, %0, %cst {dimension_numbers = #tpu.dot_dimension_numbers<[1], [0], [0], [1], [0, 0, 1, 1], [], []>} : vector<8x128xf32>, vector<128x128xf32>, vector<8x128xf32> -> vector<8x128xf32>
    %cst_5 = arith.constant dense<0.000000e+00> : vector<8x128xf32>
    %4 = tpu.matmul %3, %1, %cst_5 {dimension_numbers = #tpu.dot_dimension_numbers<[1], [0], [0], [1], [0, 0, 1, 1], [], []>} : vector<8x128xf32>, vector<128x128xf32>, vector<8x128xf32> -> vector<8x128xf32>
    %5 = arith.subf %2, %4 : vector<8x128xf32>
    %6 = arith.mulf %5, %5 : vector<8x128xf32>
    %cst_6 = arith.constant dense<0.000000e+00> : vector<8x128xf32>
    %7 = tpu.matmul %6, %0, %cst_6 {dimension_numbers = #tpu.dot_dimension_numbers<[1], [0], [0], [1], [0, 0, 1, 1], [], []>} : vector<8x128xf32>, vector<128x128xf32>, vector<8x128xf32> -> vector<8x128xf32>
    %cst_7 = arith.constant dense<0.000000e+00> : vector<8x128xf32>
    %8 = tpu.matmul %7, %1, %cst_7 {dimension_numbers = #tpu.dot_dimension_numbers<[1], [0], [0], [1], [0, 0, 1, 1], [], []>} : vector<8x128xf32>, vector<128x128xf32>, vector<8x128xf32> -> vector<8x128xf32>
    %cst_8 = arith.constant 9.99999974E-6 : f32
    %9 = vector.broadcast %cst_8 : f32 to vector<8x128xf32>
    %10 = arith.addf %8, %9 : vector<8x128xf32>
    %11 = math.rsqrt %10 : vector<8x128xf32>
    %12 = arith.mulf %5, %11 : vector<8x128xf32>
    %c0_9 = arith.constant 0 : index
    %c0_10 = arith.constant 0 : index
    %13 = vector.load %arg4[%c0_9, %c0_10] : memref<1x128xf32, #tpu.memory_space<vmem>>, vector<1x128xf32>
    %14 = vector.broadcast %13 : vector<1x128xf32> to vector<8x128xf32>
    %15 = arith.mulf %12, %14 : vector<8x128xf32>
    %c0_11 = arith.constant 0 : index
    %c0_12 = arith.constant 0 : index
    %16 = vector.load %arg5[%c0_11, %c0_12] : memref<1x128xf32, #tpu.memory_space<vmem>>, vector<1x128xf32>
    %17 = vector.broadcast %16 : vector<1x128xf32> to vector<8x128xf32>
    %18 = arith.addf %15, %17 : vector<8x128xf32>
    %c0_13 = arith.constant 0 : index
    %c0_14 = arith.constant 0 : index
    %19 = vector.load %arg6[%c0_13, %c0_14] : memref<128x128xf32, #tpu.memory_space<vmem>>, vector<128x128xf32>
    %cst_15 = arith.constant dense<0.000000e+00> : vector<8x128xf32>
    %20 = tpu.matmul %18, %19, %cst_15 {dimension_numbers = #tpu.dot_dimension_numbers<[1], [0], [0], [1], [0, 0, 1, 1], [], []>} : vector<8x128xf32>, vector<128x128xf32>, vector<8x128xf32> -> vector<8x128xf32>
    %c0_16 = arith.constant 0 : index
    %c0_17 = arith.constant 0 : index
    %21 = vector.load %arg7[%c0_16, %c0_17] : memref<1x128xf32, #tpu.memory_space<vmem>>, vector<1x128xf32>
    %22 = vector.broadcast %21 : vector<1x128xf32> to vector<8x128xf32>
    %23 = arith.addf %20, %22 : vector<8x128xf32>
    %cst_18 = arith.constant 0.000000e+00 : f32
    %24 = vector.broadcast %cst_18 : f32 to vector<8x128xf32>
    %25 = arith.maximumf %23, %24 : vector<8x128xf32>
    %c0_19 = arith.constant 0 : index
    %c0_20 = arith.constant 0 : index
    %26 = vector.load %arg8[%c0_19, %c0_20] : memref<128x128xf32, #tpu.memory_space<vmem>>, vector<128x128xf32>
    %cst_21 = arith.constant dense<0.000000e+00> : vector<8x128xf32>
    %27 = tpu.matmul %25, %26, %cst_21 {dimension_numbers = #tpu.dot_dimension_numbers<[1], [0], [0], [1], [0, 0, 1, 1], [], []>} : vector<8x128xf32>, vector<128x128xf32>, vector<8x128xf32> -> vector<8x128xf32>
    %c0_22 = arith.constant 0 : index
    %c0_23 = arith.constant 0 : index
    %28 = vector.load %arg9[%c0_22, %c0_23] : memref<1x128xf32, #tpu.memory_space<vmem>>, vector<1x128xf32>
    %29 = vector.broadcast %28 : vector<1x128xf32> to vector<8x128xf32>
    %30 = arith.addf %27, %29 : vector<8x128xf32>
    %cst_24 = arith.constant 0.000000e+00 : f32
    %31 = vector.broadcast %cst_24 : f32 to vector<8x128xf32>
    %32 = arith.maximumf %30, %31 : vector<8x128xf32>
    %c0_25 = arith.constant 0 : index
    %c0_26 = arith.constant 0 : index
    %33 = vector.load %arg10[%c0_25, %c0_26] : memref<128x128xf32, #tpu.memory_space<vmem>>, vector<128x128xf32>
    %cst_27 = arith.constant dense<0.000000e+00> : vector<8x128xf32>
    %34 = tpu.matmul %32, %33, %cst_27 {dimension_numbers = #tpu.dot_dimension_numbers<[1], [0], [0], [1], [0, 0, 1, 1], [], []>} : vector<8x128xf32>, vector<128x128xf32>, vector<8x128xf32> -> vector<8x128xf32>
    %c0_28 = arith.constant 0 : index
    %c0_29 = arith.constant 0 : index
    %35 = vector.load %arg11[%c0_28, %c0_29] : memref<1x128xf32, #tpu.memory_space<vmem>>, vector<1x128xf32>
    %36 = vector.broadcast %35 : vector<1x128xf32> to vector<8x128xf32>
    %37 = arith.addf %34, %36 : vector<8x128xf32>
    %cst_30 = arith.constant dense<0.000000e+00> : vector<8x128xf32>
    %38 = tpu.matmul %37, %0, %cst_30 {dimension_numbers = #tpu.dot_dimension_numbers<[1], [0], [0], [1], [0, 0, 1, 1], [], []>} : vector<8x128xf32>, vector<128x128xf32>, vector<8x128xf32> -> vector<8x128xf32>
    %cst_31 = arith.constant dense<0.000000e+00> : vector<8x128xf32>
    %39 = tpu.matmul %38, %1, %cst_31 {dimension_numbers = #tpu.dot_dimension_numbers<[1], [0], [0], [1], [0, 0, 1, 1], [], []>} : vector<8x128xf32>, vector<128x128xf32>, vector<8x128xf32> -> vector<8x128xf32>
    %40 = arith.subf %37, %39 : vector<8x128xf32>
    %41 = arith.mulf %40, %40 : vector<8x128xf32>
    %cst_32 = arith.constant dense<0.000000e+00> : vector<8x128xf32>
    %42 = tpu.matmul %41, %0, %cst_32 {dimension_numbers = #tpu.dot_dimension_numbers<[1], [0], [0], [1], [0, 0, 1, 1], [], []>} : vector<8x128xf32>, vector<128x128xf32>, vector<8x128xf32> -> vector<8x128xf32>
    %cst_33 = arith.constant dense<0.000000e+00> : vector<8x128xf32>
    %43 = tpu.matmul %42, %1, %cst_33 {dimension_numbers = #tpu.dot_dimension_numbers<[1], [0], [0], [1], [0, 0, 1, 1], [], []>} : vector<8x128xf32>, vector<128x128xf32>, vector<8x128xf32> -> vector<8x128xf32>
    %cst_34 = arith.constant 9.99999974E-6 : f32
    %44 = vector.broadcast %cst_34 : f32 to vector<8x128xf32>
    %45 = arith.addf %43, %44 : vector<8x128xf32>
    %46 = math.rsqrt %45 : vector<8x128xf32>
    %47 = arith.mulf %40, %46 : vector<8x128xf32>
    %c0_35 = arith.constant 0 : index
    %c0_36 = arith.constant 0 : index
    %48 = vector.load %arg12[%c0_35, %c0_36] : memref<1x128xf32, #tpu.memory_space<vmem>>, vector<1x128xf32>
    %49 = vector.broadcast %48 : vector<1x128xf32> to vector<8x128xf32>
    %50 = arith.mulf %47, %49 : vector<8x128xf32>
    %c0_37 = arith.constant 0 : index
    %c0_38 = arith.constant 0 : index
    %51 = vector.load %arg13[%c0_37, %c0_38] : memref<1x128xf32, #tpu.memory_space<vmem>>, vector<1x128xf32>
    %52 = vector.broadcast %51 : vector<1x128xf32> to vector<8x128xf32>
    %53 = arith.addf %50, %52 : vector<8x128xf32>
    %c0_39 = arith.constant 0 : index
    %c0_40 = arith.constant 0 : index
    %54 = vector.load %arg14[%c0_39, %c0_40] : memref<8x128xf32, #tpu.memory_space<vmem>>, vector<8x128xf32>
    tpu.vector_store %arg14[%c0_39, %c0_40], %53 {strides = array<i32>} : memref<8x128xf32, #tpu.memory_space<vmem>>, vector<8x128xf32>,
    return
  }
  func.func @transform_0(%arg0: i32) -> (i32, i32) {
    %c0_i32 = arith.constant 0 : i32
    %c0_i32_0 = arith.constant 0 : i32
    return %arg0, %c0_i32 : i32, i32
  }
  func.func @transform_1(%arg0: i32) -> (i32, i32) {
    %c0_i32 = arith.constant 0 : i32
    %c0_i32_0 = arith.constant 0 : i32
    %c0_i32_1 = arith.constant 0 : i32
    return %c0_i32, %c0_i32_0 : i32, i32
  }
  func.func @transform_2(%arg0: i32) -> (i32, i32) {
    %c0_i32 = arith.constant 0 : i32
    %c0_i32_0 = arith.constant 0 : i32
    %c0_i32_1 = arith.constant 0 : i32
    return %c0_i32, %c0_i32_0 : i32, i32
  }
  func.func @transform_3(%arg0: i32) -> (i32, i32) {
    %c0_i32 = arith.constant 0 : i32
    %c0_i32_0 = arith.constant 0 : i32
    %c0_i32_1 = arith.constant 0 : i32
    return %c0_i32, %c0_i32_0 : i32, i32
  }
  func.func @transform_4(%arg0: i32) -> (i32, i32) {
    %c0_i32 = arith.constant 0 : i32
    %c0_i32_0 = arith.constant 0 : i32
    %c0_i32_1 = arith.constant 0 : i32
    return %c0_i32, %c0_i32_0 : i32, i32
  }
  func.func @transform_5(%arg0: i32) -> (i32, i32) {
    %c0_i32 = arith.constant 0 : i32
    %c0_i32_0 = arith.constant 0 : i32
    %c0_i32_1 = arith.constant 0 : i32
    return %c0_i32, %c0_i32_0 : i32, i32
  }
  func.func @transform_6(%arg0: i32) -> (i32, i32) {
    %c0_i32 = arith.constant 0 : i32
    %c0_i32_0 = arith.constant 0 : i32
    %c0_i32_1 = arith.constant 0 : i32
    return %c0_i32, %c0_i32_0 : i32, i32
  }
  func.func @transform_7(%arg0: i32) -> (i32, i32) {
    %c0_i32 = arith.constant 0 : i32
    %c0_i32_0 = arith.constant 0 : i32
    %c0_i32_1 = arith.constant 0 : i32
    return %c0_i32, %c0_i32_0 : i32, i32
  }
  func.func @transform_8(%arg0: i32) -> (i32, i32) {
    %c0_i32 = arith.constant 0 : i32
    %c0_i32_0 = arith.constant 0 : i32
    %c0_i32_1 = arith.constant 0 : i32
    return %c0_i32, %c0_i32_0 : i32, i32
  }
  func.func @transform_9(%arg0: i32) -> (i32, i32) {
    %c0_i32 = arith.constant 0 : i32
    %c0_i32_0 = arith.constant 0 : i32
    %c0_i32_1 = arith.constant 0 : i32
    return %c0_i32, %c0_i32_0 : i32, i32
  }
  func.func @transform_10(%arg0: i32) -> (i32, i32) {
    %c0_i32 = arith.constant 0 : i32
    %c0_i32_0 = arith.constant 0 : i32
    %c0_i32_1 = arith.constant 0 : i32
    return %c0_i32, %c0_i32_0 : i32, i32
  }
  func.func @transform_11(%arg0: i32) -> (i32, i32) {
    %c0_i32 = arith.constant 0 : i32
    %c0_i32_0 = arith.constant 0 : i32
    %c0_i32_1 = arith.constant 0 : i32
    return %c0_i32, %c0_i32_0 : i32, i32
  }
  func.func @transform_12(%arg0: i32) -> (i32, i32) {
    %c0_i32 = arith.constant 0 : i32
    %c0_i32_0 = arith.constant 0 : i32
    %c0_i32_1 = arith.constant 0 : i32
    return %c0_i32, %c0_i32_0 : i32, i32
  }
  func.func @transform_13(%arg0: i32) -> (i32, i32) {
    %c0_i32 = arith.constant 0 : i32
    %c0_i32_0 = arith.constant 0 : i32
    return %arg0, %c0_i32 : i32, i32
  }
}

module attributes {stable_mosaic.version = 11 : i64} {
  func.func @mlp_adapter_kernel(%arg0: i32, %arg1: memref<8x128xf32, #tpu.memory_space<vmem>>, %arg2: memref<128x128xf32, #tpu.memory_space<vmem>>, %arg3: memref<128x128xf32, #tpu.memory_space<vmem>>, %arg4: memref<1x128xf32, #tpu.memory_space<vmem>>, %arg5: memref<1x128xf32, #tpu.memory_space<vmem>>, %arg6: memref<128x128xf32, #tpu.memory_space<vmem>>, %arg7: memref<1x128xf32, #tpu.memory_space<vmem>>, %arg8: memref<128x128xf32, #tpu.memory_space<vmem>>, %arg9: memref<1x128xf32, #tpu.memory_space<vmem>>, %arg10: memref<128x128xf32, #tpu.memory_space<vmem>>, %arg11: memref<1x128xf32, #tpu.memory_space<vmem>>, %arg12: memref<1x128xf32, #tpu.memory_space<vmem>>, %arg13: memref<1x128xf32, #tpu.memory_space<vmem>>, %arg14: memref<8x128xf32, #tpu.memory_space<vmem>>) attributes {dimension_semantics = [#tpu.dimension_semantics<parallel>], iteration_bounds = array<i64: 2>, scalar_prefetch = 0 : i64, scratch_operands = 0 : i64, tpu.core_type = #tpu.core_type<tc>, window_params = [{transform_indices = @transform_0, window_bounds = array<i64: 8, 128>}, {pipeline_mode = #tpu.pipeline_mode<synchronous>, transform_indices = @transform_1, window_bounds = array<i64: 128, 128>}, {pipeline_mode = #tpu.pipeline_mode<synchronous>, transform_indices = @transform_2, window_bounds = array<i64: 128, 128>}, {pipeline_mode = #tpu.pipeline_mode<synchronous>, transform_indices = @transform_3, window_bounds = array<i64: 1, 128>}, {pipeline_mode = #tpu.pipeline_mode<synchronous>, transform_indices = @transform_4, window_bounds = array<i64: 1, 128>}, {pipeline_mode = #tpu.pipeline_mode<synchronous>, transform_indices = @transform_5, window_bounds = array<i64: 128, 128>}, {pipeline_mode = #tpu.pipeline_mode<synchronous>, transform_indices = @transform_6, window_bounds = array<i64: 1, 128>}, {pipeline_mode = #tpu.pipeline_mode<synchronous>, transform_indices = @transform_7, window_bounds = array<i64: 128, 128>}, {pipeline_mode = #tpu.pipeline_mode<synchronous>, transform_indices = @transform_8, window_bounds = array<i64: 1, 128>}, {pipeline_mode = #tpu.pipeline_mode<synchronous>, transform_indices = @transform_9, window_bounds = array<i64: 128, 128>}, {pipeline_mode = #tpu.pipeline_mode<synchronous>, transform_indices = @transform_10, window_bounds = array<i64: 1, 128>}, {pipeline_mode = #tpu.pipeline_mode<synchronous>, transform_indices = @transform_11, window_bounds = array<i64: 1, 128>}, {pipeline_mode = #tpu.pipeline_mode<synchronous>, transform_indices = @transform_12, window_bounds = array<i64: 1, 128>}, {transform_indices = @transform_13, window_bounds = array<i64: 8, 128>}]} {
    %c0 = arith.constant 0 : index
    %c0_0 = arith.constant 0 : index
    %0 = vector.load %arg2[%c0, %c0_0] : memref<128x128xf32, #tpu.memory_space<vmem>>, vector<128x128xf32>
    %c0_1 = arith.constant 0 : index
    %c0_2 = arith.constant 0 : index
    %1 = vector.load %arg3[%c0_1, %c0_2] : memref<128x128xf32, #tpu.memory_space<vmem>>, vector<128x128xf32>
    %c0_3 = arith.constant 0 : index
    %c0_4 = arith.constant 0 : index
    %2 = vector.load %arg1[%c0_3, %c0_4] : memref<8x128xf32, #tpu.memory_space<vmem>>, vector<8x128xf32>
    %cst = arith.constant dense<0.000000e+00> : vector<8x128xf32>
    %3 = tpu.matmul %2, %0, %cst {dimension_numbers = #tpu.dot_dimension_numbers<[1], [0], [0], [1], [0, 0, 1, 1], [], []>} : vector<8x128xf32>, vector<128x128xf32>, vector<8x128xf32> -> vector<8x128xf32>
    %cst_5 = arith.constant dense<0.000000e+00> : vector<8x128xf32>
    %4 = tpu.matmul %3, %1, %cst_5 {dimension_numbers = #tpu.dot_dimension_numbers<[1], [0], [0], [1], [0, 0, 1, 1], [], []>} : vector<8x128xf32>, vector<128x128xf32>, vector<8x128xf32> -> vector<8x128xf32>
    %5 = arith.subf %2, %4 : vector<8x128xf32>
    %6 = arith.mulf %5, %5 : vector<8x128xf32>
    %cst_6 = arith.constant dense<0.000000e+00> : vector<8x128xf32>
    %7 = tpu.matmul %6, %0, %cst_6 {dimension_numbers = #tpu.dot_dimension_numbers<[1], [0], [0], [1], [0, 0, 1, 1], [], []>} : vector<8x128xf32>, vector<128x128xf32>, vector<8x128xf32> -> vector<8x128xf32>
    %cst_7 = arith.constant dense<0.000000e+00> : vector<8x128xf32>
    %8 = tpu.matmul %7, %1, %cst_7 {dimension_numbers = #tpu.dot_dimension_numbers<[1], [0], [0], [1], [0, 0, 1, 1], [], []>} : vector<8x128xf32>, vector<128x128xf32>, vector<8x128xf32> -> vector<8x128xf32>
    %cst_8 = arith.constant 9.99999974E-6 : f32
    %9 = vector.broadcast %cst_8 : f32 to vector<8x128xf32>
    %10 = arith.addf %8, %9 : vector<8x128xf32>
    %11 = math.rsqrt %10 : vector<8x128xf32>
    %12 = arith.mulf %5, %11 : vector<8x128xf32>
    %c0_9 = arith.constant 0 : index
    %c0_10 = arith.constant 0 : index
    %13 = vector.load %arg4[%c0_9, %c0_10] : memref<1x128xf32, #tpu.memory_space<vmem>>, vector<1x128xf32>
    %14 = vector.broadcast %13 : vector<1x128xf32> to vector<8x128xf32>
    %15 = arith.mulf %12, %14 : vector<8x128xf32>
    %c0_11 = arith.constant 0 : index
    %c0_12 = arith.constant 0 : index
    %16 = vector.load %arg5[%c0_11, %c0_12] : memref<1x128xf32, #tpu.memory_space<vmem>>, vector<1x128xf32>
    %17 = vector.broadcast %16 : vector<1x128xf32> to vector<8x128xf32>
    %18 = arith.addf %15, %17 : vector<8x128xf32>
    %c0_13 = arith.constant 0 : index
    %c0_14 = arith.constant 0 : index
    %19 = vector.load %arg6[%c0_13, %c0_14] : memref<128x128xf32, #tpu.memory_space<vmem>>, vector<128x128xf32>
    %cst_15 = arith.constant dense<0.000000e+00> : vector<8x128xf32>
    %20 = tpu.matmul %18, %19, %cst_15 {dimension_numbers = #tpu.dot_dimension_numbers<[1], [0], [0], [1], [0, 0, 1, 1], [], []>} : vector<8x128xf32>, vector<128x128xf32>, vector<8x128xf32> -> vector<8x128xf32>
    %c0_16 = arith.constant 0 : index
    %c0_17 = arith.constant 0 : index
    %21 = vector.load %arg7[%c0_16, %c0_17] : memref<1x128xf32, #tpu.memory_space<vmem>>, vector<1x128xf32>
    %22 = vector.broadcast %21 : vector<1x128xf32> to vector<8x128xf32>
    %23 = arith.addf %20, %22 : vector<8x128xf32>
    %cst_18 = arith.constant 0.000000e+00 : f32
    %24 = vector.broadcast %cst_18 : f32 to vector<8x128xf32>
    %25 = arith.maximumf %23, %24 : vector<8x128xf32>
    %c0_19 = arith.constant 0 : index
    %c0_20 = arith.constant 0 : index
    %26 = vector.load %arg8[%c0_19, %c0_20] : memref<128x128xf32, #tpu.memory_space<vmem>>, vector<128x128xf32>
    %cst_21 = arith.constant dense<0.000000e+00> : vector<8x128xf32>
    %27 = tpu.matmul %25, %26, %cst_21 {dimension_numbers = #tpu.dot_dimension_numbers<[1], [0], [0], [1], [0, 0, 1, 1], [], []>} : vector<8x128xf32>, vector<128x128xf32>, vector<8x128xf32> -> vector<8x128xf32>
    %c0_22 = arith.constant 0 : index
    %c0_23 = arith.constant 0 : index
    %28 = vector.load %arg9[%c0_22, %c0_23] : memref<1x128xf32, #tpu.memory_space<vmem>>, vector<1x128xf32>
    %29 = vector.broadcast %28 : vector<1x128xf32> to vector<8x128xf32>
    %30 = arith.addf %27, %29 : vector<8x128xf32>
    %cst_24 = arith.constant 0.000000e+00 : f32
    %31 = vector.broadcast %cst_24 : f32 to vector<8x128xf32>
    %32 = arith.maximumf %30, %31 : vector<8x128xf32>
    %c0_25 = arith.constant 0 : index
    %c0_26 = arith.constant 0 : index
    %33 = vector.load %arg10[%c0_25, %c0_26] : memref<128x128xf32, #tpu.memory_space<vmem>>, vector<128x128xf32>
    %cst_27 = arith.constant dense<0.000000e+00> : vector<8x128xf32>
    %34 = tpu.matmul %32, %33, %cst_27 {dimension_numbers = #tpu.dot_dimension_numbers<[1], [0], [0], [1], [0, 0, 1, 1], [], []>} : vector<8x128xf32>, vector<128x128xf32>, vector<8x128xf32> -> vector<8x128xf32>
    %c0_28 = arith.constant 0 : index
    %c0_29 = arith.constant 0 : index
    %35 = vector.load %arg11[%c0_28, %c0_29] : memref<1x128xf32, #tpu.memory_space<vmem>>, vector<1x128xf32>
    %36 = vector.broadcast %35 : vector<1x128xf32> to vector<8x128xf32>
    %37 = arith.addf %34, %36 : vector<8x128xf32>
    %cst_30 = arith.constant dense<0.000000e+00> : vector<8x128xf32>
    %38 = tpu.matmul %37, %0, %cst_30 {dimension_numbers = #tpu.dot_dimension_numbers<[1], [0], [0], [1], [0, 0, 1, 1], [], []>} : vector<8x128xf32>, vector<128x128xf32>, vector<8x128xf32> -> vector<8x128xf32>
    %cst_31 = arith.constant dense<0.000000e+00> : vector<8x128xf32>
    %39 = tpu.matmul %38, %1, %cst_31 {dimension_numbers = #tpu.dot_dimension_numbers<[1], [0], [0], [1], [0, 0, 1, 1], [], []>} : vector<8x128xf32>, vector<128x128xf32>, vector<8x128xf32> -> vector<8x128xf32>
    %40 = arith.subf %37, %39 : vector<8x128xf32>
    %41 = arith.mulf %40, %40 : vector<8x128xf32>
    %cst_32 = arith.constant dense<0.000000e+00> : vector<8x128xf32>
    %42 = tpu.matmul %41, %0, %cst_32 {dimension_numbers = #tpu.dot_dimension_numbers<[1], [0], [0], [1], [0, 0, 1, 1], [], []>} : vector<8x128xf32>, vector<128x128xf32>, vector<8x128xf32> -> vector<8x128xf32>
    %cst_33 = arith.constant dense<0.000000e+00> : vector<8x128xf32>
    %43 = tpu.matmul %42, %1, %cst_33 {dimension_numbers = #tpu.dot_dimension_numbers<[1], [0], [0], [1], [0, 0, 1, 1], [], []>} : vector<8x128xf32>, vector<128x128xf32>, vector<8x128xf32> -> vector<8x128xf32>
    %cst_34 = arith.constant 9.99999974E-6 : f32
    %44 = vector.broadcast %cst_34 : f32 to vector<8x128xf32>
    %45 = arith.addf %43, %44 : vector<8x128xf32>
    %46 = math.rsqrt %45 : vector<8x128xf32>
    %47 = arith.mulf %40, %46 : vector<8x128xf32>
    %c0_35 = arith.constant 0 : index
    %c0_36 = arith.constant 0 : index
    %48 = vector.load %arg12[%c0_35, %c0_36] : memref<1x128xf32, #tpu.memory_space<vmem>>, vector<1x128xf32>
    %49 = vector.broadcast %48 : vector<1x128xf32> to vector<8x128xf32>
    %50 = arith.mulf %47, %49 : vector<8x128xf32>
    %c0_37 = arith.constant 0 : index
    %c0_38 = arith.constant 0 : index
    %51 = vector.load %arg13[%c0_37, %c0_38] : memref<1x128xf32, #tpu.memory_space<vmem>>, vector<1x128xf32>
    %52 = vector.broadcast %51 : vector<1x128xf32> to vector<8x128xf32>
    %53 = arith.addf %50, %52 : vector<8x128xf32>
    %c0_39 = arith.constant 0 : index
    %c0_40 = arith.constant 0 : index
    %54 = vector.load %arg14[%c0_39, %c0_40] : memref<8x128xf32, #tpu.memory_space<vmem>>, vector<8x128xf32>
    tpu.vector_store %arg14[%c0_39, %c0_40], %53 {strides = array<i32>} : memref<8x128xf32, #tpu.memory_space<vmem>>, vector<8x128xf32>,
    return
  }
  func.func @transform_0(%arg0: i32) -> (i32, i32) {
    %c0_i32 = arith.constant 0 : i32
    %c0_i32_0 = arith.constant 0 : i32
    return %arg0, %c0_i32 : i32, i32
  }
  func.func @transform_1(%arg0: i32) -> (i32, i32) {
    %c0_i32 = arith.constant 0 : i32
    %c0_i32_0 = arith.constant 0 : i32
    %c0_i32_1 = arith.constant 0 : i32
    return %c0_i32, %c0_i32_0 : i32, i32
  }
  func.func @transform_2(%arg0: i32) -> (i32, i32) {
    %c0_i32 = arith.constant 0 : i32
    %c0_i32_0 = arith.constant 0 : i32
    %c0_i32_1 = arith.constant 0 : i32
    return %c0_i32, %c0_i32_0 : i32, i32
  }
  func.func @transform_3(%arg0: i32) -> (i32, i32) {
    %c0_i32 = arith.constant 0 : i32
    %c0_i32_0 = arith.constant 0 : i32
    %c0_i32_1 = arith.constant 0 : i32
    return %c0_i32, %c0_i32_0 : i32, i32
  }
  func.func @transform_4(%arg0: i32) -> (i32, i32) {
    %c0_i32 = arith.constant 0 : i32
    %c0_i32_0 = arith.constant 0 : i32
    %c0_i32_1 = arith.constant 0 : i32
    return %c0_i32, %c0_i32_0 : i32, i32
  }
  func.func @transform_5(%arg0: i32) -> (i32, i32) {
    %c0_i32 = arith.constant 0 : i32
    %c0_i32_0 = arith.constant 0 : i32
    %c0_i32_1 = arith.constant 0 : i32
    return %c0_i32, %c0_i32_0 : i32, i32
  }
  func.func @transform_6(%arg0: i32) -> (i32, i32) {
    %c0_i32 = arith.constant 0 : i32
    %c0_i32_0 = arith.constant 0 : i32
    %c0_i32_1 = arith.constant 0 : i32
    return %c0_i32, %c0_i32_0 : i32, i32
  }
  func.func @transform_7(%arg0: i32) -> (i32, i32) {
    %c0_i32 = arith.constant 0 : i32
    %c0_i32_0 = arith.constant 0 : i32
    %c0_i32_1 = arith.constant 0 : i32
    return %c0_i32, %c0_i32_0 : i32, i32
  }
  func.func @transform_8(%arg0: i32) -> (i32, i32) {
    %c0_i32 = arith.constant 0 : i32
    %c0_i32_0 = arith.constant 0 : i32
    %c0_i32_1 = arith.constant 0 : i32
    return %c0_i32, %c0_i32_0 : i32, i32
  }
  func.func @transform_9(%arg0: i32) -> (i32, i32) {
    %c0_i32 = arith.constant 0 : i32
    %c0_i32_0 = arith.constant 0 : i32
    %c0_i32_1 = arith.constant 0 : i32
    return %c0_i32, %c0_i32_0 : i32, i32
  }
  func.func @transform_10(%arg0: i32) -> (i32, i32) {
    %c0_i32 = arith.constant 0 : i32
    %c0_i32_0 = arith.constant 0 : i32
    %c0_i32_1 = arith.constant 0 : i32
    return %c0_i32, %c0_i32_0 : i32, i32
  }
  func.func @transform_11(%arg0: i32) -> (i32, i32) {
    %c0_i32 = arith.constant 0 : i32
    %c0_i32_0 = arith.constant 0 : i32
    %c0_i32_1 = arith.constant 0 : i32
    return %c0_i32, %c0_i32_0 : i32, i32
  }
  func.func @transform_12(%arg0: i32) -> (i32, i32) {
    %c0_i32 = arith.constant 0 : i32
    %c0_i32_0 = arith.constant 0 : i32
    %c0_i32_1 = arith.constant 0 : i32
    return %c0_i32, %c0_i32_0 : i32, i32
  }
  func.func @transform_13(%arg0: i32) -> (i32, i32) {
    %c0_i32 = arith.constant 0 : i32
    %c0_i32_0 = arith.constant 0 : i32
    return %arg0, %c0_i32 : i32, i32
  }
}

</mosaic_0001>

<llo_original>
// kernel: tpu_custom_call.1
$region0: #{tpu_custom_call.1}
  #allocation0 [shape = 'u32[]', space=smem, size = 0x4, offset = 0x4, fixed_abs, tag = 'smem constant byte address 0x4 - core index']
  #allocation1 [shape = 'u32[144,128]{1,0:T(1,128)}', space=vmem, size = 0x12000, scoped, tag = 'internal scratch']
  %s0 = inlined_call_operand.hbm [shape: f32[16,128], index: 0, kind: input, shape index: {}]
  %s1 = inlined_call_operand.hbm [shape: f32[128,128], index: 1, kind: input, shape index: {}]
  %s2 = inlined_call_operand.hbm [shape: f32[128,128], index: 2, kind: input, shape index: {}]
  %s3 = inlined_call_operand.vmem [shape: f32[1,128], index: 3, kind: input, shape index: {}]
  %s4 = inlined_call_operand.vmem [shape: f32[1,128], index: 4, kind: input, shape index: {}]
  %s5 = inlined_call_operand.hbm [shape: f32[128,128], index: 5, kind: input, shape index: {}]
  %s6 = inlined_call_operand.vmem [shape: f32[1,128], index: 6, kind: input, shape index: {}]
  %s7 = inlined_call_operand.hbm [shape: f32[128,128], index: 7, kind: input, shape index: {}]
  %s8 = inlined_call_operand.vmem [shape: f32[1,128], index: 8, kind: input, shape index: {}]
  %s9 = inlined_call_operand.hbm [shape: f32[128,128], index: 9, kind: input, shape index: {}]
  %s10 = inlined_call_operand.vmem [shape: f32[1,128], index: 10, kind: input, shape index: {}]
  %s11 = inlined_call_operand.vmem [shape: f32[1,128], index: 11, kind: input, shape index: {}]
  %s12 = inlined_call_operand.vmem [shape: f32[1,128], index: 12, kind: input, shape index: {}]
  %s13 = inlined_call_operand.hbm [shape: f32[16,128], index: 13, kind: output, shape index: {}]
  %s14 = sld [smem:[#allocation0]]
  $region109: #{tpu_custom_call.1} parent=0
    _
  %s16 = ssub.s32 1, %s14
  %s17 = scalar_select 0, %s16, %s14
  $region1: #{tpu_custom_call.1} parent=0
    #allocation2 [shape = 'u8[8192]{0}', space=vmem, size = 0x2000, scoped, tag = 'input window, operand 0']
    #allocation3 [shape = 's32[2]{0}', space=sflag, size = 0x8, scoped, tag = 'scoped memory for tpu_custom_call.1']
    #allocation4 [shape = 's32[2]{0}', space=sflag, size = 0x8, scoped, tag = 'scoped memory for tpu_custom_call.1']
    #allocation5 [shape = 'u8[65536]{0}', space=vmem, size = 0x10000, scoped, tag = 'input window, operand 1, single buffered']
    #allocation6 [shape = 's32[1]{0}', space=sflag, size = 0x4, scoped, tag = 'scoped memory for tpu_custom_call.1']
    #allocation7 [shape = 'u8[65536]{0}', space=vmem, size = 0x10000, scoped, tag = 'input window, operand 2, single buffered']
    #allocation8 [shape = 'u8[65536]{0}', space=vmem, size = 0x10000, scoped, tag = 'input window, operand 5, single buffered']
    #allocation9 [shape = 's32[1]{0}', space=sflag, size = 0x4, scoped, tag = 'scoped memory for tpu_custom_call.1']
    #allocation10 [shape = 'u8[65536]{0}', space=vmem, size = 0x10000, scoped, tag = 'input window, operand 7, single buffered']
    #allocation11 [shape = 'u8[65536]{0}', space=vmem, size = 0x10000, scoped, tag = 'input window, operand 9, single buffered']
    #allocation12 [shape = 's32[1]{0}', space=sflag, size = 0x4, scoped, tag = 'scoped memory for tpu_custom_call.1']
    #allocation13 [shape = 'u8[8192]{0}', space=vmem, size = 0x2000, scoped, tag = 'output window, operand 0']
    %18 = vsyncpa [#allocation3], 0
    %s19 = scalar_lea.sflag [#allocation3], 1
    %20 = vsyncpa %s19, 0
    %21 = vsyncpa [#allocation6], 0
    %22 = vsyncpa [#allocation9], 0
    %23 = vsyncpa [#allocation12], 0
    %24 = vsyncpa [#allocation4], 0
    %s25 = scalar_lea.sflag [#allocation4], 1
    %26 = vsyncpa %s25, 0
    loop: start=0, step=1, limit=4
    $region2: #{tpu_custom_call.1} parent=1 // loop_pre_header
      _
    $region3: #{tpu_custom_call.1} parent=1 // loop_header
      %s28 = sphi 0, %s32
      %p29 = scmp.ge.s32.totalorder %s28, 4
      %s38 = sphi 0, %s40
      %s41 = sphi 0, %s38
      %s42 = sphi 0, %s41
      %s58 = sphi 0, %s42
      %s62 = sphi 0, %s62
      %s64 = sphi 0, %s62
      %s65 = sphi 0, %s64
      %s79 = sphi 0, %s65
      %s83 = sphi 0, %s83
      %s85 = sphi 0, %s83
      %s86 = sphi 0, %s85
      %s100 = sphi 0, %s86
      %s104 = sphi 0, %s104
      %s106 = sphi 0, %s104
      %s107 = sphi 0, %s106
      %s121 = sphi 0, %s107
      %s125 = sphi 0, %s125
      %s127 = sphi 0, %s125
      %s128 = sphi 0, %s127
      %s142 = sphi 0, %s128
      %s146 = sphi 0, %s146
      %s148 = sphi 0, %s146
      %s149 = sphi 0, %s148
      %s163 = sphi 0, %s149
      %s167 = sphi 0, %s167
      %s169 = sphi 0, %s167
      %s170 = sphi 0, %s169
      %s184 = sphi 0, %s170
      %s188 = sphi 0, %s188
      %s190 = sphi 0, %s188
      %s191 = sphi 0, %s190
      %s205 = sphi 0, %s191
      %s209 = sphi 0, %s209
      %s211 = sphi 0, %s209
      %s212 = sphi 0, %s211
      %s226 = sphi 0, %s212
      %s230 = sphi 0, %s230
      %s232 = sphi 0, %s230
      %s233 = sphi 0, %s232
      %s247 = sphi 0, %s233
      %s251 = sphi 0, %s251
      %s253 = sphi 0, %s251
      %s254 = sphi 0, %s253
      %s268 = sphi 0, %s254
      %s272 = sphi 0, %s272
      %s274 = sphi 0, %s272
      %s275 = sphi 0, %s274
      %s289 = sphi 0, %s275
      %s293 = sphi 0, %s293
      %s295 = sphi 0, %s293
      %s296 = sphi 0, %s295
      %s310 = sphi 0, %s296
      %s316 = sphi 0, %s318
      %s319 = sphi 0, %s316
      %s320 = sphi 0, %s319
      %s336 = sphi 0, %s320
    $region4: #{tpu_custom_call.1} parent=1 // loop_header_branch
      %31 = sbr.rel (%p29) target = $region8
    $region5: #{tpu_custom_call.1} parent=1 // loop_body
      %s33 = ssub.s32 %s28, 1
      %s34 = ssub.s32 %s28, 2
      %s35 = sadd.s32 %s28, 1
      %s36 = ssub.s32 %s28, %s35
      %p37 = scmp.eq.s32.totalorder %s36, 0
      %s39 = sadd.s32 %s38, 1
      %s40 = scalar_select %p37, %s38, %s39
      %p43 = pneg %p37
      %p44 = scmp.eq.s32.totalorder %s28, 1
      %p45 = por %p43, %p44
      %p46 = scmp.ne.s32.totalorder %s38, %s41
      %p47 = scmp.eq.s32.totalorder %s28, 0
      %p48 = por %p46, %p47
      %p49 = scmp.ne.s32.totalorder %s38, %s41
      %p50 = scmp.eq.s32.totalorder %s33, 1
      %p51 = por %p49, %p50
      %p52 = scmp.ne.s32.totalorder %s41, %s42
      %p53 = scmp.eq.s32.totalorder %s33, 0
      %p54 = por %p52, %p53
      %p55 = scmp.ne.s32.totalorder %s41, %s42
      %p56 = scmp.eq.s32.totalorder %s34, 1
      %p57 = por %p55, %p56
      %p59 = scmp.ne.s32.totalorder %s42, %s58
      %p60 = scmp.eq.s32.totalorder %s34, 0
      %p61 = por %p59, %p60
      %s63 = sadd.s32 %s62, 1
      %p66 = scmp.eq.s32.totalorder %s28, 1
      %p67 = scmp.ne.s32.totalorder %s62, %s64
      %p68 = scmp.eq.s32.totalorder %s28, 0
      %p69 = por %p67, %p68
      %p70 = scmp.ne.s32.totalorder %s62, %s64
      %p71 = scmp.eq.s32.totalorder %s33, 1
      %p72 = por %p70, %p71
      %p73 = scmp.ne.s32.totalorder %s64, %s65
      %p74 = scmp.eq.s32.totalorder %s33, 0
      %p75 = por %p73, %p74
      %p76 = scmp.ne.s32.totalorder %s64, %s65
      %p77 = scmp.eq.s32.totalorder %s34, 1
      %p78 = por %p76, %p77
      %p80 = scmp.ne.s32.totalorder %s65, %s79
      %p81 = scmp.eq.s32.totalorder %s34, 0
      %p82 = por %p80, %p81
      %s84 = sadd.s32 %s83, 1
      %p87 = scmp.eq.s32.totalorder %s28, 1
      %p88 = scmp.ne.s32.totalorder %s83, %s85
      %p89 = scmp.eq.s32.totalorder %s28, 0
      %p90 = por %p88, %p89
      %p91 = scmp.ne.s32.totalorder %s83, %s85
      %p92 = scmp.eq.s32.totalorder %s33, 1
      %p93 = por %p91, %p92
      %p94 = scmp.ne.s32.totalorder %s85, %s86
      %p95 = scmp.eq.s32.totalorder %s33, 0
      %p96 = por %p94, %p95
      %p97 = scmp.ne.s32.totalorder %s85, %s86
      %p98 = scmp.eq.s32.totalorder %s34, 1
      %p99 = por %p97, %p98
      %p101 = scmp.ne.s32.totalorder %s86, %s100
      %p102 = scmp.eq.s32.totalorder %s34, 0
      %p103 = por %p101, %p102
      %s105 = sadd.s32 %s104, 1
      %p108 = scmp.eq.s32.totalorder %s28, 1
      %p109 = scmp.ne.s32.totalorder %s104, %s106
      %p110 = scmp.eq.s32.totalorder %s28, 0
      %p111 = por %p109, %p110
      %p112 = scmp.ne.s32.totalorder %s104, %s106
      %p113 = scmp.eq.s32.totalorder %s33, 1
      %p114 = por %p112, %p113
      %p115 = scmp.ne.s32.totalorder %s106, %s107
      %p116 = scmp.eq.s32.totalorder %s33, 0
      %p117 = por %p115, %p116
      %p118 = scmp.ne.s32.totalorder %s106, %s107
      %p119 = scmp.eq.s32.totalorder %s34, 1
      %p120 = por %p118, %p119
      %p122 = scmp.ne.s32.totalorder %s107, %s121
      %p123 = scmp.eq.s32.totalorder %s34, 0
      %p124 = por %p122, %p123
      %s126 = sadd.s32 %s125, 1
      %p129 = scmp.eq.s32.totalorder %s28, 1
      %p130 = scmp.ne.s32.totalorder %s125, %s127
      %p131 = scmp.eq.s32.totalorder %s28, 0
      %p132 = por %p130, %p131
      %p133 = scmp.ne.s32.totalorder %s125, %s127
      %p134 = scmp.eq.s32.totalorder %s33, 1
      %p135 = por %p133, %p134
      %p136 = scmp.ne.s32.totalorder %s127, %s128
      %p137 = scmp.eq.s32.totalorder %s33, 0
      %p138 = por %p136, %p137
      %p139 = scmp.ne.s32.totalorder %s127, %s128
      %p140 = scmp.eq.s32.totalorder %s34, 1
      %p141 = por %p139, %p140
      %p143 = scmp.ne.s32.totalorder %s128, %s142
      %p144 = scmp.eq.s32.totalorder %s34, 0
      %p145 = por %p143, %p144
      %s147 = sadd.s32 %s146, 1
      %p150 = scmp.eq.s32.totalorder %s28, 1
      %p151 = scmp.ne.s32.totalorder %s146, %s148
      %p152 = scmp.eq.s32.totalorder %s28, 0
      %p153 = por %p151, %p152
      %p154 = scmp.ne.s32.totalorder %s146, %s148
      %p155 = scmp.eq.s32.totalorder %s33, 1
      %p156 = por %p154, %p155
      %p157 = scmp.ne.s32.totalorder %s148, %s149
      %p158 = scmp.eq.s32.totalorder %s33, 0
      %p159 = por %p157, %p158
      %p160 = scmp.ne.s32.totalorder %s148, %s149
      %p161 = scmp.eq.s32.totalorder %s34, 1
      %p162 = por %p160, %p161
      %p164 = scmp.ne.s32.totalorder %s149, %s163
      %p165 = scmp.eq.s32.totalorder %s34, 0
      %p166 = por %p164, %p165
      %s168 = sadd.s32 %s167, 1
      %p171 = scmp.eq.s32.totalorder %s28, 1
      %p172 = scmp.ne.s32.totalorder %s167, %s169
      %p173 = scmp.eq.s32.totalorder %s28, 0
      %p174 = por %p172, %p173
      %p175 = scmp.ne.s32.totalorder %s167, %s169
      %p176 = scmp.eq.s32.totalorder %s33, 1
      %p177 = por %p175, %p176
      %p178 = scmp.ne.s32.totalorder %s169, %s170
      %p179 = scmp.eq.s32.totalorder %s33, 0
      %p180 = por %p178, %p179
      %p181 = scmp.ne.s32.totalorder %s169, %s170
      %p182 = scmp.eq.s32.totalorder %s34, 1
      %p183 = por %p181, %p182
      %p185 = scmp.ne.s32.totalorder %s170, %s184
      %p186 = scmp.eq.s32.totalorder %s34, 0
      %p187 = por %p185, %p186
      %s189 = sadd.s32 %s188, 1
      %p192 = scmp.eq.s32.totalorder %s28, 1
      %p193 = scmp.ne.s32.totalorder %s188, %s190
      %p194 = scmp.eq.s32.totalorder %s28, 0
      %p195 = por %p193, %p194
      %p196 = scmp.ne.s32.totalorder %s188, %s190
      %p197 = scmp.eq.s32.totalorder %s33, 1
      %p198 = por %p196, %p197
      %p199 = scmp.ne.s32.totalorder %s190, %s191
      %p200 = scmp.eq.s32.totalorder %s33, 0
      %p201 = por %p199, %p200
      %p202 = scmp.ne.s32.totalorder %s190, %s191
      %p203 = scmp.eq.s32.totalorder %s34, 1
      %p204 = por %p202, %p203
      %p206 = scmp.ne.s32.totalorder %s191, %s205
      %p207 = scmp.eq.s32.totalorder %s34, 0
      %p208 = por %p206, %p207
      %s210 = sadd.s32 %s209, 1
      %p213 = scmp.eq.s32.totalorder %s28, 1
      %p214 = scmp.ne.s32.totalorder %s209, %s211
      %p215 = scmp.eq.s32.totalorder %s28, 0
      %p216 = por %p214, %p215
      %p217 = scmp.ne.s32.totalorder %s209, %s211
      %p218 = scmp.eq.s32.totalorder %s33, 1
      %p219 = por %p217, %p218
      %p220 = scmp.ne.s32.totalorder %s211, %s212
      %p221 = scmp.eq.s32.totalorder %s33, 0
      %p222 = por %p220, %p221
      %p223 = scmp.ne.s32.totalorder %s211, %s212
      %p224 = scmp.eq.s32.totalorder %s34, 1
      %p225 = por %p223, %p224
      %p227 = scmp.ne.s32.totalorder %s212, %s226
      %p228 = scmp.eq.s32.totalorder %s34, 0
      %p229 = por %p227, %p228
      %s231 = sadd.s32 %s230, 1
      %p234 = scmp.eq.s32.totalorder %s28, 1
      %p235 = scmp.ne.s32.totalorder %s230, %s232
      %p236 = scmp.eq.s32.totalorder %s28, 0
      %p237 = por %p235, %p236
      %p238 = scmp.ne.s32.totalorder %s230, %s232
      %p239 = scmp.eq.s32.totalorder %s33, 1
      %p240 = por %p238, %p239
      %p241 = scmp.ne.s32.totalorder %s232, %s233
      %p242 = scmp.eq.s32.totalorder %s33, 0
      %p243 = por %p241, %p242
      %p244 = scmp.ne.s32.totalorder %s232, %s233
      %p245 = scmp.eq.s32.totalorder %s34, 1
      %p246 = por %p244, %p245
      %p248 = scmp.ne.s32.totalorder %s233, %s247
      %p249 = scmp.eq.s32.totalorder %s34, 0
      %p250 = por %p248, %p249
      %s252 = sadd.s32 %s251, 1
      %p255 = scmp.eq.s32.totalorder %s28, 1
      %p256 = scmp.ne.s32.totalorder %s251, %s253
      %p257 = scmp.eq.s32.totalorder %s28, 0
      %p258 = por %p256, %p257
      %p259 = scmp.ne.s32.totalorder %s251, %s253
      %p260 = scmp.eq.s32.totalorder %s33, 1
      %p261 = por %p259, %p260
      %p262 = scmp.ne.s32.totalorder %s253, %s254
      %p263 = scmp.eq.s32.totalorder %s33, 0
      %p264 = por %p262, %p263
      %p265 = scmp.ne.s32.totalorder %s253, %s254
      %p266 = scmp.eq.s32.totalorder %s34, 1
      %p267 = por %p265, %p266
      %p269 = scmp.ne.s32.totalorder %s254, %s268
      %p270 = scmp.eq.s32.totalorder %s34, 0
      %p271 = por %p269, %p270
      %s273 = sadd.s32 %s272, 1
      %p276 = scmp.eq.s32.totalorder %s28, 1
      %p277 = scmp.ne.s32.totalorder %s272, %s274
      %p278 = scmp.eq.s32.totalorder %s28, 0
      %p279 = por %p277, %p278
      %p280 = scmp.ne.s32.totalorder %s272, %s274
      %p281 = scmp.eq.s32.totalorder %s33, 1
      %p282 = por %p280, %p281
      %p283 = scmp.ne.s32.totalorder %s274, %s275
      %p284 = scmp.eq.s32.totalorder %s33, 0
      %p285 = por %p283, %p284
      %p286 = scmp.ne.s32.totalorder %s274, %s275
      %p287 = scmp.eq.s32.totalorder %s34, 1
      %p288 = por %p286, %p287
      %p290 = scmp.ne.s32.totalorder %s275, %s289
      %p291 = scmp.eq.s32.totalorder %s34, 0
      %p292 = por %p290, %p291
      %s294 = sadd.s32 %s293, 1
      %p297 = scmp.eq.s32.totalorder %s28, 1
      %p298 = scmp.ne.s32.totalorder %s293, %s295
      %p299 = scmp.eq.s32.totalorder %s28, 0
      %p300 = por %p298, %p299
      %p301 = scmp.ne.s32.totalorder %s293, %s295
      %p302 = scmp.eq.s32.totalorder %s33, 1
      %p303 = por %p301, %p302
      %p304 = scmp.ne.s32.totalorder %s295, %s296
      %p305 = scmp.eq.s32.totalorder %s33, 0
      %p306 = por %p304, %p305
      %p307 = scmp.ne.s32.totalorder %s295, %s296
      %p308 = scmp.eq.s32.totalorder %s34, 1
      %p309 = por %p307, %p308
      %p311 = scmp.ne.s32.totalorder %s296, %s310
      %p312 = scmp.eq.s32.totalorder %s34, 0
      %p313 = por %p311, %p312
      %s314 = ssub.s32 %s28, %s35
      %p315 = scmp.eq.s32.totalorder %s314, 0
      %s317 = sadd.s32 %s316, 1
      %s318 = scalar_select %p315, %s316, %s317
      %p321 = pneg %p315
      %p322 = scmp.eq.s32.totalorder %s28, 1
      %p323 = por %p321, %p322
      %p324 = scmp.ne.s32.totalorder %s316, %s319
      %p325 = scmp.eq.s32.totalorder %s28, 0
      %p326 = por %p324, %p325
      %p327 = scmp.ne.s32.totalorder %s316, %s319
      %p328 = scmp.eq.s32.totalorder %s33, 1
      %p329 = por %p327, %p328
      %p330 = scmp.ne.s32.totalorder %s319, %s320
      %p331 = scmp.eq.s32.totalorder %s33, 0
      %p332 = por %p330, %p331
      %p333 = scmp.ne.s32.totalorder %s319, %s320
      %p334 = scmp.eq.s32.totalorder %s34, 1
      %p335 = por %p333, %p334
      %p337 = scmp.ne.s32.totalorder %s320, %s336
      %p338 = scmp.eq.s32.totalorder %s34, 0
      %p339 = por %p337, %p338
      %p340 = scmp.le.s32.totalorder 1, %s28
      %p341 = scmp.lt.s32.totalorder %s28, 3
      %p342 = pnand %p340, %p341
      %p343 = pneg %p342
      // Predicated region
      $region9: #{tpu_custom_call.1} parent=5 // pred_check
        _
      $region10: #{tpu_custom_call.1} parent=5 // pred_check_branch
        %345 = sbr.rel (%p342) target = $region12
      $region11: #{tpu_custom_call.1} parent=5 // pred_region
        %s346 = ssub.s32 %s28, 1
        // Predicated region
        $region13: #{tpu_custom_call.1} parent=11 // pred_check
          %p347 = pneg %p75
        $region14: #{tpu_custom_call.1} parent=11 // pred_check_branch
          %349 = sbr.rel (%p347) target = $region16
        $region15: #{tpu_custom_call.1} parent=11 // pred_region
          %s351 = ssub.s32 2048, 2048
          %352 = vsyncadd [#allocation6], %s351
          %s353 = sshll.u32 [#allocation5], 4
          %s354 = int_to_ptr.vmem [resolvable:$true] %s353
          %359 = dma.hbm_to_vmem [thread:$0]  %s1, 2048, %s354, [#allocation6], 128, 128, 8
        $region16: #{tpu_custom_call.1} parent=11 // pred_fallthru
          _
        // Predicated region
        $region17: #{tpu_custom_call.1} parent=11 // pred_check
          %p360 = pneg %p96
        $region18: #{tpu_custom_call.1} parent=11 // pred_check_branch
          %362 = sbr.rel (%p360) target = $region20
        $region19: #{tpu_custom_call.1} parent=11 // pred_region
          %s364 = ssub.s32 2048, 2048
          %365 = vsyncadd [#allocation6], %s364
          %s366 = sshll.u32 [#allocation7], 4
          %s367 = int_to_ptr.vmem [resolvable:$true] %s366
          %372 = dma.hbm_to_vmem [thread:$0]  %s2, 2048, %s367, [#allocation6], 128, 128, 8
        $region20: #{tpu_custom_call.1} parent=11 // pred_fallthru
          _
        // Predicated region
        $region21: #{tpu_custom_call.1} parent=11 // pred_check
          %p373 = pneg %p117
        $region22: #{tpu_custom_call.1} parent=11 // pred_check_branch
          %375 = sbr.rel (%p373) target = $region24
        $region23: #{tpu_custom_call.1} parent=11 // pred_region
          _
        $region24: #{tpu_custom_call.1} parent=11 // pred_fallthru
          _
        // Predicated region
        $region25: #{tpu_custom_call.1} parent=11 // pred_check
          %p376 = pneg %p138
        $region26: #{tpu_custom_call.1} parent=11 // pred_check_branch
          %378 = sbr.rel (%p376) target = $region28
        $region27: #{tpu_custom_call.1} parent=11 // pred_region
          _
        $region28: #{tpu_custom_call.1} parent=11 // pred_fallthru
          _
        // Predicated region
        $region29: #{tpu_custom_call.1} parent=11 // pred_check
          %p379 = pneg %p159
        $region30: #{tpu_custom_call.1} parent=11 // pred_check_branch
          %381 = sbr.rel (%p379) target = $region32
        $region31: #{tpu_custom_call.1} parent=11 // pred_region
          %s383 = ssub.s32 2048, 2048
          %384 = vsyncadd [#allocation9], %s383
          %s385 = sshll.u32 [#allocation8], 4
          %s386 = int_to_ptr.vmem [resolvable:$true] %s385
          %391 = dma.hbm_to_vmem [thread:$0]  %s5, 2048, %s386, [#allocation9], 128, 128, 8
        $region32: #{tpu_custom_call.1} parent=11 // pred_fallthru
          _
        // Predicated region
        $region33: #{tpu_custom_call.1} parent=11 // pred_check
          %p392 = pneg %p180
        $region34: #{tpu_custom_call.1} parent=11 // pred_check_branch
          %394 = sbr.rel (%p392) target = $region36
        $region35: #{tpu_custom_call.1} parent=11 // pred_region
          _
        $region36: #{tpu_custom_call.1} parent=11 // pred_fallthru
          _
        // Predicated region
        $region37: #{tpu_custom_call.1} parent=11 // pred_check
          %p395 = pneg %p201
        $region38: #{tpu_custom_call.1} parent=11 // pred_check_branch
          %397 = sbr.rel (%p395) target = $region40
        $region39: #{tpu_custom_call.1} parent=11 // pred_region
          %s399 = ssub.s32 2048, 2048
          %400 = vsyncadd [#allocation9], %s399
          %s401 = sshll.u32 [#allocation10], 4
          %s402 = int_to_ptr.vmem [resolvable:$true] %s401
          %407 = dma.hbm_to_vmem [thread:$0]  %s7, 2048, %s402, [#allocation9], 128, 128, 8
        $region40: #{tpu_custom_call.1} parent=11 // pred_fallthru
          _
        // Predicated region
        $region41: #{tpu_custom_call.1} parent=11 // pred_check
          %p408 = pneg %p222
        $region42: #{tpu_custom_call.1} parent=11 // pred_check_branch
          %410 = sbr.rel (%p408) target = $region44
        $region43: #{tpu_custom_call.1} parent=11 // pred_region
          _
        $region44: #{tpu_custom_call.1} parent=11 // pred_fallthru
          _
        // Predicated region
        $region45: #{tpu_custom_call.1} parent=11 // pred_check
          %p411 = pneg %p243
        $region46: #{tpu_custom_call.1} parent=11 // pred_check_branch
          %413 = sbr.rel (%p411) target = $region48
        $region47: #{tpu_custom_call.1} parent=11 // pred_region
          %s415 = ssub.s32 2048, 2048
          %416 = vsyncadd [#allocation12], %s415
          %s417 = sshll.u32 [#allocation11], 4
          %s418 = int_to_ptr.vmem [resolvable:$true] %s417
          %423 = dma.hbm_to_vmem [thread:$0]  %s9, 2048, %s418, [#allocation12], 128, 128, 8
        $region48: #{tpu_custom_call.1} parent=11 // pred_fallthru
          _
        // Predicated region
        $region49: #{tpu_custom_call.1} parent=11 // pred_check
          %p424 = pneg %p264
        $region50: #{tpu_custom_call.1} parent=11 // pred_check_branch
          %426 = sbr.rel (%p424) target = $region52
        $region51: #{tpu_custom_call.1} parent=11 // pred_region
          _
        $region52: #{tpu_custom_call.1} parent=11 // pred_fallthru
          _
        // Predicated region
        $region53: #{tpu_custom_call.1} parent=11 // pred_check
          %p427 = pneg %p285
        $region54: #{tpu_custom_call.1} parent=11 // pred_check_branch
          %429 = sbr.rel (%p427) target = $region56
        $region55: #{tpu_custom_call.1} parent=11 // pred_region
          _
        $region56: #{tpu_custom_call.1} parent=11 // pred_fallthru
          _
        // Predicated region
        $region57: #{tpu_custom_call.1} parent=11 // pred_check
          %p430 = pneg %p306
        $region58: #{tpu_custom_call.1} parent=11 // pred_check_branch
          %432 = sbr.rel (%p430) target = $region60
        $region59: #{tpu_custom_call.1} parent=11 // pred_region
          _
        $region60: #{tpu_custom_call.1} parent=11 // pred_fallthru
          _
      $region12: #{tpu_custom_call.1} parent=5 // pred_fallthru
        _
      %p433 = scmp.lt.s32.totalorder %s28, 2
      // Predicated region
      $region61: #{tpu_custom_call.1} parent=5 // pred_check
        %p434 = pneg %p433
      $region62: #{tpu_custom_call.1} parent=5 // pred_check_branch
        %436 = sbr.rel (%p434) target = $region64
      $region63: #{tpu_custom_call.1} parent=5 // pred_region
        // Predicated region
        $region65: #{tpu_custom_call.1} parent=63 // pred_check
          %p437 = pneg %p48
        $region66: #{tpu_custom_call.1} parent=63 // pred_check_branch
          %439 = sbr.rel (%p437) target = $region68
        $region67: #{tpu_custom_call.1} parent=63 // pred_region
          %s440 = sand.u32 %s38, 1
          %s441 = scalar_lea.sflag [#allocation3], %s440
          %s442 = sand.u32 %s38, 1
          %s443 = smul.addr %s442, 8
          %s444 = scalar_lea.vmem [#allocation2], %s443
          %s446 = ssub.s32 128, 128
          %447 = vsyncadd %s441, %s446
          %s448 = smul.addr %s28, 128
          %s449 = scalar_lea.hbm %s0, %s448
          %s451 = sshll.u32 %s444, 4
          %s452 = int_to_ptr.vmem [resolvable:$true] %s451
          %454 = dma.hbm_to_vmem [thread:$0]  %s449, 128, %s452, %s441
        $region68: #{tpu_custom_call.1} parent=63 // pred_fallthru
          _
      $region64: #{tpu_custom_call.1} parent=5 // pred_fallthru
        _
      %p455 = scmp.le.s32.totalorder 1, %s28
      %p456 = scmp.lt.s32.totalorder %s28, 3
      %p457 = pnand %p455, %p456
      %p458 = pneg %p457
      // Predicated region
      $region69: #{tpu_custom_call.1} parent=5 // pred_check
        _
      $region70: #{tpu_custom_call.1} parent=5 // pred_check_branch
        %460 = sbr.rel (%p457) target = $region72
      $region71: #{tpu_custom_call.1} parent=5 // pred_region
        %s461 = ssub.s32 %s28, 1
        %s462 = sand.u32 %s41, 1
        %s463 = scalar_lea.sflag [#allocation3], %s462
        %s464 = sand.u32 %s41, 1
        %s465 = smul.addr %s464, 8
        %s466 = scalar_lea.vmem [#allocation2], %s465
        // Predicated region
        $region73: #{tpu_custom_call.1} parent=71 // pred_check
          %p467 = pneg %p54
        $region74: #{tpu_custom_call.1} parent=71 // pred_check_branch
          %469 = sbr.rel (%p467) target = $region76
        $region75: #{tpu_custom_call.1} parent=71 // pred_region
          %470 = dma.done %s463, 128
        $region76: #{tpu_custom_call.1} parent=71 // pred_fallthru
          _
        // Predicated region
        $region77: #{tpu_custom_call.1} parent=71 // pred_check
          %p471 = pneg %p75
        $region78: #{tpu_custom_call.1} parent=71 // pred_check_branch
          %473 = sbr.rel (%p471) target = $region80
        $region79: #{tpu_custom_call.1} parent=71 // pred_region
          %474 = dma.done [#allocation6], 2048
        $region80: #{tpu_custom_call.1} parent=71 // pred_fallthru
          _
        // Predicated region
        $region81: #{tpu_custom_call.1} parent=71 // pred_check
          %p475 = pneg %p96
        $region82: #{tpu_custom_call.1} parent=71 // pred_check_branch
          %477 = sbr.rel (%p475) target = $region84
        $region83: #{tpu_custom_call.1} parent=71 // pred_region
          %478 = dma.done [#allocation6], 2048
        $region84: #{tpu_custom_call.1} parent=71 // pred_fallthru
          _
        // Predicated region
        $region85: #{tpu_custom_call.1} parent=71 // pred_check
          %p479 = pneg %p159
        $region86: #{tpu_custom_call.1} parent=71 // pred_check_branch
          %481 = sbr.rel (%p479) target = $region88
        $region87: #{tpu_custom_call.1} parent=71 // pred_region
          %482 = dma.done [#allocation9], 2048
        $region88: #{tpu_custom_call.1} parent=71 // pred_fallthru
          _
        // Predicated region
        $region89: #{tpu_custom_call.1} parent=71 // pred_check
          %p483 = pneg %p201
        $region90: #{tpu_custom_call.1} parent=71 // pred_check_branch
          %485 = sbr.rel (%p483) target = $region92
        $region91: #{tpu_custom_call.1} parent=71 // pred_region
          %486 = dma.done [#allocation9], 2048
        $region92: #{tpu_custom_call.1} parent=71 // pred_fallthru
          _
        // Predicated region
        $region93: #{tpu_custom_call.1} parent=71 // pred_check
          %p487 = pneg %p243
        $region94: #{tpu_custom_call.1} parent=71 // pred_check_branch
          %489 = sbr.rel (%p487) target = $region96
        $region95: #{tpu_custom_call.1} parent=71 // pred_region
          %490 = dma.done [#allocation12], 2048
        $region96: #{tpu_custom_call.1} parent=71 // pred_fallthru
          _
        %s491 = sand.u32 %s41, 1
        %s492 = scalar_lea.sflag [#allocation3], %s491
        %s493 = sand.u32 %s41, 1
        %s494 = smul.addr %s493, 8
        %s495 = scalar_lea.vmem [#allocation2], %s494
        %p496 = pneg %p54
        %p497 = pneg %p51
        %p498 = pneg %p75
        %p499 = pneg %p72
        %p500 = pneg %p96
        %p501 = pneg %p93
        %p502 = pneg %p117
        %p503 = pneg %p114
        %p504 = pneg %p138
        %p505 = pneg %p135
        %p506 = pneg %p159
        %p507 = pneg %p156
        %p508 = pneg %p180
        %p509 = pneg %p177
        %p510 = pneg %p201
        %p511 = pneg %p198
        %p512 = pneg %p222
        %p513 = pneg %p219
        %p514 = pneg %p243
        %p515 = pneg %p240
        %p516 = pneg %p264
        %p517 = pneg %p261
        %p518 = pneg %p285
        %p519 = pneg %p282
        %p520 = pneg %p306
        %p521 = pneg %p303
        %p522 = pneg %p332
        %p523 = pneg %p329
        %s524 = sand.u32 %s319, 1
        %s525 = scalar_lea.sflag [#allocation4], %s524
        %s526 = sand.u32 %s319, 1
        %s527 = smul.addr %s526, 8
        %s528 = scalar_lea.vmem [#allocation13], %s527
        %v529 = vld [vmem:[#allocation5] sm:$0xff]
        %v530 = vld [vmem:[#allocation5 + $0x8] sm:$0xff]
        %v531 = vld [vmem:[#allocation5 + $0x10] sm:$0xff]
        %v532 = vld [vmem:[#allocation5 + $0x18] sm:$0xff]
        %v533 = vld [vmem:[#allocation5 + $0x20] sm:$0xff]
        %v534 = vld [vmem:[#allocation5 + $0x28] sm:$0xff]
        %v535 = vld [vmem:[#allocation5 + $0x30] sm:$0xff]
        %v536 = vld [vmem:[#allocation5 + $0x38] sm:$0xff]
        %v537 = vld [vmem:[#allocation5 + $0x40] sm:$0xff]
        %v538 = vld [vmem:[#allocation5 + $0x48] sm:$0xff]
        %v539 = vld [vmem:[#allocation5 + $0x50] sm:$0xff]
        %v540 = vld [vmem:[#allocation5 + $0x58] sm:$0xff]
        %v541 = vld [vmem:[#allocation5 + $0x60] sm:$0xff]
        %v542 = vld [vmem:[#allocation5 + $0x68] sm:$0xff]
        %v543 = vld [vmem:[#allocation5 + $0x70] sm:$0xff]
        %v544 = vld [vmem:[#allocation5 + $0x78] sm:$0xff]
        %v545 = vld [vmem:[#allocation7] sm:$0xff]
        %v546 = vld [vmem:[#allocation7 + $0x8] sm:$0xff]
        %v547 = vld [vmem:[#allocation7 + $0x10] sm:$0xff]
        %v548 = vld [vmem:[#allocation7 + $0x18] sm:$0xff]
        %v549 = vld [vmem:[#allocation7 + $0x20] sm:$0xff]
        %v550 = vld [vmem:[#allocation7 + $0x28] sm:$0xff]
        %v551 = vld [vmem:[#allocation7 + $0x30] sm:$0xff]
        %v552 = vld [vmem:[#allocation7 + $0x38] sm:$0xff]
        %v553 = vld [vmem:[#allocation7 + $0x40] sm:$0xff]
        %v554 = vld [vmem:[#allocation7 + $0x48] sm:$0xff]
        %v555 = vld [vmem:[#allocation7 + $0x50] sm:$0xff]
        %v556 = vld [vmem:[#allocation7 + $0x58] sm:$0xff]
        %v557 = vld [vmem:[#allocation7 + $0x60] sm:$0xff]
        %v558 = vld [vmem:[#allocation7 + $0x68] sm:$0xff]
        %v559 = vld [vmem:[#allocation7 + $0x70] sm:$0xff]
        %v560 = vld [vmem:[#allocation7 + $0x78] sm:$0xff]
        %v561 = vld [vmem:[%s466] sm:$0xff]
        %562 = vmatprep.subr.mxu0 0.0
        %563 = vmatpush1.msra.mxu0 %v529
        %564 = vmatprep.subr.mxu0 0.0
        %565 = vmatpush1.msra.mxu0 %v530
        %566 = vmatprep.subr.mxu0 0.0
        %567 = vmatpush1.msra.mxu0 %v531
        %568 = vmatprep.subr.mxu0 0.0
        %569 = vmatpush1.msra.mxu0 %v532
        %570 = vmatprep.subr.mxu0 0.0
        %571 = vmatpush1.msra.mxu0 %v533
        %572 = vmatprep.subr.mxu0 0.0
        %573 = vmatpush1.msra.mxu0 %v534
        %574 = vmatprep.subr.mxu0 0.0
        %575 = vmatpush1.msra.mxu0 %v535
        %576 = vmatprep.subr.mxu0 0.0
        %577 = vmatpush1.msra.mxu0 %v536
        %578 = vmatprep.subr.mxu0 0.0
        %579 = vmatpush1.msra.mxu0 %v537
        %580 = vmatprep.subr.mxu0 0.0
        %581 = vmatpush1.msra.mxu0 %v538
        %582 = vmatprep.subr.mxu0 0.0
        %583 = vmatpush1.msra.mxu0 %v539
        %584 = vmatprep.subr.mxu0 0.0
        %585 = vmatpush1.msra.mxu0 %v540
        %586 = vmatprep.subr.mxu0 0.0
        %587 = vmatpush1.msra.mxu0 %v541
        %588 = vmatprep.subr.mxu0 0.0
        %589 = vmatpush1.msra.mxu0 %v542
        %590 = vmatprep.subr.mxu0 0.0
        %591 = vmatpush1.msra.mxu0 %v543
        %592 = vmatprep.subr.mxu0 0.0
        %593 = vmatpush1.msra.mxu0 %v544
        %594 = vmatprep.subr.mxu0 0.0
        %595 = vmatpush1.msra.mxu0 0.0
        %596 = vmatprep.subr.mxu0 0.0
        %597 = vmatpush1.msra.mxu0 0.0
        %598 = vmatprep.subr.mxu0 0.0
        %599 = vmatpush1.msra.mxu0 0.0
        %600 = vmatprep.subr.mxu0 0.0
        %601 = vmatpush1.msra.mxu0 0.0
        %602 = vmatprep.subr.mxu0 0.0
        %603 = vmatpush1.msra.mxu0 0.0
        %604 = vmatprep.subr.mxu0 0.0
        %605 = vmatpush1.msra.mxu0 0.0
        %606 = vmatprep.subr.mxu0 0.0
        %607 = vmatpush1.msra.mxu0 0.0
        %608 = vmatprep.subr.mxu0 0.0
        %609 = vmatpush1.msra.mxu0 0.0
        %610 = vmatprep.subr.mxu0 0.0
        %611 = vmatpush1.msra.mxu0 0.0
        %612 = vmatprep.subr.mxu0 0.0
        %613 = vmatpush1.msra.mxu0 0.0
        %614 = vmatprep.subr.mxu0 0.0
        %615 = vmatpush1.msra.mxu0 0.0
        %616 = vmatprep.subr.mxu0 0.0
        %617 = vmatpush1.msra.mxu0 0.0
        %618 = vmatprep.subr.mxu0 0.0
        %619 = vmatpush1.msra.mxu0 0.0
        %620 = vmatprep.subr.mxu0 0.0
        %621 = vmatpush1.msra.mxu0 0.0
        %622 = vmatprep.subr.mxu0 0.0
        %623 = vmatpush1.msra.mxu0 0.0
        %624 = vmatprep.subr.mxu0 0.0
        %625 = vmatpush1.msra.mxu0 0.0
        %626 = vmatprep.mubr.f32.mxu0 0.0
        %627 = vmatmul.mubr.f32.gmra.mrb[0].mxu0 %v561
        %v628 = vpop.f32.mrb[0].mxu0
        %v629 = vadd.f32 0.0, %v628
        %v630 = vpop.f32.mrb[0].mxu0
        %631 = vdwg.mxu0
        %632 = vmatprep.subr.mxu0 0.0
        %633 = vmatpush1.msra.mxu0 %v545
        %634 = vmatprep.subr.mxu0 0.0
        %635 = vmatpush1.msra.mxu0 %v546
        %636 = vmatprep.subr.mxu0 0.0
        %637 = vmatpush1.msra.mxu0 %v547
        %638 = vmatprep.subr.mxu0 0.0
        %639 = vmatpush1.msra.mxu0 %v548
        %640 = vmatprep.subr.mxu0 0.0
        %641 = vmatpush1.msra.mxu0 %v549
        %642 = vmatprep.subr.mxu0 0.0
        %643 = vmatpush1.msra.mxu0 %v550
        %644 = vmatprep.subr.mxu0 0.0
        %645 = vmatpush1.msra.mxu0 %v551
        %646 = vmatprep.subr.mxu0 0.0
        %647 = vmatpush1.msra.mxu0 %v552
        %648 = vmatprep.subr.mxu0 0.0
        %649 = vmatpush1.msra.mxu0 %v553
        %650 = vmatprep.subr.mxu0 0.0
        %651 = vmatpush1.msra.mxu0 %v554
        %652 = vmatprep.subr.mxu0 0.0
        %653 = vmatpush1.msra.mxu0 %v555
        %654 = vmatprep.subr.mxu0 0.0
        %655 = vmatpush1.msra.mxu0 %v556
        %656 = vmatprep.subr.mxu0 0.0
        %657 = vmatpush1.msra.mxu0 %v557
        %658 = vmatprep.subr.mxu0 0.0
        %659 = vmatpush1.msra.mxu0 %v558
        %660 = vmatprep.subr.mxu0 0.0
        %661 = vmatpush1.msra.mxu0 %v559
        %662 = vmatprep.subr.mxu0 0.0
        %663 = vmatpush1.msra.mxu0 %v560
        %664 = vmatprep.subr.mxu0 0.0
        %665 = vmatpush1.msra.mxu0 0.0
        %666 = vmatprep.subr.mxu0 0.0
        %667 = vmatpush1.msra.mxu0 0.0
        %668 = vmatprep.subr.mxu0 0.0
        %669 = vmatpush1.msra.mxu0 0.0
        %670 = vmatprep.subr.mxu0 0.0
        %671 = vmatpush1.msra.mxu0 0.0
        %672 = vmatprep.subr.mxu0 0.0
        %673 = vmatpush1.msra.mxu0 0.0
        %674 = vmatprep.subr.mxu0 0.0
        %675 = vmatpush1.msra.mxu0 0.0
        %676 = vmatprep.subr.mxu0 0.0
        %677 = vmatpush1.msra.mxu0 0.0
        %678 = vmatprep.subr.mxu0 0.0
        %679 = vmatpush1.msra.mxu0 0.0
        %680 = vmatprep.subr.mxu0 0.0
        %681 = vmatpush1.msra.mxu0 0.0
        %682 = vmatprep.subr.mxu0 0.0
        %683 = vmatpush1.msra.mxu0 0.0
        %684 = vmatprep.subr.mxu0 0.0
        %685 = vmatpush1.msra.mxu0 0.0
        %686 = vmatprep.subr.mxu0 0.0
        %687 = vmatpush1.msra.mxu0 0.0
        %688 = vmatprep.subr.mxu0 0.0
        %689 = vmatpush1.msra.mxu0 0.0
        %690 = vmatprep.subr.mxu0 0.0
        %691 = vmatpush1.msra.mxu0 0.0
        %692 = vmatprep.subr.mxu0 0.0
        %693 = vmatpush1.msra.mxu0 0.0
        %694 = vmatprep.subr.mxu0 0.0
        %695 = vmatpush1.msra.mxu0 0.0
        %696 = vmatprep.mubr.f32.mxu0 0.0
        %697 = vmatmul.mubr.f32.gmra.mrb[0].mxu0 %v629
        %v698 = vpop.f32.mrb[0].mxu0
        %v699 = vadd.f32 0.0, %v698
        %v700 = vpop.f32.mrb[0].mxu0
        %701 = vdwg.mxu0
        %v702 = vsub.f32 %v561, %v699
        %v703 = vmul.f32 %v702, %v702
        %704 = vmatprep.subr.mxu0 0.0
        %705 = vmatpush1.msra.mxu0 %v529
        %706 = vmatprep.subr.mxu0 0.0
        %707 = vmatpush1.msra.mxu0 %v530
        %708 = vmatprep.subr.mxu0 0.0
        %709 = vmatpush1.msra.mxu0 %v531
        %710 = vmatprep.subr.mxu0 0.0
        %711 = vmatpush1.msra.mxu0 %v532
        %712 = vmatprep.subr.mxu0 0.0
        %713 = vmatpush1.msra.mxu0 %v533
        %714 = vmatprep.subr.mxu0 0.0
        %715 = vmatpush1.msra.mxu0 %v534
        %716 = vmatprep.subr.mxu0 0.0
        %717 = vmatpush1.msra.mxu0 %v535
        %718 = vmatprep.subr.mxu0 0.0
        %719 = vmatpush1.msra.mxu0 %v536
        %720 = vmatprep.subr.mxu0 0.0
        %721 = vmatpush1.msra.mxu0 %v537
        %722 = vmatprep.subr.mxu0 0.0
        %723 = vmatpush1.msra.mxu0 %v538
        %724 = vmatprep.subr.mxu0 0.0
        %725 = vmatpush1.msra.mxu0 %v539
        %726 = vmatprep.subr.mxu0 0.0
        %727 = vmatpush1.msra.mxu0 %v540
        %728 = vmatprep.subr.mxu0 0.0
        %729 = vmatpush1.msra.mxu0 %v541
        %730 = vmatprep.subr.mxu0 0.0
        %731 = vmatpush1.msra.mxu0 %v542
        %732 = vmatprep.subr.mxu0 0.0
        %733 = vmatpush1.msra.mxu0 %v543
        %734 = vmatprep.subr.mxu0 0.0
        %735 = vmatpush1.msra.mxu0 %v544
        %736 = vmatprep.subr.mxu0 0.0
        %737 = vmatpush1.msra.mxu0 0.0
        %738 = vmatprep.subr.mxu0 0.0
        %739 = vmatpush1.msra.mxu0 0.0
        %740 = vmatprep.subr.mxu0 0.0
        %741 = vmatpush1.msra.mxu0 0.0
        %742 = vmatprep.subr.mxu0 0.0
        %743 = vmatpush1.msra.mxu0 0.0
        %744 = vmatprep.subr.mxu0 0.0
        %745 = vmatpush1.msra.mxu0 0.0
        %746 = vmatprep.subr.mxu0 0.0
        %747 = vmatpush1.msra.mxu0 0.0
        %748 = vmatprep.subr.mxu0 0.0
        %749 = vmatpush1.msra.mxu0 0.0
        %750 = vmatprep.subr.mxu0 0.0
        %751 = vmatpush1.msra.mxu0 0.0
        %752 = vmatprep.subr.mxu0 0.0
        %753 = vmatpush1.msra.mxu0 0.0
        %754 = vmatprep.subr.mxu0 0.0
        %755 = vmatpush1.msra.mxu0 0.0
        %756 = vmatprep.subr.mxu0 0.0
        %757 = vmatpush1.msra.mxu0 0.0
        %758 = vmatprep.subr.mxu0 0.0
        %759 = vmatpush1.msra.mxu0 0.0
        %760 = vmatprep.subr.mxu0 0.0
        %761 = vmatpush1.msra.mxu0 0.0
        %762 = vmatprep.subr.mxu0 0.0
        %763 = vmatpush1.msra.mxu0 0.0
        %764 = vmatprep.subr.mxu0 0.0
        %765 = vmatpush1.msra.mxu0 0.0
        %766 = vmatprep.subr.mxu0 0.0
        %767 = vmatpush1.msra.mxu0 0.0
        %768 = vmatprep.mubr.f32.mxu0 0.0
        %769 = vmatmul.mubr.f32.gmra.mrb[0].mxu0 %v703
        %v770 = vpop.f32.mrb[0].mxu0
        %v771 = vadd.f32 0.0, %v770
        %v772 = vpop.f32.mrb[0].mxu0
        %773 = vdwg.mxu0
        %774 = vmatprep.subr.mxu0 0.0
        %775 = vmatpush1.msra.mxu0 %v545
        %776 = vmatprep.subr.mxu0 0.0
        %777 = vmatpush1.msra.mxu0 %v546
        %778 = vmatprep.subr.mxu0 0.0
        %779 = vmatpush1.msra.mxu0 %v547
        %780 = vmatprep.subr.mxu0 0.0
        %781 = vmatpush1.msra.mxu0 %v548
        %782 = vmatprep.subr.mxu0 0.0
        %783 = vmatpush1.msra.mxu0 %v549
        %784 = vmatprep.subr.mxu0 0.0
        %785 = vmatpush1.msra.mxu0 %v550
        %786 = vmatprep.subr.mxu0 0.0
        %787 = vmatpush1.msra.mxu0 %v551
        %788 = vmatprep.subr.mxu0 0.0
        %789 = vmatpush1.msra.mxu0 %v552
        %790 = vmatprep.subr.mxu0 0.0
        %791 = vmatpush1.msra.mxu0 %v553
        %792 = vmatprep.subr.mxu0 0.0
        %793 = vmatpush1.msra.mxu0 %v554
        %794 = vmatprep.subr.mxu0 0.0
        %795 = vmatpush1.msra.mxu0 %v555
        %796 = vmatprep.subr.mxu0 0.0
        %797 = vmatpush1.msra.mxu0 %v556
        %798 = vmatprep.subr.mxu0 0.0
        %799 = vmatpush1.msra.mxu0 %v557
        %800 = vmatprep.subr.mxu0 0.0
        %801 = vmatpush1.msra.mxu0 %v558
        %802 = vmatprep.subr.mxu0 0.0
        %803 = vmatpush1.msra.mxu0 %v559
        %804 = vmatprep.subr.mxu0 0.0
        %805 = vmatpush1.msra.mxu0 %v560
        %806 = vmatprep.subr.mxu0 0.0
        %807 = vmatpush1.msra.mxu0 0.0
        %808 = vmatprep.subr.mxu0 0.0
        %809 = vmatpush1.msra.mxu0 0.0
        %810 = vmatprep.subr.mxu0 0.0
        %811 = vmatpush1.msra.mxu0 0.0
        %812 = vmatprep.subr.mxu0 0.0
        %813 = vmatpush1.msra.mxu0 0.0
        %814 = vmatprep.subr.mxu0 0.0
        %815 = vmatpush1.msra.mxu0 0.0
        %816 = vmatprep.subr.mxu0 0.0
        %817 = vmatpush1.msra.mxu0 0.0
        %818 = vmatprep.subr.mxu0 0.0
        %819 = vmatpush1.msra.mxu0 0.0
        %820 = vmatprep.subr.mxu0 0.0
        %821 = vmatpush1.msra.mxu0 0.0
        %822 = vmatprep.subr.mxu0 0.0
        %823 = vmatpush1.msra.mxu0 0.0
        %824 = vmatprep.subr.mxu0 0.0
        %825 = vmatpush1.msra.mxu0 0.0
        %826 = vmatprep.subr.mxu0 0.0
        %827 = vmatpush1.msra.mxu0 0.0
        %828 = vmatprep.subr.mxu0 0.0
        %829 = vmatpush1.msra.mxu0 0.0
        %830 = vmatprep.subr.mxu0 0.0
        %831 = vmatpush1.msra.mxu0 0.0
        %832 = vmatprep.subr.mxu0 0.0
        %833 = vmatpush1.msra.mxu0 0.0
        %834 = vmatprep.subr.mxu0 0.0
        %835 = vmatpush1.msra.mxu0 0.0
        %836 = vmatprep.subr.mxu0 0.0
        %837 = vmatpush1.msra.mxu0 0.0
        %838 = vmatprep.mubr.f32.mxu0 0.0
        %839 = vmatmul.mubr.f32.gmra.mrb[0].mxu0 %v771
        %v840 = vpop.f32.mrb[0].mxu0
        %v841 = vadd.f32 1e-05, %v840
        %v842 = vpop.f32.mrb[0].mxu0
        %843 = vdwg.mxu0
        %v844 = vrsqrt.pop %v841
        %v845 = vmul.f32 %v702, %v844
        %v846 = vld [vmem:[%s3] sm:$0x1]
        %v848 = vlaneseq
        %v849 = vshrl.u32 %v848, 7
        %v850 = vsub.s32 0, %v849
        %v851 = vrot.slane %v846, %v850
        %v853 = vmul.f32 %v845, %v851
        %v854 = vld [vmem:[%s4] sm:$0x1]
        %v856 = vlaneseq
        %v857 = vshrl.u32 %v856, 7
        %v858 = vsub.s32 0, %v857
        %v859 = vrot.slane %v854, %v858
        %v861 = vadd.f32 %v853, %v859
        %v862 = vld [vmem:[#allocation8] sm:$0xff]
        %v863 = vld [vmem:[#allocation8 + $0x8] sm:$0xff]
        %v864 = vld [vmem:[#allocation8 + $0x10] sm:$0xff]
        %v865 = vld [vmem:[#allocation8 + $0x18] sm:$0xff]
        %v866 = vld [vmem:[#allocation8 + $0x20] sm:$0xff]
        %v867 = vld [vmem:[#allocation8 + $0x28] sm:$0xff]
        %v868 = vld [vmem:[#allocation8 + $0x30] sm:$0xff]
        %v869 = vld [vmem:[#allocation8 + $0x38] sm:$0xff]
        %v870 = vld [vmem:[#allocation8 + $0x40] sm:$0xff]
        %v871 = vld [vmem:[#allocation8 + $0x48] sm:$0xff]
        %v872 = vld [vmem:[#allocation8 + $0x50] sm:$0xff]
        %v873 = vld [vmem:[#allocation8 + $0x58] sm:$0xff]
        %v874 = vld [vmem:[#allocation8 + $0x60] sm:$0xff]
        %v875 = vld [vmem:[#allocation8 + $0x68] sm:$0xff]
        %v876 = vld [vmem:[#allocation8 + $0x70] sm:$0xff]
        %v877 = vld [vmem:[#allocation8 + $0x78] sm:$0xff]
        %v878 = vld [vmem:[%s6] sm:$0x1]
        %v880 = vlaneseq
        %v881 = vshrl.u32 %v880, 7
        %v882 = vsub.s32 0, %v881
        %v883 = vrot.slane %v878, %v882
        %885 = vmatprep.subr.mxu0 0.0
        %886 = vmatpush1.msra.mxu0 %v862
        %887 = vmatprep.subr.mxu0 0.0
        %888 = vmatpush1.msra.mxu0 %v863
        %889 = vmatprep.subr.mxu0 0.0
        %890 = vmatpush1.msra.mxu0 %v864
        %891 = vmatprep.subr.mxu0 0.0
        %892 = vmatpush1.msra.mxu0 %v865
        %893 = vmatprep.subr.mxu0 0.0
        %894 = vmatpush1.msra.mxu0 %v866
        %895 = vmatprep.subr.mxu0 0.0
        %896 = vmatpush1.msra.mxu0 %v867
        %897 = vmatprep.subr.mxu0 0.0
        %898 = vmatpush1.msra.mxu0 %v868
        %899 = vmatprep.subr.mxu0 0.0
        %900 = vmatpush1.msra.mxu0 %v869
        %901 = vmatprep.subr.mxu0 0.0
        %902 = vmatpush1.msra.mxu0 %v870
        %903 = vmatprep.subr.mxu0 0.0
        %904 = vmatpush1.msra.mxu0 %v871
        %905 = vmatprep.subr.mxu0 0.0
        %906 = vmatpush1.msra.mxu0 %v872
        %907 = vmatprep.subr.mxu0 0.0
        %908 = vmatpush1.msra.mxu0 %v873
        %909 = vmatprep.subr.mxu0 0.0
        %910 = vmatpush1.msra.mxu0 %v874
        %911 = vmatprep.subr.mxu0 0.0
        %912 = vmatpush1.msra.mxu0 %v875
        %913 = vmatprep.subr.mxu0 0.0
        %914 = vmatpush1.msra.mxu0 %v876
        %915 = vmatprep.subr.mxu0 0.0
        %916 = vmatpush1.msra.mxu0 %v877
        %917 = vmatprep.subr.mxu0 0.0
        %918 = vmatpush1.msra.mxu0 0.0
        %919 = vmatprep.subr.mxu0 0.0
        %920 = vmatpush1.msra.mxu0 0.0
        %921 = vmatprep.subr.mxu0 0.0
        %922 = vmatpush1.msra.mxu0 0.0
        %923 = vmatprep.subr.mxu0 0.0
        %924 = vmatpush1.msra.mxu0 0.0
        %925 = vmatprep.subr.mxu0 0.0
        %926 = vmatpush1.msra.mxu0 0.0
        %927 = vmatprep.subr.mxu0 0.0
        %928 = vmatpush1.msra.mxu0 0.0
        %929 = vmatprep.subr.mxu0 0.0
        %930 = vmatpush1.msra.mxu0 0.0
        %931 = vmatprep.subr.mxu0 0.0
        %932 = vmatpush1.msra.mxu0 0.0
        %933 = vmatprep.subr.mxu0 0.0
        %934 = vmatpush1.msra.mxu0 0.0
        %935 = vmatprep.subr.mxu0 0.0
        %936 = vmatpush1.msra.mxu0 0.0
        %937 = vmatprep.subr.mxu0 0.0
        %938 = vmatpush1.msra.mxu0 0.0
        %939 = vmatprep.subr.mxu0 0.0
        %940 = vmatpush1.msra.mxu0 0.0
        %941 = vmatprep.subr.mxu0 0.0
        %942 = vmatpush1.msra.mxu0 0.0
        %943 = vmatprep.subr.mxu0 0.0
        %944 = vmatpush1.msra.mxu0 0.0
        %945 = vmatprep.subr.mxu0 0.0
        %946 = vmatpush1.msra.mxu0 0.0
        %947 = vmatprep.subr.mxu0 0.0
        %948 = vmatpush1.msra.mxu0 0.0
        %949 = vmatprep.mubr.f32.mxu0 0.0
        %950 = vmatmul.mubr.f32.gmra.mrb[0].mxu0 %v861
        %v951 = vpop.f32.mrb[0].mxu0
        %v952 = vadd.f32 %v883, %v951
        %v953 = vpop.f32.mrb[0].mxu0
        %954 = vdwg.mxu0
        %v955 = vmax.f32 %v952, 0.0
        %v956 = vld [vmem:[#allocation10] sm:$0xff]
        %v957 = vld [vmem:[#allocation10 + $0x8] sm:$0xff]
        %v958 = vld [vmem:[#allocation10 + $0x10] sm:$0xff]
        %v959 = vld [vmem:[#allocation10 + $0x18] sm:$0xff]
        %v960 = vld [vmem:[#allocation10 + $0x20] sm:$0xff]
        %v961 = vld [vmem:[#allocation10 + $0x28] sm:$0xff]
        %v962 = vld [vmem:[#allocation10 + $0x30] sm:$0xff]
        %v963 = vld [vmem:[#allocation10 + $0x38] sm:$0xff]
        %v964 = vld [vmem:[#allocation10 + $0x40] sm:$0xff]
        %v965 = vld [vmem:[#allocation10 + $0x48] sm:$0xff]
        %v966 = vld [vmem:[#allocation10 + $0x50] sm:$0xff]
        %v967 = vld [vmem:[#allocation10 + $0x58] sm:$0xff]
        %v968 = vld [vmem:[#allocation10 + $0x60] sm:$0xff]
        %v969 = vld [vmem:[#allocation10 + $0x68] sm:$0xff]
        %v970 = vld [vmem:[#allocation10 + $0x70] sm:$0xff]
        %v971 = vld [vmem:[#allocation10 + $0x78] sm:$0xff]
        %v972 = vld [vmem:[%s8] sm:$0x1]
        %v974 = vlaneseq
        %v975 = vshrl.u32 %v974, 7
        %v976 = vsub.s32 0, %v975
        %v977 = vrot.slane %v972, %v976
        %979 = vmatprep.subr.mxu0 0.0
        %980 = vmatpush1.msra.mxu0 %v956
        %981 = vmatprep.subr.mxu0 0.0
        %982 = vmatpush1.msra.mxu0 %v957
        %983 = vmatprep.subr.mxu0 0.0
        %984 = vmatpush1.msra.mxu0 %v958
        %985 = vmatprep.subr.mxu0 0.0
        %986 = vmatpush1.msra.mxu0 %v959
        %987 = vmatprep.subr.mxu0 0.0
        %988 = vmatpush1.msra.mxu0 %v960
        %989 = vmatprep.subr.mxu0 0.0
        %990 = vmatpush1.msra.mxu0 %v961
        %991 = vmatprep.subr.mxu0 0.0
        %992 = vmatpush1.msra.mxu0 %v962
        %993 = vmatprep.subr.mxu0 0.0
        %994 = vmatpush1.msra.mxu0 %v963
        %995 = vmatprep.subr.mxu0 0.0
        %996 = vmatpush1.msra.mxu0 %v964
        %997 = vmatprep.subr.mxu0 0.0
        %998 = vmatpush1.msra.mxu0 %v965
        %999 = vmatprep.subr.mxu0 0.0
        %1000 = vmatpush1.msra.mxu0 %v966
        %1001 = vmatprep.subr.mxu0 0.0
        %1002 = vmatpush1.msra.mxu0 %v967
        %1003 = vmatprep.subr.mxu0 0.0
        %1004 = vmatpush1.msra.mxu0 %v968
        %1005 = vmatprep.subr.mxu0 0.0
        %1006 = vmatpush1.msra.mxu0 %v969
        %1007 = vmatprep.subr.mxu0 0.0
        %1008 = vmatpush1.msra.mxu0 %v970
        %1009 = vmatprep.subr.mxu0 0.0
        %1010 = vmatpush1.msra.mxu0 %v971
        %1011 = vmatprep.subr.mxu0 0.0
        %1012 = vmatpush1.msra.mxu0 0.0
        %1013 = vmatprep.subr.mxu0 0.0
        %1014 = vmatpush1.msra.mxu0 0.0
        %1015 = vmatprep.subr.mxu0 0.0
        %1016 = vmatpush1.msra.mxu0 0.0
        %1017 = vmatprep.subr.mxu0 0.0
        %1018 = vmatpush1.msra.mxu0 0.0
        %1019 = vmatprep.subr.mxu0 0.0
        %1020 = vmatpush1.msra.mxu0 0.0
        %1021 = vmatprep.subr.mxu0 0.0
        %1022 = vmatpush1.msra.mxu0 0.0
        %1023 = vmatprep.subr.mxu0 0.0
        %1024 = vmatpush1.msra.mxu0 0.0
        %1025 = vmatprep.subr.mxu0 0.0
        %1026 = vmatpush1.msra.mxu0 0.0
        %1027 = vmatprep.subr.mxu0 0.0
        %1028 = vmatpush1.msra.mxu0 0.0
        %1029 = vmatprep.subr.mxu0 0.0
        %1030 = vmatpush1.msra.mxu0 0.0
        %1031 = vmatprep.subr.mxu0 0.0
        %1032 = vmatpush1.msra.mxu0 0.0
        %1033 = vmatprep.subr.mxu0 0.0
        %1034 = vmatpush1.msra.mxu0 0.0
        %1035 = vmatprep.subr.mxu0 0.0
        %1036 = vmatpush1.msra.mxu0 0.0
        %1037 = vmatprep.subr.mxu0 0.0
        %1038 = vmatpush1.msra.mxu0 0.0
        %1039 = vmatprep.subr.mxu0 0.0
        %1040 = vmatpush1.msra.mxu0 0.0
        %1041 = vmatprep.subr.mxu0 0.0
        %1042 = vmatpush1.msra.mxu0 0.0
        %1043 = vmatprep.mubr.f32.mxu0 0.0
        %1044 = vmatmul.mubr.f32.gmra.mrb[0].mxu0 %v955
        %v1045 = vpop.f32.mrb[0].mxu0
        %v1046 = vadd.f32 %v977, %v1045
        %v1047 = vpop.f32.mrb[0].mxu0
        %1048 = vdwg.mxu0
        %v1049 = vmax.f32 %v1046, 0.0
        %v1050 = vld [vmem:[#allocation11] sm:$0xff]
        %v1051 = vld [vmem:[#allocation11 + $0x8] sm:$0xff]
        %v1052 = vld [vmem:[#allocation11 + $0x10] sm:$0xff]
        %v1053 = vld [vmem:[#allocation11 + $0x18] sm:$0xff]
        %v1054 = vld [vmem:[#allocation11 + $0x20] sm:$0xff]
        %v1055 = vld [vmem:[#allocation11 + $0x28] sm:$0xff]
        %v1056 = vld [vmem:[#allocation11 + $0x30] sm:$0xff]
        %v1057 = vld [vmem:[#allocation11 + $0x38] sm:$0xff]
        %v1058 = vld [vmem:[#allocation11 + $0x40] sm:$0xff]
        %v1059 = vld [vmem:[#allocation11 + $0x48] sm:$0xff]
        %v1060 = vld [vmem:[#allocation11 + $0x50] sm:$0xff]
        %v1061 = vld [vmem:[#allocation11 + $0x58] sm:$0xff]
        %v1062 = vld [vmem:[#allocation11 + $0x60] sm:$0xff]
        %v1063 = vld [vmem:[#allocation11 + $0x68] sm:$0xff]
        %v1064 = vld [vmem:[#allocation11 + $0x70] sm:$0xff]
        %v1065 = vld [vmem:[#allocation11 + $0x78] sm:$0xff]
        %v1066 = vld [vmem:[%s10] sm:$0x1]
        %v1068 = vlaneseq
        %v1069 = vshrl.u32 %v1068, 7
        %v1070 = vsub.s32 0, %v1069
        %v1071 = vrot.slane %v1066, %v1070
        %1073 = vmatprep.subr.mxu0 0.0
        %1074 = vmatpush1.msra.mxu0 %v1050
        %1075 = vmatprep.subr.mxu0 0.0
        %1076 = vmatpush1.msra.mxu0 %v1051
        %1077 = vmatprep.subr.mxu0 0.0
        %1078 = vmatpush1.msra.mxu0 %v1052
        %1079 = vmatprep.subr.mxu0 0.0
        %1080 = vmatpush1.msra.mxu0 %v1053
        %1081 = vmatprep.subr.mxu0 0.0
        %1082 = vmatpush1.msra.mxu0 %v1054
        %1083 = vmatprep.subr.mxu0 0.0
        %1084 = vmatpush1.msra.mxu0 %v1055
        %1085 = vmatprep.subr.mxu0 0.0
        %1086 = vmatpush1.msra.mxu0 %v1056
        %1087 = vmatprep.subr.mxu0 0.0
        %1088 = vmatpush1.msra.mxu0 %v1057
        %1089 = vmatprep.subr.mxu0 0.0
        %1090 = vmatpush1.msra.mxu0 %v1058
        %1091 = vmatprep.subr.mxu0 0.0
        %1092 = vmatpush1.msra.mxu0 %v1059
        %1093 = vmatprep.subr.mxu0 0.0
        %1094 = vmatpush1.msra.mxu0 %v1060
        %1095 = vmatprep.subr.mxu0 0.0
        %1096 = vmatpush1.msra.mxu0 %v1061
        %1097 = vmatprep.subr.mxu0 0.0
        %1098 = vmatpush1.msra.mxu0 %v1062
        %1099 = vmatprep.subr.mxu0 0.0
        %1100 = vmatpush1.msra.mxu0 %v1063
        %1101 = vmatprep.subr.mxu0 0.0
        %1102 = vmatpush1.msra.mxu0 %v1064
        %1103 = vmatprep.subr.mxu0 0.0
        %1104 = vmatpush1.msra.mxu0 %v1065
        %1105 = vmatprep.subr.mxu0 0.0
        %1106 = vmatpush1.msra.mxu0 0.0
        %1107 = vmatprep.subr.mxu0 0.0
        %1108 = vmatpush1.msra.mxu0 0.0
        %1109 = vmatprep.subr.mxu0 0.0
        %1110 = vmatpush1.msra.mxu0 0.0
        %1111 = vmatprep.subr.mxu0 0.0
        %1112 = vmatpush1.msra.mxu0 0.0
        %1113 = vmatprep.subr.mxu0 0.0
        %1114 = vmatpush1.msra.mxu0 0.0
        %1115 = vmatprep.subr.mxu0 0.0
        %1116 = vmatpush1.msra.mxu0 0.0
        %1117 = vmatprep.subr.mxu0 0.0
        %1118 = vmatpush1.msra.mxu0 0.0
        %1119 = vmatprep.subr.mxu0 0.0
        %1120 = vmatpush1.msra.mxu0 0.0
        %1121 = vmatprep.subr.mxu0 0.0
        %1122 = vmatpush1.msra.mxu0 0.0
        %1123 = vmatprep.subr.mxu0 0.0
        %1124 = vmatpush1.msra.mxu0 0.0
        %1125 = vmatprep.subr.mxu0 0.0
        %1126 = vmatpush1.msra.mxu0 0.0
        %1127 = vmatprep.subr.mxu0 0.0
        %1128 = vmatpush1.msra.mxu0 0.0
        %1129 = vmatprep.subr.mxu0 0.0
        %1130 = vmatpush1.msra.mxu0 0.0
        %1131 = vmatprep.subr.mxu0 0.0
        %1132 = vmatpush1.msra.mxu0 0.0
        %1133 = vmatprep.subr.mxu0 0.0
        %1134 = vmatpush1.msra.mxu0 0.0
        %1135 = vmatprep.subr.mxu0 0.0
        %1136 = vmatpush1.msra.mxu0 0.0
        %1137 = vmatprep.mubr.f32.mxu0 0.0
        %1138 = vmatmul.mubr.f32.gmra.mrb[0].mxu0 %v1049
        %v1139 = vpop.f32.mrb[0].mxu0
        %v1140 = vadd.f32 %v1071, %v1139
        %v1141 = vpop.f32.mrb[0].mxu0
        %1142 = vdwg.mxu0
        %1143 = vmatprep.subr.mxu0 0.0
        %1144 = vmatpush1.msra.mxu0 %v529
        %1145 = vmatprep.subr.mxu0 0.0
        %1146 = vmatpush1.msra.mxu0 %v530
        %1147 = vmatprep.subr.mxu0 0.0
        %1148 = vmatpush1.msra.mxu0 %v531
        %1149 = vmatprep.subr.mxu0 0.0
        %1150 = vmatpush1.msra.mxu0 %v532
        %1151 = vmatprep.subr.mxu0 0.0
        %1152 = vmatpush1.msra.mxu0 %v533
        %1153 = vmatprep.subr.mxu0 0.0
        %1154 = vmatpush1.msra.mxu0 %v534
        %1155 = vmatprep.subr.mxu0 0.0
        %1156 = vmatpush1.msra.mxu0 %v535
        %1157 = vmatprep.subr.mxu0 0.0
        %1158 = vmatpush1.msra.mxu0 %v536
        %1159 = vmatprep.subr.mxu0 0.0
        %1160 = vmatpush1.msra.mxu0 %v537
        %1161 = vmatprep.subr.mxu0 0.0
        %1162 = vmatpush1.msra.mxu0 %v538
        %1163 = vmatprep.subr.mxu0 0.0
        %1164 = vmatpush1.msra.mxu0 %v539
        %1165 = vmatprep.subr.mxu0 0.0
        %1166 = vmatpush1.msra.mxu0 %v540
        %1167 = vmatprep.subr.mxu0 0.0
        %1168 = vmatpush1.msra.mxu0 %v541
        %1169 = vmatprep.subr.mxu0 0.0
        %1170 = vmatpush1.msra.mxu0 %v542
        %1171 = vmatprep.subr.mxu0 0.0
        %1172 = vmatpush1.msra.mxu0 %v543
        %1173 = vmatprep.subr.mxu0 0.0
        %1174 = vmatpush1.msra.mxu0 %v544
        %1175 = vmatprep.subr.mxu0 0.0
        %1176 = vmatpush1.msra.mxu0 0.0
        %1177 = vmatprep.subr.mxu0 0.0
        %1178 = vmatpush1.msra.mxu0 0.0
        %1179 = vmatprep.subr.mxu0 0.0
        %1180 = vmatpush1.msra.mxu0 0.0
        %1181 = vmatprep.subr.mxu0 0.0
        %1182 = vmatpush1.msra.mxu0 0.0
        %1183 = vmatprep.subr.mxu0 0.0
        %1184 = vmatpush1.msra.mxu0 0.0
        %1185 = vmatprep.subr.mxu0 0.0
        %1186 = vmatpush1.msra.mxu0 0.0
        %1187 = vmatprep.subr.mxu0 0.0
        %1188 = vmatpush1.msra.mxu0 0.0
        %1189 = vmatprep.subr.mxu0 0.0
        %1190 = vmatpush1.msra.mxu0 0.0
        %1191 = vmatprep.subr.mxu0 0.0
        %1192 = vmatpush1.msra.mxu0 0.0
        %1193 = vmatprep.subr.mxu0 0.0
        %1194 = vmatpush1.msra.mxu0 0.0
        %1195 = vmatprep.subr.mxu0 0.0
        %1196 = vmatpush1.msra.mxu0 0.0
        %1197 = vmatprep.subr.mxu0 0.0
        %1198 = vmatpush1.msra.mxu0 0.0
        %1199 = vmatprep.subr.mxu0 0.0
        %1200 = vmatpush1.msra.mxu0 0.0
        %1201 = vmatprep.subr.mxu0 0.0
        %1202 = vmatpush1.msra.mxu0 0.0
        %1203 = vmatprep.subr.mxu0 0.0
        %1204 = vmatpush1.msra.mxu0 0.0
        %1205 = vmatprep.subr.mxu0 0.0
        %1206 = vmatpush1.msra.mxu0 0.0
        %1207 = vmatprep.mubr.f32.mxu0 0.0
        %1208 = vmatmul.mubr.f32.gmra.mrb[0].mxu0 %v1140
        %v1209 = vpop.f32.mrb[0].mxu0
        %v1210 = vadd.f32 0.0, %v1209
        %v1211 = vpop.f32.mrb[0].mxu0
        %1212 = vdwg.mxu0
        %1213 = vmatprep.subr.mxu0 0.0
        %1214 = vmatpush1.msra.mxu0 %v545
        %1215 = vmatprep.subr.mxu0 0.0
        %1216 = vmatpush1.msra.mxu0 %v546
        %1217 = vmatprep.subr.mxu0 0.0
        %1218 = vmatpush1.msra.mxu0 %v547
        %1219 = vmatprep.subr.mxu0 0.0
        %1220 = vmatpush1.msra.mxu0 %v548
        %1221 = vmatprep.subr.mxu0 0.0
        %1222 = vmatpush1.msra.mxu0 %v549
        %1223 = vmatprep.subr.mxu0 0.0
        %1224 = vmatpush1.msra.mxu0 %v550
        %1225 = vmatprep.subr.mxu0 0.0
        %1226 = vmatpush1.msra.mxu0 %v551
        %1227 = vmatprep.subr.mxu0 0.0
        %1228 = vmatpush1.msra.mxu0 %v552
        %1229 = vmatprep.subr.mxu0 0.0
        %1230 = vmatpush1.msra.mxu0 %v553
        %1231 = vmatprep.subr.mxu0 0.0
        %1232 = vmatpush1.msra.mxu0 %v554
        %1233 = vmatprep.subr.mxu0 0.0
        %1234 = vmatpush1.msra.mxu0 %v555
        %1235 = vmatprep.subr.mxu0 0.0
        %1236 = vmatpush1.msra.mxu0 %v556
        %1237 = vmatprep.subr.mxu0 0.0
        %1238 = vmatpush1.msra.mxu0 %v557
        %1239 = vmatprep.subr.mxu0 0.0
        %1240 = vmatpush1.msra.mxu0 %v558
        %1241 = vmatprep.subr.mxu0 0.0
        %1242 = vmatpush1.msra.mxu0 %v559
        %1243 = vmatprep.subr.mxu0 0.0
        %1244 = vmatpush1.msra.mxu0 %v560
        %1245 = vmatprep.subr.mxu0 0.0
        %1246 = vmatpush1.msra.mxu0 0.0
        %1247 = vmatprep.subr.mxu0 0.0
        %1248 = vmatpush1.msra.mxu0 0.0
        %1249 = vmatprep.subr.mxu0 0.0
        %1250 = vmatpush1.msra.mxu0 0.0
        %1251 = vmatprep.subr.mxu0 0.0
        %1252 = vmatpush1.msra.mxu0 0.0
        %1253 = vmatprep.subr.mxu0 0.0
        %1254 = vmatpush1.msra.mxu0 0.0
        %1255 = vmatprep.subr.mxu0 0.0
        %1256 = vmatpush1.msra.mxu0 0.0
        %1257 = vmatprep.subr.mxu0 0.0
        %1258 = vmatpush1.msra.mxu0 0.0
        %1259 = vmatprep.subr.mxu0 0.0
        %1260 = vmatpush1.msra.mxu0 0.0
        %1261 = vmatprep.subr.mxu0 0.0
        %1262 = vmatpush1.msra.mxu0 0.0
        %1263 = vmatprep.subr.mxu0 0.0
        %1264 = vmatpush1.msra.mxu0 0.0
        %1265 = vmatprep.subr.mxu0 0.0
        %1266 = vmatpush1.msra.mxu0 0.0
        %1267 = vmatprep.subr.mxu0 0.0
        %1268 = vmatpush1.msra.mxu0 0.0
        %1269 = vmatprep.subr.mxu0 0.0
        %1270 = vmatpush1.msra.mxu0 0.0
        %1271 = vmatprep.subr.mxu0 0.0
        %1272 = vmatpush1.msra.mxu0 0.0
        %1273 = vmatprep.subr.mxu0 0.0
        %1274 = vmatpush1.msra.mxu0 0.0
        %1275 = vmatprep.subr.mxu0 0.0
        %1276 = vmatpush1.msra.mxu0 0.0
        %1277 = vmatprep.mubr.f32.mxu0 0.0
        %1278 = vmatmul.mubr.f32.gmra.mrb[0].mxu0 %v1210
        %v1279 = vpop.f32.mrb[0].mxu0
        %v1280 = vadd.f32 0.0, %v1279
        %v1281 = vpop.f32.mrb[0].mxu0
        %1282 = vdwg.mxu0
        %v1283 = vsub.f32 %v1140, %v1280
        %v1284 = vmul.f32 %v1283, %v1283
        %1285 = vmatprep.subr.mxu0 0.0
        %1286 = vmatpush1.msra.mxu0 %v529
        %1287 = vmatprep.subr.mxu0 0.0
        %1288 = vmatpush1.msra.mxu0 %v530
        %1289 = vmatprep.subr.mxu0 0.0
        %1290 = vmatpush1.msra.mxu0 %v531
        %1291 = vmatprep.subr.mxu0 0.0
        %1292 = vmatpush1.msra.mxu0 %v532
        %1293 = vmatprep.subr.mxu0 0.0
        %1294 = vmatpush1.msra.mxu0 %v533
        %1295 = vmatprep.subr.mxu0 0.0
        %1296 = vmatpush1.msra.mxu0 %v534
        %1297 = vmatprep.subr.mxu0 0.0
        %1298 = vmatpush1.msra.mxu0 %v535
        %1299 = vmatprep.subr.mxu0 0.0
        %1300 = vmatpush1.msra.mxu0 %v536
        %1301 = vmatprep.subr.mxu0 0.0
        %1302 = vmatpush1.msra.mxu0 %v537
        %1303 = vmatprep.subr.mxu0 0.0
        %1304 = vmatpush1.msra.mxu0 %v538
        %1305 = vmatprep.subr.mxu0 0.0
        %1306 = vmatpush1.msra.mxu0 %v539
        %1307 = vmatprep.subr.mxu0 0.0
        %1308 = vmatpush1.msra.mxu0 %v540
        %1309 = vmatprep.subr.mxu0 0.0
        %1310 = vmatpush1.msra.mxu0 %v541
        %1311 = vmatprep.subr.mxu0 0.0
        %1312 = vmatpush1.msra.mxu0 %v542
        %1313 = vmatprep.subr.mxu0 0.0
        %1314 = vmatpush1.msra.mxu0 %v543
        %1315 = vmatprep.subr.mxu0 0.0
        %1316 = vmatpush1.msra.mxu0 %v544
        %1317 = vmatprep.subr.mxu0 0.0
        %1318 = vmatpush1.msra.mxu0 0.0
        %1319 = vmatprep.subr.mxu0 0.0
        %1320 = vmatpush1.msra.mxu0 0.0
        %1321 = vmatprep.subr.mxu0 0.0
        %1322 = vmatpush1.msra.mxu0 0.0
        %1323 = vmatprep.subr.mxu0 0.0
        %1324 = vmatpush1.msra.mxu0 0.0
        %1325 = vmatprep.subr.mxu0 0.0
        %1326 = vmatpush1.msra.mxu0 0.0
        %1327 = vmatprep.subr.mxu0 0.0
        %1328 = vmatpush1.msra.mxu0 0.0
        %1329 = vmatprep.subr.mxu0 0.0
        %1330 = vmatpush1.msra.mxu0 0.0
        %1331 = vmatprep.subr.mxu0 0.0
        %1332 = vmatpush1.msra.mxu0 0.0
        %1333 = vmatprep.subr.mxu0 0.0
        %1334 = vmatpush1.msra.mxu0 0.0
        %1335 = vmatprep.subr.mxu0 0.0
        %1336 = vmatpush1.msra.mxu0 0.0
        %1337 = vmatprep.subr.mxu0 0.0
        %1338 = vmatpush1.msra.mxu0 0.0
        %1339 = vmatprep.subr.mxu0 0.0
        %1340 = vmatpush1.msra.mxu0 0.0
        %1341 = vmatprep.subr.mxu0 0.0
        %1342 = vmatpush1.msra.mxu0 0.0
        %1343 = vmatprep.subr.mxu0 0.0
        %1344 = vmatpush1.msra.mxu0 0.0
        %1345 = vmatprep.subr.mxu0 0.0
        %1346 = vmatpush1.msra.mxu0 0.0
        %1347 = vmatprep.subr.mxu0 0.0
        %1348 = vmatpush1.msra.mxu0 0.0
        %1349 = vmatprep.mubr.f32.mxu0 0.0
        %1350 = vmatmul.mubr.f32.gmra.mrb[0].mxu0 %v1284
        %v1351 = vpop.f32.mrb[0].mxu0
        %v1352 = vadd.f32 0.0, %v1351
        %v1353 = vpop.f32.mrb[0].mxu0
        %1354 = vdwg.mxu0
        %1355 = vmatprep.subr.mxu0 0.0
        %1356 = vmatpush1.msra.mxu0 %v545
        %1357 = vmatprep.subr.mxu0 0.0
        %1358 = vmatpush1.msra.mxu0 %v546
        %1359 = vmatprep.subr.mxu0 0.0
        %1360 = vmatpush1.msra.mxu0 %v547
        %1361 = vmatprep.subr.mxu0 0.0
        %1362 = vmatpush1.msra.mxu0 %v548
        %1363 = vmatprep.subr.mxu0 0.0
        %1364 = vmatpush1.msra.mxu0 %v549
        %1365 = vmatprep.subr.mxu0 0.0
        %1366 = vmatpush1.msra.mxu0 %v550
        %1367 = vmatprep.subr.mxu0 0.0
        %1368 = vmatpush1.msra.mxu0 %v551
        %1369 = vmatprep.subr.mxu0 0.0
        %1370 = vmatpush1.msra.mxu0 %v552
        %1371 = vmatprep.subr.mxu0 0.0
        %1372 = vmatpush1.msra.mxu0 %v553
        %1373 = vmatprep.subr.mxu0 0.0
        %1374 = vmatpush1.msra.mxu0 %v554
        %1375 = vmatprep.subr.mxu0 0.0
        %1376 = vmatpush1.msra.mxu0 %v555
        %1377 = vmatprep.subr.mxu0 0.0
        %1378 = vmatpush1.msra.mxu0 %v556
        %1379 = vmatprep.subr.mxu0 0.0
        %1380 = vmatpush1.msra.mxu0 %v557
        %1381 = vmatprep.subr.mxu0 0.0
        %1382 = vmatpush1.msra.mxu0 %v558
        %1383 = vmatprep.subr.mxu0 0.0
        %1384 = vmatpush1.msra.mxu0 %v559
        %1385 = vmatprep.subr.mxu0 0.0
        %1386 = vmatpush1.msra.mxu0 %v560
        %1387 = vmatprep.subr.mxu0 0.0
        %1388 = vmatpush1.msra.mxu0 0.0
        %1389 = vmatprep.subr.mxu0 0.0
        %1390 = vmatpush1.msra.mxu0 0.0
        %1391 = vmatprep.subr.mxu0 0.0
        %1392 = vmatpush1.msra.mxu0 0.0
        %1393 = vmatprep.subr.mxu0 0.0
        %1394 = vmatpush1.msra.mxu0 0.0
        %1395 = vmatprep.subr.mxu0 0.0
        %1396 = vmatpush1.msra.mxu0 0.0
        %1397 = vmatprep.subr.mxu0 0.0
        %1398 = vmatpush1.msra.mxu0 0.0
        %1399 = vmatprep.subr.mxu0 0.0
        %1400 = vmatpush1.msra.mxu0 0.0
        %1401 = vmatprep.subr.mxu0 0.0
        %1402 = vmatpush1.msra.mxu0 0.0
        %1403 = vmatprep.subr.mxu0 0.0
        %1404 = vmatpush1.msra.mxu0 0.0
        %1405 = vmatprep.subr.mxu0 0.0
        %1406 = vmatpush1.msra.mxu0 0.0
        %1407 = vmatprep.subr.mxu0 0.0
        %1408 = vmatpush1.msra.mxu0 0.0
        %1409 = vmatprep.subr.mxu0 0.0
        %1410 = vmatpush1.msra.mxu0 0.0
        %1411 = vmatprep.subr.mxu0 0.0
        %1412 = vmatpush1.msra.mxu0 0.0
        %1413 = vmatprep.subr.mxu0 0.0
        %1414 = vmatpush1.msra.mxu0 0.0
        %1415 = vmatprep.subr.mxu0 0.0
        %1416 = vmatpush1.msra.mxu0 0.0
        %1417 = vmatprep.subr.mxu0 0.0
        %1418 = vmatpush1.msra.mxu0 0.0
        %1419 = vmatprep.mubr.f32.mxu0 0.0
        %1420 = vmatmul.mubr.f32.gmra.mrb[0].mxu0 %v1352
        %v1421 = vpop.f32.mrb[0].mxu0
        %v1422 = vadd.f32 1e-05, %v1421
        %v1423 = vpop.f32.mrb[0].mxu0
        %1424 = vdwg.mxu0
        %v1425 = vrsqrt.pop %v1422
        %v1426 = vmul.f32 %v1283, %v1425
        %v1427 = vld [vmem:[%s11] sm:$0x1]
        %v1429 = vlaneseq
        %v1430 = vshrl.u32 %v1429, 7
        %v1431 = vsub.s32 0, %v1430
        %v1432 = vrot.slane %v1427, %v1431
        %v1434 = vmul.f32 %v1426, %v1432
        %v1435 = vld [vmem:[%s12] sm:$0x1]
        %v1437 = vlaneseq
        %v1438 = vshrl.u32 %v1437, 7
        %v1439 = vsub.s32 0, %v1438
        %v1440 = vrot.slane %v1435, %v1439
        %v1442 = vadd.f32 %v1434, %v1440
        %1443 = vst [vmem:[%s528] sm:$0xff] %v1442
        %s1444 = sand.u32 %s319, 1
        %s1445 = scalar_lea.sflag [#allocation4], %s1444
        %s1446 = sand.u32 %s319, 1
        %s1447 = smul.addr %s1446, 8
        %s1448 = scalar_lea.vmem [#allocation13], %s1447
        // Predicated region
        $region97: #{tpu_custom_call.1} parent=71 // pred_check
          %p1449 = pneg %p329
        $region98: #{tpu_custom_call.1} parent=71 // pred_check_branch
          %1451 = sbr.rel (%p1449) target = $region100
        $region99: #{tpu_custom_call.1} parent=71 // pred_region
          %s1453 = ssub.s32 128, 128
          %1454 = vsyncadd %s1445, %s1453
          %s1455 = smul.addr %s33, 128
          %s1456 = scalar_lea.hbm %s13, %s1455
          %s1458 = sshll.u32 %s1448, 4
          %s1459 = int_to_ptr.vmem [resolvable:$true] %s1458
          %1461 = dma.vmem_to_hbm [thread:$0]  %s1459, 128, %s1456, %s1445
        $region100: #{tpu_custom_call.1} parent=71 // pred_fallthru
          _
      $region72: #{tpu_custom_call.1} parent=5 // pred_fallthru
        _
      %p1462 = scmp.le.s32.totalorder 2, %s28
      // Predicated region
      $region101: #{tpu_custom_call.1} parent=5 // pred_check
        %p1463 = pneg %p1462
      $region102: #{tpu_custom_call.1} parent=5 // pred_check_branch
        %1465 = sbr.rel (%p1463) target = $region104
      $region103: #{tpu_custom_call.1} parent=5 // pred_region
        %s1466 = ssub.s32 %s28, 2
        // Predicated region
        $region105: #{tpu_custom_call.1} parent=103 // pred_check
          %p1467 = pneg %p335
        $region106: #{tpu_custom_call.1} parent=103 // pred_check_branch
          %1469 = sbr.rel (%p1467) target = $region108
        $region107: #{tpu_custom_call.1} parent=103 // pred_region
          %s1470 = sand.u32 %s320, 1
          %s1471 = scalar_lea.sflag [#allocation4], %s1470
          %s1472 = sand.u32 %s320, 1
          %s1473 = smul.addr %s1472, 8
          %s1474 = scalar_lea.vmem [#allocation13], %s1473
          %1475 = dma.done %s1471, 128
        $region108: #{tpu_custom_call.1} parent=103 // pred_fallthru
          _
      $region104: #{tpu_custom_call.1} parent=5 // pred_fallthru
        _
    $region6: #{tpu_custom_call.1} parent=1 // loop_footer
      %s32 = sadd.s32 1, %s28
    $region7: #{tpu_custom_call.1} parent=1 // loop_footer_branch
      %27 = sbr.rel target = $region3
    $region8: #{tpu_custom_call.1} parent=1 // loop_exit
      _
    %1476 = vsyncpa [#allocation3], 1
    %s1477 = scalar_lea.sflag [#allocation3], 1
    %1478 = vsyncpa %s1477, 1
    %1479 = vsyncpa [#allocation6], 1
    %1480 = vsyncpa [#allocation9], 1
    %1481 = vsyncpa [#allocation12], 1
    %1482 = vsyncpa [#allocation4], 1
    %s1483 = scalar_lea.sflag [#allocation4], 1
    %1484 = vsyncpa %s1483, 1

// kernel: tpu_custom_call.1
$region0: #{tpu_custom_call.1}
  #allocation0 [shape = 'u32[]', space=smem, size = 0x4, offset = 0x4, fixed_abs, tag = 'smem constant byte address 0x4 - core index']
  #allocation1 [shape = 'u32[144,128]{1,0:T(1,128)}', space=vmem, size = 0x12000, scoped, tag = 'internal scratch']
  %s0 = inlined_call_operand.hbm [shape: f32[16,128], index: 0, kind: input, shape index: {}]
  %s1 = inlined_call_operand.hbm [shape: f32[128,128], index: 1, kind: input, shape index: {}]
  %s2 = inlined_call_operand.hbm [shape: f32[128,128], index: 2, kind: input, shape index: {}]
  %s3 = inlined_call_operand.vmem [shape: f32[1,128], index: 3, kind: input, shape index: {}]
  %s4 = inlined_call_operand.vmem [shape: f32[1,128], index: 4, kind: input, shape index: {}]
  %s5 = inlined_call_operand.hbm [shape: f32[128,128], index: 5, kind: input, shape index: {}]
  %s6 = inlined_call_operand.vmem [shape: f32[1,128], index: 6, kind: input, shape index: {}]
  %s7 = inlined_call_operand.hbm [shape: f32[128,128], index: 7, kind: input, shape index: {}]
  %s8 = inlined_call_operand.vmem [shape: f32[1,128], index: 8, kind: input, shape index: {}]
  %s9 = inlined_call_operand.hbm [shape: f32[128,128], index: 9, kind: input, shape index: {}]
  %s10 = inlined_call_operand.vmem [shape: f32[1,128], index: 10, kind: input, shape index: {}]
  %s11 = inlined_call_operand.vmem [shape: f32[1,128], index: 11, kind: input, shape index: {}]
  %s12 = inlined_call_operand.vmem [shape: f32[1,128], index: 12, kind: input, shape index: {}]
  %s13 = inlined_call_operand.hbm [shape: f32[16,128], index: 13, kind: output, shape index: {}]
  %s14 = sld [smem:[#allocation0]]
  $region109: #{tpu_custom_call.1} parent=0
    _
  %s16 = ssub.s32 1, %s14
  %s17 = scalar_select 0, %s16, %s14
  $region1: #{tpu_custom_call.1} parent=0
    #allocation2 [shape = 'u8[8192]{0}', space=vmem, size = 0x2000, scoped, tag = 'input window, operand 0']
    #allocation3 [shape = 's32[2]{0}', space=sflag, size = 0x8, scoped, tag = 'scoped memory for tpu_custom_call.1']
    #allocation4 [shape = 's32[2]{0}', space=sflag, size = 0x8, scoped, tag = 'scoped memory for tpu_custom_call.1']
    #allocation5 [shape = 'u8[65536]{0}', space=vmem, size = 0x10000, scoped, tag = 'input window, operand 1, single buffered']
    #allocation6 [shape = 's32[1]{0}', space=sflag, size = 0x4, scoped, tag = 'scoped memory for tpu_custom_call.1']
    #allocation7 [shape = 'u8[65536]{0}', space=vmem, size = 0x10000, scoped, tag = 'input window, operand 2, single buffered']
    #allocation8 [shape = 'u8[65536]{0}', space=vmem, size = 0x10000, scoped, tag = 'input window, operand 5, single buffered']
    #allocation9 [shape = 's32[1]{0}', space=sflag, size = 0x4, scoped, tag = 'scoped memory for tpu_custom_call.1']
    #allocation10 [shape = 'u8[65536]{0}', space=vmem, size = 0x10000, scoped, tag = 'input window, operand 7, single buffered']
    #allocation11 [shape = 'u8[65536]{0}', space=vmem, size = 0x10000, scoped, tag = 'input window, operand 9, single buffered']
    #allocation12 [shape = 's32[1]{0}', space=sflag, size = 0x4, scoped, tag = 'scoped memory for tpu_custom_call.1']
    #allocation13 [shape = 'u8[8192]{0}', space=vmem, size = 0x2000, scoped, tag = 'output window, operand 0']
    %18 = vsyncpa [#allocation3], 0
    %s19 = scalar_lea.sflag [#allocation3], 1
    %20 = vsyncpa %s19, 0
    %21 = vsyncpa [#allocation6], 0
    %22 = vsyncpa [#allocation9], 0
    %23 = vsyncpa [#allocation12], 0
    %24 = vsyncpa [#allocation4], 0
    %s25 = scalar_lea.sflag [#allocation4], 1
    %26 = vsyncpa %s25, 0
    loop: start=0, step=1, limit=4
    $region2: #{tpu_custom_call.1} parent=1 // loop_pre_header
      _
    $region3: #{tpu_custom_call.1} parent=1 // loop_header
      %s28 = sphi 0, %s32
      %p29 = scmp.ge.s32.totalorder %s28, 4
      %s38 = sphi 0, %s40
      %s41 = sphi 0, %s38
      %s42 = sphi 0, %s41
      %s58 = sphi 0, %s42
      %s62 = sphi 0, %s62
      %s64 = sphi 0, %s62
      %s65 = sphi 0, %s64
      %s79 = sphi 0, %s65
      %s83 = sphi 0, %s83
      %s85 = sphi 0, %s83
      %s86 = sphi 0, %s85
      %s100 = sphi 0, %s86
      %s104 = sphi 0, %s104
      %s106 = sphi 0, %s104
      %s107 = sphi 0, %s106
      %s121 = sphi 0, %s107
      %s125 = sphi 0, %s125
      %s127 = sphi 0, %s125
      %s128 = sphi 0, %s127
      %s142 = sphi 0, %s128
      %s146 = sphi 0, %s146
      %s148 = sphi 0, %s146
      %s149 = sphi 0, %s148
      %s163 = sphi 0, %s149
      %s167 = sphi 0, %s167
      %s169 = sphi 0, %s167
      %s170 = sphi 0, %s169
      %s184 = sphi 0, %s170
      %s188 = sphi 0, %s188
      %s190 = sphi 0, %s188
      %s191 = sphi 0, %s190
      %s205 = sphi 0, %s191
      %s209 = sphi 0, %s209
      %s211 = sphi 0, %s209
      %s212 = sphi 0, %s211
      %s226 = sphi 0, %s212
      %s230 = sphi 0, %s230
      %s232 = sphi 0, %s230
      %s233 = sphi 0, %s232
      %s247 = sphi 0, %s233
      %s251 = sphi 0, %s251
      %s253 = sphi 0, %s251
      %s254 = sphi 0, %s253
      %s268 = sphi 0, %s254
      %s272 = sphi 0, %s272
      %s274 = sphi 0, %s272
      %s275 = sphi 0, %s274
      %s289 = sphi 0, %s275
      %s293 = sphi 0, %s293
      %s295 = sphi 0, %s293
      %s296 = sphi 0, %s295
      %s310 = sphi 0, %s296
      %s316 = sphi 0, %s318
      %s319 = sphi 0, %s316
      %s320 = sphi 0, %s319
      %s336 = sphi 0, %s320
    $region4: #{tpu_custom_call.1} parent=1 // loop_header_branch
      %31 = sbr.rel (%p29) target = $region8
    $region5: #{tpu_custom_call.1} parent=1 // loop_body
      %s33 = ssub.s32 %s28, 1
      %s34 = ssub.s32 %s28, 2
      %s35 = sadd.s32 %s28, 1
      %s36 = ssub.s32 %s28, %s35
      %p37 = scmp.eq.s32.totalorder %s36, 0
      %s39 = sadd.s32 %s38, 1
      %s40 = scalar_select %p37, %s38, %s39
      %p43 = pneg %p37
      %p44 = scmp.eq.s32.totalorder %s28, 1
      %p45 = por %p43, %p44
      %p46 = scmp.ne.s32.totalorder %s38, %s41
      %p47 = scmp.eq.s32.totalorder %s28, 0
      %p48 = por %p46, %p47
      %p49 = scmp.ne.s32.totalorder %s38, %s41
      %p50 = scmp.eq.s32.totalorder %s33, 1
      %p51 = por %p49, %p50
      %p52 = scmp.ne.s32.totalorder %s41, %s42
      %p53 = scmp.eq.s32.totalorder %s33, 0
      %p54 = por %p52, %p53
      %p55 = scmp.ne.s32.totalorder %s41, %s42
      %p56 = scmp.eq.s32.totalorder %s34, 1
      %p57 = por %p55, %p56
      %p59 = scmp.ne.s32.totalorder %s42, %s58
      %p60 = scmp.eq.s32.totalorder %s34, 0
      %p61 = por %p59, %p60
      %s63 = sadd.s32 %s62, 1
      %p66 = scmp.eq.s32.totalorder %s28, 1
      %p67 = scmp.ne.s32.totalorder %s62, %s64
      %p68 = scmp.eq.s32.totalorder %s28, 0
      %p69 = por %p67, %p68
      %p70 = scmp.ne.s32.totalorder %s62, %s64
      %p71 = scmp.eq.s32.totalorder %s33, 1
      %p72 = por %p70, %p71
      %p73 = scmp.ne.s32.totalorder %s64, %s65
      %p74 = scmp.eq.s32.totalorder %s33, 0
      %p75 = por %p73, %p74
      %p76 = scmp.ne.s32.totalorder %s64, %s65
      %p77 = scmp.eq.s32.totalorder %s34, 1
      %p78 = por %p76, %p77
      %p80 = scmp.ne.s32.totalorder %s65, %s79
      %p81 = scmp.eq.s32.totalorder %s34, 0
      %p82 = por %p80, %p81
      %s84 = sadd.s32 %s83, 1
      %p87 = scmp.eq.s32.totalorder %s28, 1
      %p88 = scmp.ne.s32.totalorder %s83, %s85
      %p89 = scmp.eq.s32.totalorder %s28, 0
      %p90 = por %p88, %p89
      %p91 = scmp.ne.s32.totalorder %s83, %s85
      %p92 = scmp.eq.s32.totalorder %s33, 1
      %p93 = por %p91, %p92
      %p94 = scmp.ne.s32.totalorder %s85, %s86
      %p95 = scmp.eq.s32.totalorder %s33, 0
      %p96 = por %p94, %p95
      %p97 = scmp.ne.s32.totalorder %s85, %s86
      %p98 = scmp.eq.s32.totalorder %s34, 1
      %p99 = por %p97, %p98
      %p101 = scmp.ne.s32.totalorder %s86, %s100
      %p102 = scmp.eq.s32.totalorder %s34, 0
      %p103 = por %p101, %p102
      %s105 = sadd.s32 %s104, 1
      %p108 = scmp.eq.s32.totalorder %s28, 1
      %p109 = scmp.ne.s32.totalorder %s104, %s106
      %p110 = scmp.eq.s32.totalorder %s28, 0
      %p111 = por %p109, %p110
      %p112 = scmp.ne.s32.totalorder %s104, %s106
      %p113 = scmp.eq.s32.totalorder %s33, 1
      %p114 = por %p112, %p113
      %p115 = scmp.ne.s32.totalorder %s106, %s107
      %p116 = scmp.eq.s32.totalorder %s33, 0
      %p117 = por %p115, %p116
      %p118 = scmp.ne.s32.totalorder %s106, %s107
      %p119 = scmp.eq.s32.totalorder %s34, 1
      %p120 = por %p118, %p119
      %p122 = scmp.ne.s32.totalorder %s107, %s121
      %p123 = scmp.eq.s32.totalorder %s34, 0
      %p124 = por %p122, %p123
      %s126 = sadd.s32 %s125, 1
      %p129 = scmp.eq.s32.totalorder %s28, 1
      %p130 = scmp.ne.s32.totalorder %s125, %s127
      %p131 = scmp.eq.s32.totalorder %s28, 0
      %p132 = por %p130, %p131
      %p133 = scmp.ne.s32.totalorder %s125, %s127
      %p134 = scmp.eq.s32.totalorder %s33, 1
      %p135 = por %p133, %p134
      %p136 = scmp.ne.s32.totalorder %s127, %s128
      %p137 = scmp.eq.s32.totalorder %s33, 0
      %p138 = por %p136, %p137
      %p139 = scmp.ne.s32.totalorder %s127, %s128
      %p140 = scmp.eq.s32.totalorder %s34, 1
      %p141 = por %p139, %p140
      %p143 = scmp.ne.s32.totalorder %s128, %s142
      %p144 = scmp.eq.s32.totalorder %s34, 0
      %p145 = por %p143, %p144
      %s147 = sadd.s32 %s146, 1
      %p150 = scmp.eq.s32.totalorder %s28, 1
      %p151 = scmp.ne.s32.totalorder %s146, %s148
      %p152 = scmp.eq.s32.totalorder %s28, 0
      %p153 = por %p151, %p152
      %p154 = scmp.ne.s32.totalorder %s146, %s148
      %p155 = scmp.eq.s32.totalorder %s33, 1
      %p156 = por %p154, %p155
      %p157 = scmp.ne.s32.totalorder %s148, %s149
      %p158 = scmp.eq.s32.totalorder %s33, 0
      %p159 = por %p157, %p158
      %p160 = scmp.ne.s32.totalorder %s148, %s149
      %p161 = scmp.eq.s32.totalorder %s34, 1
      %p162 = por %p160, %p161
      %p164 = scmp.ne.s32.totalorder %s149, %s163
      %p165 = scmp.eq.s32.totalorder %s34, 0
      %p166 = por %p164, %p165
      %s168 = sadd.s32 %s167, 1
      %p171 = scmp.eq.s32.totalorder %s28, 1
      %p172 = scmp.ne.s32.totalorder %s167, %s169
      %p173 = scmp.eq.s32.totalorder %s28, 0
      %p174 = por %p172, %p173
      %p175 = scmp.ne.s32.totalorder %s167, %s169
      %p176 = scmp.eq.s32.totalorder %s33, 1
      %p177 = por %p175, %p176
      %p178 = scmp.ne.s32.totalorder %s169, %s170
      %p179 = scmp.eq.s32.totalorder %s33, 0
      %p180 = por %p178, %p179
      %p181 = scmp.ne.s32.totalorder %s169, %s170
      %p182 = scmp.eq.s32.totalorder %s34, 1
      %p183 = por %p181, %p182
      %p185 = scmp.ne.s32.totalorder %s170, %s184
      %p186 = scmp.eq.s32.totalorder %s34, 0
      %p187 = por %p185, %p186
      %s189 = sadd.s32 %s188, 1
      %p192 = scmp.eq.s32.totalorder %s28, 1
      %p193 = scmp.ne.s32.totalorder %s188, %s190
      %p194 = scmp.eq.s32.totalorder %s28, 0
      %p195 = por %p193, %p194
      %p196 = scmp.ne.s32.totalorder %s188, %s190
      %p197 = scmp.eq.s32.totalorder %s33, 1
      %p198 = por %p196, %p197
      %p199 = scmp.ne.s32.totalorder %s190, %s191
      %p200 = scmp.eq.s32.totalorder %s33, 0
      %p201 = por %p199, %p200
      %p202 = scmp.ne.s32.totalorder %s190, %s191
      %p203 = scmp.eq.s32.totalorder %s34, 1
      %p204 = por %p202, %p203
      %p206 = scmp.ne.s32.totalorder %s191, %s205
      %p207 = scmp.eq.s32.totalorder %s34, 0
      %p208 = por %p206, %p207
      %s210 = sadd.s32 %s209, 1
      %p213 = scmp.eq.s32.totalorder %s28, 1
      %p214 = scmp.ne.s32.totalorder %s209, %s211
      %p215 = scmp.eq.s32.totalorder %s28, 0
      %p216 = por %p214, %p215
      %p217 = scmp.ne.s32.totalorder %s209, %s211
      %p218 = scmp.eq.s32.totalorder %s33, 1
      %p219 = por %p217, %p218
      %p220 = scmp.ne.s32.totalorder %s211, %s212
      %p221 = scmp.eq.s32.totalorder %s33, 0
      %p222 = por %p220, %p221
      %p223 = scmp.ne.s32.totalorder %s211, %s212
      %p224 = scmp.eq.s32.totalorder %s34, 1
      %p225 = por %p223, %p224
      %p227 = scmp.ne.s32.totalorder %s212, %s226
      %p228 = scmp.eq.s32.totalorder %s34, 0
      %p229 = por %p227, %p228
      %s231 = sadd.s32 %s230, 1
      %p234 = scmp.eq.s32.totalorder %s28, 1
      %p235 = scmp.ne.s32.totalorder %s230, %s232
      %p236 = scmp.eq.s32.totalorder %s28, 0
      %p237 = por %p235, %p236
      %p238 = scmp.ne.s32.totalorder %s230, %s232
      %p239 = scmp.eq.s32.totalorder %s33, 1
      %p240 = por %p238, %p239
      %p241 = scmp.ne.s32.totalorder %s232, %s233
      %p242 = scmp.eq.s32.totalorder %s33, 0
      %p243 = por %p241, %p242
      %p244 = scmp.ne.s32.totalorder %s232, %s233
      %p245 = scmp.eq.s32.totalorder %s34, 1
      %p246 = por %p244, %p245
      %p248 = scmp.ne.s32.totalorder %s233, %s247
      %p249 = scmp.eq.s32.totalorder %s34, 0
      %p250 = por %p248, %p249
      %s252 = sadd.s32 %s251, 1
      %p255 = scmp.eq.s32.totalorder %s28, 1
      %p256 = scmp.ne.s32.totalorder %s251, %s253
      %p257 = scmp.eq.s32.totalorder %s28, 0
      %p258 = por %p256, %p257
      %p259 = scmp.ne.s32.totalorder %s251, %s253
      %p260 = scmp.eq.s32.totalorder %s33, 1
      %p261 = por %p259, %p260
      %p262 = scmp.ne.s32.totalorder %s253, %s254
      %p263 = scmp.eq.s32.totalorder %s33, 0
      %p264 = por %p262, %p263
      %p265 = scmp.ne.s32.totalorder %s253, %s254
      %p266 = scmp.eq.s32.totalorder %s34, 1
      %p267 = por %p265, %p266
      %p269 = scmp.ne.s32.totalorder %s254, %s268
      %p270 = scmp.eq.s32.totalorder %s34, 0
      %p271 = por %p269, %p270
      %s273 = sadd.s32 %s272, 1
      %p276 = scmp.eq.s32.totalorder %s28, 1
      %p277 = scmp.ne.s32.totalorder %s272, %s274
      %p278 = scmp.eq.s32.totalorder %s28, 0
      %p279 = por %p277, %p278
      %p280 = scmp.ne.s32.totalorder %s272, %s274
      %p281 = scmp.eq.s32.totalorder %s33, 1
      %p282 = por %p280, %p281
      %p283 = scmp.ne.s32.totalorder %s274, %s275
      %p284 = scmp.eq.s32.totalorder %s33, 0
      %p285 = por %p283, %p284
      %p286 = scmp.ne.s32.totalorder %s274, %s275
      %p287 = scmp.eq.s32.totalorder %s34, 1
      %p288 = por %p286, %p287
      %p290 = scmp.ne.s32.totalorder %s275, %s289
      %p291 = scmp.eq.s32.totalorder %s34, 0
      %p292 = por %p290, %p291
      %s294 = sadd.s32 %s293, 1
      %p297 = scmp.eq.s32.totalorder %s28, 1
      %p298 = scmp.ne.s32.totalorder %s293, %s295
      %p299 = scmp.eq.s32.totalorder %s28, 0
      %p300 = por %p298, %p299
      %p301 = scmp.ne.s32.totalorder %s293, %s295
      %p302 = scmp.eq.s32.totalorder %s33, 1
      %p303 = por %p301, %p302
      %p304 = scmp.ne.s32.totalorder %s295, %s296
      %p305 = scmp.eq.s32.totalorder %s33, 0
      %p306 = por %p304, %p305
      %p307 = scmp.ne.s32.totalorder %s295, %s296
      %p308 = scmp.eq.s32.totalorder %s34, 1
      %p309 = por %p307, %p308
      %p311 = scmp.ne.s32.totalorder %s296, %s310
      %p312 = scmp.eq.s32.totalorder %s34, 0
      %p313 = por %p311, %p312
      %s314 = ssub.s32 %s28, %s35
      %p315 = scmp.eq.s32.totalorder %s314, 0
      %s317 = sadd.s32 %s316, 1
      %s318 = scalar_select %p315, %s316, %s317
      %p321 = pneg %p315
      %p322 = scmp.eq.s32.totalorder %s28, 1
      %p323 = por %p321, %p322
      %p324 = scmp.ne.s32.totalorder %s316, %s319
      %p325 = scmp.eq.s32.totalorder %s28, 0
      %p326 = por %p324, %p325
      %p327 = scmp.ne.s32.totalorder %s316, %s319
      %p328 = scmp.eq.s32.totalorder %s33, 1
      %p329 = por %p327, %p328
      %p330 = scmp.ne.s32.totalorder %s319, %s320
      %p331 = scmp.eq.s32.totalorder %s33, 0
      %p332 = por %p330, %p331
      %p333 = scmp.ne.s32.totalorder %s319, %s320
      %p334 = scmp.eq.s32.totalorder %s34, 1
      %p335 = por %p333, %p334
      %p337 = scmp.ne.s32.totalorder %s320, %s336
      %p338 = scmp.eq.s32.totalorder %s34, 0
      %p339 = por %p337, %p338
      %p340 = scmp.le.s32.totalorder 1, %s28
      %p341 = scmp.lt.s32.totalorder %s28, 3
      %p342 = pnand %p340, %p341
      %p343 = pneg %p342
      // Predicated region
      $region9: #{tpu_custom_call.1} parent=5 // pred_check
        _
      $region10: #{tpu_custom_call.1} parent=5 // pred_check_branch
        %345 = sbr.rel (%p342) target = $region12
      $region11: #{tpu_custom_call.1} parent=5 // pred_region
        %s346 = ssub.s32 %s28, 1
        // Predicated region
        $region13: #{tpu_custom_call.1} parent=11 // pred_check
          %p347 = pneg %p75
        $region14: #{tpu_custom_call.1} parent=11 // pred_check_branch
          %349 = sbr.rel (%p347) target = $region16
        $region15: #{tpu_custom_call.1} parent=11 // pred_region
          %s351 = ssub.s32 2048, 2048
          %352 = vsyncadd [#allocation6], %s351
          %s353 = sshll.u32 [#allocation5], 4
          %s354 = int_to_ptr.vmem [resolvable:$true] %s353
          %359 = dma.hbm_to_vmem [thread:$0]  %s1, 2048, %s354, [#allocation6], 128, 128, 8
        $region16: #{tpu_custom_call.1} parent=11 // pred_fallthru
          _
        // Predicated region
        $region17: #{tpu_custom_call.1} parent=11 // pred_check
          %p360 = pneg %p96
        $region18: #{tpu_custom_call.1} parent=11 // pred_check_branch
          %362 = sbr.rel (%p360) target = $region20
        $region19: #{tpu_custom_call.1} parent=11 // pred_region
          %s364 = ssub.s32 2048, 2048
          %365 = vsyncadd [#allocation6], %s364
          %s366 = sshll.u32 [#allocation7], 4
          %s367 = int_to_ptr.vmem [resolvable:$true] %s366
          %372 = dma.hbm_to_vmem [thread:$0]  %s2, 2048, %s367, [#allocation6], 128, 128, 8
        $region20: #{tpu_custom_call.1} parent=11 // pred_fallthru
          _
        // Predicated region
        $region21: #{tpu_custom_call.1} parent=11 // pred_check
          %p373 = pneg %p117
        $region22: #{tpu_custom_call.1} parent=11 // pred_check_branch
          %375 = sbr.rel (%p373) target = $region24
        $region23: #{tpu_custom_call.1} parent=11 // pred_region
          _
        $region24: #{tpu_custom_call.1} parent=11 // pred_fallthru
          _
        // Predicated region
        $region25: #{tpu_custom_call.1} parent=11 // pred_check
          %p376 = pneg %p138
        $region26: #{tpu_custom_call.1} parent=11 // pred_check_branch
          %378 = sbr.rel (%p376) target = $region28
        $region27: #{tpu_custom_call.1} parent=11 // pred_region
          _
        $region28: #{tpu_custom_call.1} parent=11 // pred_fallthru
          _
        // Predicated region
        $region29: #{tpu_custom_call.1} parent=11 // pred_check
          %p379 = pneg %p159
        $region30: #{tpu_custom_call.1} parent=11 // pred_check_branch
          %381 = sbr.rel (%p379) target = $region32
        $region31: #{tpu_custom_call.1} parent=11 // pred_region
          %s383 = ssub.s32 2048, 2048
          %384 = vsyncadd [#allocation9], %s383
          %s385 = sshll.u32 [#allocation8], 4
          %s386 = int_to_ptr.vmem [resolvable:$true] %s385
          %391 = dma.hbm_to_vmem [thread:$0]  %s5, 2048, %s386, [#allocation9], 128, 128, 8
        $region32: #{tpu_custom_call.1} parent=11 // pred_fallthru
          _
        // Predicated region
        $region33: #{tpu_custom_call.1} parent=11 // pred_check
          %p392 = pneg %p180
        $region34: #{tpu_custom_call.1} parent=11 // pred_check_branch
          %394 = sbr.rel (%p392) target = $region36
        $region35: #{tpu_custom_call.1} parent=11 // pred_region
          _
        $region36: #{tpu_custom_call.1} parent=11 // pred_fallthru
          _
        // Predicated region
        $region37: #{tpu_custom_call.1} parent=11 // pred_check
          %p395 = pneg %p201
        $region38: #{tpu_custom_call.1} parent=11 // pred_check_branch
          %397 = sbr.rel (%p395) target = $region40
        $region39: #{tpu_custom_call.1} parent=11 // pred_region
          %s399 = ssub.s32 2048, 2048
          %400 = vsyncadd [#allocation9], %s399
          %s401 = sshll.u32 [#allocation10], 4
          %s402 = int_to_ptr.vmem [resolvable:$true] %s401
          %407 = dma.hbm_to_vmem [thread:$0]  %s7, 2048, %s402, [#allocation9], 128, 128, 8
        $region40: #{tpu_custom_call.1} parent=11 // pred_fallthru
          _
        // Predicated region
        $region41: #{tpu_custom_call.1} parent=11 // pred_check
          %p408 = pneg %p222
        $region42: #{tpu_custom_call.1} parent=11 // pred_check_branch
          %410 = sbr.rel (%p408) target = $region44
        $region43: #{tpu_custom_call.1} parent=11 // pred_region
          _
        $region44: #{tpu_custom_call.1} parent=11 // pred_fallthru
          _
        // Predicated region
        $region45: #{tpu_custom_call.1} parent=11 // pred_check
          %p411 = pneg %p243
        $region46: #{tpu_custom_call.1} parent=11 // pred_check_branch
          %413 = sbr.rel (%p411) target = $region48
        $region47: #{tpu_custom_call.1} parent=11 // pred_region
          %s415 = ssub.s32 2048, 2048
          %416 = vsyncadd [#allocation12], %s415
          %s417 = sshll.u32 [#allocation11], 4
          %s418 = int_to_ptr.vmem [resolvable:$true] %s417
          %423 = dma.hbm_to_vmem [thread:$0]  %s9, 2048, %s418, [#allocation12], 128, 128, 8
        $region48: #{tpu_custom_call.1} parent=11 // pred_fallthru
          _
        // Predicated region
        $region49: #{tpu_custom_call.1} parent=11 // pred_check
          %p424 = pneg %p264
        $region50: #{tpu_custom_call.1} parent=11 // pred_check_branch
          %426 = sbr.rel (%p424) target = $region52
        $region51: #{tpu_custom_call.1} parent=11 // pred_region
          _
        $region52: #{tpu_custom_call.1} parent=11 // pred_fallthru
          _
        // Predicated region
        $region53: #{tpu_custom_call.1} parent=11 // pred_check
          %p427 = pneg %p285
        $region54: #{tpu_custom_call.1} parent=11 // pred_check_branch
          %429 = sbr.rel (%p427) target = $region56
        $region55: #{tpu_custom_call.1} parent=11 // pred_region
          _
        $region56: #{tpu_custom_call.1} parent=11 // pred_fallthru
          _
        // Predicated region
        $region57: #{tpu_custom_call.1} parent=11 // pred_check
          %p430 = pneg %p306
        $region58: #{tpu_custom_call.1} parent=11 // pred_check_branch
          %432 = sbr.rel (%p430) target = $region60
        $region59: #{tpu_custom_call.1} parent=11 // pred_region
          _
        $region60: #{tpu_custom_call.1} parent=11 // pred_fallthru
          _
      $region12: #{tpu_custom_call.1} parent=5 // pred_fallthru
        _
      %p433 = scmp.lt.s32.totalorder %s28, 2
      // Predicated region
      $region61: #{tpu_custom_call.1} parent=5 // pred_check
        %p434 = pneg %p433
      $region62: #{tpu_custom_call.1} parent=5 // pred_check_branch
        %436 = sbr.rel (%p434) target = $region64
      $region63: #{tpu_custom_call.1} parent=5 // pred_region
        // Predicated region
        $region65: #{tpu_custom_call.1} parent=63 // pred_check
          %p437 = pneg %p48
        $region66: #{tpu_custom_call.1} parent=63 // pred_check_branch
          %439 = sbr.rel (%p437) target = $region68
        $region67: #{tpu_custom_call.1} parent=63 // pred_region
          %s440 = sand.u32 %s38, 1
          %s441 = scalar_lea.sflag [#allocation3], %s440
          %s442 = sand.u32 %s38, 1
          %s443 = smul.addr %s442, 8
          %s444 = scalar_lea.vmem [#allocation2], %s443
          %s446 = ssub.s32 128, 128
          %447 = vsyncadd %s441, %s446
          %s448 = smul.addr %s28, 128
          %s449 = scalar_lea.hbm %s0, %s448
          %s451 = sshll.u32 %s444, 4
          %s452 = int_to_ptr.vmem [resolvable:$true] %s451
          %454 = dma.hbm_to_vmem [thread:$0]  %s449, 128, %s452, %s441
        $region68: #{tpu_custom_call.1} parent=63 // pred_fallthru
          _
      $region64: #{tpu_custom_call.1} parent=5 // pred_fallthru
        _
      %p455 = scmp.le.s32.totalorder 1, %s28
      %p456 = scmp.lt.s32.totalorder %s28, 3
      %p457 = pnand %p455, %p456
      %p458 = pneg %p457
      // Predicated region
      $region69: #{tpu_custom_call.1} parent=5 // pred_check
        _
      $region70: #{tpu_custom_call.1} parent=5 // pred_check_branch
        %460 = sbr.rel (%p457) target = $region72
      $region71: #{tpu_custom_call.1} parent=5 // pred_region
        %s461 = ssub.s32 %s28, 1
        %s462 = sand.u32 %s41, 1
        %s463 = scalar_lea.sflag [#allocation3], %s462
        %s464 = sand.u32 %s41, 1
        %s465 = smul.addr %s464, 8
        %s466 = scalar_lea.vmem [#allocation2], %s465
        // Predicated region
        $region73: #{tpu_custom_call.1} parent=71 // pred_check
          %p467 = pneg %p54
        $region74: #{tpu_custom_call.1} parent=71 // pred_check_branch
          %469 = sbr.rel (%p467) target = $region76
        $region75: #{tpu_custom_call.1} parent=71 // pred_region
          %470 = dma.done %s463, 128
        $region76: #{tpu_custom_call.1} parent=71 // pred_fallthru
          _
        // Predicated region
        $region77: #{tpu_custom_call.1} parent=71 // pred_check
          %p471 = pneg %p75
        $region78: #{tpu_custom_call.1} parent=71 // pred_check_branch
          %473 = sbr.rel (%p471) target = $region80
        $region79: #{tpu_custom_call.1} parent=71 // pred_region
          %474 = dma.done [#allocation6], 2048
        $region80: #{tpu_custom_call.1} parent=71 // pred_fallthru
          _
        // Predicated region
        $region81: #{tpu_custom_call.1} parent=71 // pred_check
          %p475 = pneg %p96
        $region82: #{tpu_custom_call.1} parent=71 // pred_check_branch
          %477 = sbr.rel (%p475) target = $region84
        $region83: #{tpu_custom_call.1} parent=71 // pred_region
          %478 = dma.done [#allocation6], 2048
        $region84: #{tpu_custom_call.1} parent=71 // pred_fallthru
          _
        // Predicated region
        $region85: #{tpu_custom_call.1} parent=71 // pred_check
          %p479 = pneg %p159
        $region86: #{tpu_custom_call.1} parent=71 // pred_check_branch
          %481 = sbr.rel (%p479) target = $region88
        $region87: #{tpu_custom_call.1} parent=71 // pred_region
          %482 = dma.done [#allocation9], 2048
        $region88: #{tpu_custom_call.1} parent=71 // pred_fallthru
          _
        // Predicated region
        $region89: #{tpu_custom_call.1} parent=71 // pred_check
          %p483 = pneg %p201
        $region90: #{tpu_custom_call.1} parent=71 // pred_check_branch
          %485 = sbr.rel (%p483) target = $region92
        $region91: #{tpu_custom_call.1} parent=71 // pred_region
          %486 = dma.done [#allocation9], 2048
        $region92: #{tpu_custom_call.1} parent=71 // pred_fallthru
          _
        // Predicated region
        $region93: #{tpu_custom_call.1} parent=71 // pred_check
          %p487 = pneg %p243
        $region94: #{tpu_custom_call.1} parent=71 // pred_check_branch
          %489 = sbr.rel (%p487) target = $region96
        $region95: #{tpu_custom_call.1} parent=71 // pred_region
          %490 = dma.done [#allocation12], 2048
        $region96: #{tpu_custom_call.1} parent=71 // pred_fallthru
          _
        %s491 = sand.u32 %s41, 1
        %s492 = scalar_lea.sflag [#allocation3], %s491
        %s493 = sand.u32 %s41, 1
        %s494 = smul.addr %s493, 8
        %s495 = scalar_lea.vmem [#allocation2], %s494
        %p496 = pneg %p54
        %p497 = pneg %p51
        %p498 = pneg %p75
        %p499 = pneg %p72
        %p500 = pneg %p96
        %p501 = pneg %p93
        %p502 = pneg %p117
        %p503 = pneg %p114
        %p504 = pneg %p138
        %p505 = pneg %p135
        %p506 = pneg %p159
        %p507 = pneg %p156
        %p508 = pneg %p180
        %p509 = pneg %p177
        %p510 = pneg %p201
        %p511 = pneg %p198
        %p512 = pneg %p222
        %p513 = pneg %p219
        %p514 = pneg %p243
        %p515 = pneg %p240
        %p516 = pneg %p264
        %p517 = pneg %p261
        %p518 = pneg %p285
        %p519 = pneg %p282
        %p520 = pneg %p306
        %p521 = pneg %p303
        %p522 = pneg %p332
        %p523 = pneg %p329
        %s524 = sand.u32 %s319, 1
        %s525 = scalar_lea.sflag [#allocation4], %s524
        %s526 = sand.u32 %s319, 1
        %s527 = smul.addr %s526, 8
        %s528 = scalar_lea.vmem [#allocation13], %s527
        %v529 = vld [vmem:[#allocation5] sm:$0xff]
        %v530 = vld [vmem:[#allocation5 + $0x8] sm:$0xff]
        %v531 = vld [vmem:[#allocation5 + $0x10] sm:$0xff]
        %v532 = vld [vmem:[#allocation5 + $0x18] sm:$0xff]
        %v533 = vld [vmem:[#allocation5 + $0x20] sm:$0xff]
        %v534 = vld [vmem:[#allocation5 + $0x28] sm:$0xff]
        %v535 = vld [vmem:[#allocation5 + $0x30] sm:$0xff]
        %v536 = vld [vmem:[#allocation5 + $0x38] sm:$0xff]
        %v537 = vld [vmem:[#allocation5 + $0x40] sm:$0xff]
        %v538 = vld [vmem:[#allocation5 + $0x48] sm:$0xff]
        %v539 = vld [vmem:[#allocation5 + $0x50] sm:$0xff]
        %v540 = vld [vmem:[#allocation5 + $0x58] sm:$0xff]
        %v541 = vld [vmem:[#allocation5 + $0x60] sm:$0xff]
        %v542 = vld [vmem:[#allocation5 + $0x68] sm:$0xff]
        %v543 = vld [vmem:[#allocation5 + $0x70] sm:$0xff]
        %v544 = vld [vmem:[#allocation5 + $0x78] sm:$0xff]
        %v545 = vld [vmem:[#allocation7] sm:$0xff]
        %v546 = vld [vmem:[#allocation7 + $0x8] sm:$0xff]
        %v547 = vld [vmem:[#allocation7 + $0x10] sm:$0xff]
        %v548 = vld [vmem:[#allocation7 + $0x18] sm:$0xff]
        %v549 = vld [vmem:[#allocation7 + $0x20] sm:$0xff]
        %v550 = vld [vmem:[#allocation7 + $0x28] sm:$0xff]
        %v551 = vld [vmem:[#allocation7 + $0x30] sm:$0xff]
        %v552 = vld [vmem:[#allocation7 + $0x38] sm:$0xff]
        %v553 = vld [vmem:[#allocation7 + $0x40] sm:$0xff]
        %v554 = vld [vmem:[#allocation7 + $0x48] sm:$0xff]
        %v555 = vld [vmem:[#allocation7 + $0x50] sm:$0xff]
        %v556 = vld [vmem:[#allocation7 + $0x58] sm:$0xff]
        %v557 = vld [vmem:[#allocation7 + $0x60] sm:$0xff]
        %v558 = vld [vmem:[#allocation7 + $0x68] sm:$0xff]
        %v559 = vld [vmem:[#allocation7 + $0x70] sm:$0xff]
        %v560 = vld [vmem:[#allocation7 + $0x78] sm:$0xff]
        %v561 = vld [vmem:[%s466] sm:$0xff]
        %562 = vmatprep.subr.mxu0 0.0
        %563 = vmatpush1.msra.mxu0 %v529
        %564 = vmatprep.subr.mxu0 0.0
        %565 = vmatpush1.msra.mxu0 %v530
        %566 = vmatprep.subr.mxu0 0.0
        %567 = vmatpush1.msra.mxu0 %v531
        %568 = vmatprep.subr.mxu0 0.0
        %569 = vmatpush1.msra.mxu0 %v532
        %570 = vmatprep.subr.mxu0 0.0
        %571 = vmatpush1.msra.mxu0 %v533
        %572 = vmatprep.subr.mxu0 0.0
        %573 = vmatpush1.msra.mxu0 %v534
        %574 = vmatprep.subr.mxu0 0.0
        %575 = vmatpush1.msra.mxu0 %v535
        %576 = vmatprep.subr.mxu0 0.0
        %577 = vmatpush1.msra.mxu0 %v536
        %578 = vmatprep.subr.mxu0 0.0
        %579 = vmatpush1.msra.mxu0 %v537
        %580 = vmatprep.subr.mxu0 0.0
        %581 = vmatpush1.msra.mxu0 %v538
        %582 = vmatprep.subr.mxu0 0.0
        %583 = vmatpush1.msra.mxu0 %v539
        %584 = vmatprep.subr.mxu0 0.0
        %585 = vmatpush1.msra.mxu0 %v540
        %586 = vmatprep.subr.mxu0 0.0
        %587 = vmatpush1.msra.mxu0 %v541
        %588 = vmatprep.subr.mxu0 0.0
        %589 = vmatpush1.msra.mxu0 %v542
        %590 = vmatprep.subr.mxu0 0.0
        %591 = vmatpush1.msra.mxu0 %v543
        %592 = vmatprep.subr.mxu0 0.0
        %593 = vmatpush1.msra.mxu0 %v544
        %594 = vmatprep.subr.mxu0 0.0
        %595 = vmatpush1.msra.mxu0 0.0
        %596 = vmatprep.subr.mxu0 0.0
        %597 = vmatpush1.msra.mxu0 0.0
        %598 = vmatprep.subr.mxu0 0.0
        %599 = vmatpush1.msra.mxu0 0.0
        %600 = vmatprep.subr.mxu0 0.0
        %601 = vmatpush1.msra.mxu0 0.0
        %602 = vmatprep.subr.mxu0 0.0
        %603 = vmatpush1.msra.mxu0 0.0
        %604 = vmatprep.subr.mxu0 0.0
        %605 = vmatpush1.msra.mxu0 0.0
        %606 = vmatprep.subr.mxu0 0.0
        %607 = vmatpush1.msra.mxu0 0.0
        %608 = vmatprep.subr.mxu0 0.0
        %609 = vmatpush1.msra.mxu0 0.0
        %610 = vmatprep.subr.mxu0 0.0
        %611 = vmatpush1.msra.mxu0 0.0
        %612 = vmatprep.subr.mxu0 0.0
        %613 = vmatpush1.msra.mxu0 0.0
        %614 = vmatprep.subr.mxu0 0.0
        %615 = vmatpush1.msra.mxu0 0.0
        %616 = vmatprep.subr.mxu0 0.0
        %617 = vmatpush1.msra.mxu0 0.0
        %618 = vmatprep.subr.mxu0 0.0
        %619 = vmatpush1.msra.mxu0 0.0
        %620 = vmatprep.subr.mxu0 0.0
        %621 = vmatpush1.msra.mxu0 0.0
        %622 = vmatprep.subr.mxu0 0.0
        %623 = vmatpush1.msra.mxu0 0.0
        %624 = vmatprep.subr.mxu0 0.0
        %625 = vmatpush1.msra.mxu0 0.0
        %626 = vmatprep.mubr.f32.mxu0 0.0
        %627 = vmatmul.mubr.f32.gmra.mrb[0].mxu0 %v561
        %v628 = vpop.f32.mrb[0].mxu0
        %v629 = vadd.f32 0.0, %v628
        %v630 = vpop.f32.mrb[0].mxu0
        %631 = vdwg.mxu0
        %632 = vmatprep.subr.mxu0 0.0
        %633 = vmatpush1.msra.mxu0 %v545
        %634 = vmatprep.subr.mxu0 0.0
        %635 = vmatpush1.msra.mxu0 %v546
        %636 = vmatprep.subr.mxu0 0.0
        %637 = vmatpush1.msra.mxu0 %v547
        %638 = vmatprep.subr.mxu0 0.0
        %639 = vmatpush1.msra.mxu0 %v548
        %640 = vmatprep.subr.mxu0 0.0
        %641 = vmatpush1.msra.mxu0 %v549
        %642 = vmatprep.subr.mxu0 0.0
        %643 = vmatpush1.msra.mxu0 %v550
        %644 = vmatprep.subr.mxu0 0.0
        %645 = vmatpush1.msra.mxu0 %v551
        %646 = vmatprep.subr.mxu0 0.0
        %647 = vmatpush1.msra.mxu0 %v552
        %648 = vmatprep.subr.mxu0 0.0
        %649 = vmatpush1.msra.mxu0 %v553
        %650 = vmatprep.subr.mxu0 0.0
        %651 = vmatpush1.msra.mxu0 %v554
        %652 = vmatprep.subr.mxu0 0.0
        %653 = vmatpush1.msra.mxu0 %v555
        %654 = vmatprep.subr.mxu0 0.0
        %655 = vmatpush1.msra.mxu0 %v556
        %656 = vmatprep.subr.mxu0 0.0
        %657 = vmatpush1.msra.mxu0 %v557
        %658 = vmatprep.subr.mxu0 0.0
        %659 = vmatpush1.msra.mxu0 %v558
        %660 = vmatprep.subr.mxu0 0.0
        %661 = vmatpush1.msra.mxu0 %v559
        %662 = vmatprep.subr.mxu0 0.0
        %663 = vmatpush1.msra.mxu0 %v560
        %664 = vmatprep.subr.mxu0 0.0
        %665 = vmatpush1.msra.mxu0 0.0
        %666 = vmatprep.subr.mxu0 0.0
        %667 = vmatpush1.msra.mxu0 0.0
        %668 = vmatprep.subr.mxu0 0.0
        %669 = vmatpush1.msra.mxu0 0.0
        %670 = vmatprep.subr.mxu0 0.0
        %671 = vmatpush1.msra.mxu0 0.0
        %672 = vmatprep.subr.mxu0 0.0
        %673 = vmatpush1.msra.mxu0 0.0
        %674 = vmatprep.subr.mxu0 0.0
        %675 = vmatpush1.msra.mxu0 0.0
        %676 = vmatprep.subr.mxu0 0.0
        %677 = vmatpush1.msra.mxu0 0.0
        %678 = vmatprep.subr.mxu0 0.0
        %679 = vmatpush1.msra.mxu0 0.0
        %680 = vmatprep.subr.mxu0 0.0
        %681 = vmatpush1.msra.mxu0 0.0
        %682 = vmatprep.subr.mxu0 0.0
        %683 = vmatpush1.msra.mxu0 0.0
        %684 = vmatprep.subr.mxu0 0.0
        %685 = vmatpush1.msra.mxu0 0.0
        %686 = vmatprep.subr.mxu0 0.0
        %687 = vmatpush1.msra.mxu0 0.0
        %688 = vmatprep.subr.mxu0 0.0
        %689 = vmatpush1.msra.mxu0 0.0
        %690 = vmatprep.subr.mxu0 0.0
        %691 = vmatpush1.msra.mxu0 0.0
        %692 = vmatprep.subr.mxu0 0.0
        %693 = vmatpush1.msra.mxu0 0.0
        %694 = vmatprep.subr.mxu0 0.0
        %695 = vmatpush1.msra.mxu0 0.0
        %696 = vmatprep.mubr.f32.mxu0 0.0
        %697 = vmatmul.mubr.f32.gmra.mrb[0].mxu0 %v629
        %v698 = vpop.f32.mrb[0].mxu0
        %v699 = vadd.f32 0.0, %v698
        %v700 = vpop.f32.mrb[0].mxu0
        %701 = vdwg.mxu0
        %v702 = vsub.f32 %v561, %v699
        %v703 = vmul.f32 %v702, %v702
        %704 = vmatprep.subr.mxu0 0.0
        %705 = vmatpush1.msra.mxu0 %v529
        %706 = vmatprep.subr.mxu0 0.0
        %707 = vmatpush1.msra.mxu0 %v530
        %708 = vmatprep.subr.mxu0 0.0
        %709 = vmatpush1.msra.mxu0 %v531
        %710 = vmatprep.subr.mxu0 0.0
        %711 = vmatpush1.msra.mxu0 %v532
        %712 = vmatprep.subr.mxu0 0.0
        %713 = vmatpush1.msra.mxu0 %v533
        %714 = vmatprep.subr.mxu0 0.0
        %715 = vmatpush1.msra.mxu0 %v534
        %716 = vmatprep.subr.mxu0 0.0
        %717 = vmatpush1.msra.mxu0 %v535
        %718 = vmatprep.subr.mxu0 0.0
        %719 = vmatpush1.msra.mxu0 %v536
        %720 = vmatprep.subr.mxu0 0.0
        %721 = vmatpush1.msra.mxu0 %v537
        %722 = vmatprep.subr.mxu0 0.0
        %723 = vmatpush1.msra.mxu0 %v538
        %724 = vmatprep.subr.mxu0 0.0
        %725 = vmatpush1.msra.mxu0 %v539
        %726 = vmatprep.subr.mxu0 0.0
        %727 = vmatpush1.msra.mxu0 %v540
        %728 = vmatprep.subr.mxu0 0.0
        %729 = vmatpush1.msra.mxu0 %v541
        %730 = vmatprep.subr.mxu0 0.0
        %731 = vmatpush1.msra.mxu0 %v542
        %732 = vmatprep.subr.mxu0 0.0
        %733 = vmatpush1.msra.mxu0 %v543
        %734 = vmatprep.subr.mxu0 0.0
        %735 = vmatpush1.msra.mxu0 %v544
        %736 = vmatprep.subr.mxu0 0.0
        %737 = vmatpush1.msra.mxu0 0.0
        %738 = vmatprep.subr.mxu0 0.0
        %739 = vmatpush1.msra.mxu0 0.0
        %740 = vmatprep.subr.mxu0 0.0
        %741 = vmatpush1.msra.mxu0 0.0
        %742 = vmatprep.subr.mxu0 0.0
        %743 = vmatpush1.msra.mxu0 0.0
        %744 = vmatprep.subr.mxu0 0.0
        %745 = vmatpush1.msra.mxu0 0.0
        %746 = vmatprep.subr.mxu0 0.0
        %747 = vmatpush1.msra.mxu0 0.0
        %748 = vmatprep.subr.mxu0 0.0
        %749 = vmatpush1.msra.mxu0 0.0
        %750 = vmatprep.subr.mxu0 0.0
        %751 = vmatpush1.msra.mxu0 0.0
        %752 = vmatprep.subr.mxu0 0.0
        %753 = vmatpush1.msra.mxu0 0.0
        %754 = vmatprep.subr.mxu0 0.0
        %755 = vmatpush1.msra.mxu0 0.0
        %756 = vmatprep.subr.mxu0 0.0
        %757 = vmatpush1.msra.mxu0 0.0
        %758 = vmatprep.subr.mxu0 0.0
        %759 = vmatpush1.msra.mxu0 0.0
        %760 = vmatprep.subr.mxu0 0.0
        %761 = vmatpush1.msra.mxu0 0.0
        %762 = vmatprep.subr.mxu0 0.0
        %763 = vmatpush1.msra.mxu0 0.0
        %764 = vmatprep.subr.mxu0 0.0
        %765 = vmatpush1.msra.mxu0 0.0
        %766 = vmatprep.subr.mxu0 0.0
        %767 = vmatpush1.msra.mxu0 0.0
        %768 = vmatprep.mubr.f32.mxu0 0.0
        %769 = vmatmul.mubr.f32.gmra.mrb[0].mxu0 %v703
        %v770 = vpop.f32.mrb[0].mxu0
        %v771 = vadd.f32 0.0, %v770
        %v772 = vpop.f32.mrb[0].mxu0
        %773 = vdwg.mxu0
        %774 = vmatprep.subr.mxu0 0.0
        %775 = vmatpush1.msra.mxu0 %v545
        %776 = vmatprep.subr.mxu0 0.0
        %777 = vmatpush1.msra.mxu0 %v546
        %778 = vmatprep.subr.mxu0 0.0
        %779 = vmatpush1.msra.mxu0 %v547
        %780 = vmatprep.subr.mxu0 0.0
        %781 = vmatpush1.msra.mxu0 %v548
        %782 = vmatprep.subr.mxu0 0.0
        %783 = vmatpush1.msra.mxu0 %v549
        %784 = vmatprep.subr.mxu0 0.0
        %785 = vmatpush1.msra.mxu0 %v550
        %786 = vmatprep.subr.mxu0 0.0
        %787 = vmatpush1.msra.mxu0 %v551
        %788 = vmatprep.subr.mxu0 0.0
        %789 = vmatpush1.msra.mxu0 %v552
        %790 = vmatprep.subr.mxu0 0.0
        %791 = vmatpush1.msra.mxu0 %v553
        %792 = vmatprep.subr.mxu0 0.0
        %793 = vmatpush1.msra.mxu0 %v554
        %794 = vmatprep.subr.mxu0 0.0
        %795 = vmatpush1.msra.mxu0 %v555
        %796 = vmatprep.subr.mxu0 0.0
        %797 = vmatpush1.msra.mxu0 %v556
        %798 = vmatprep.subr.mxu0 0.0
        %799 = vmatpush1.msra.mxu0 %v557
        %800 = vmatprep.subr.mxu0 0.0
        %801 = vmatpush1.msra.mxu0 %v558
        %802 = vmatprep.subr.mxu0 0.0
        %803 = vmatpush1.msra.mxu0 %v559
        %804 = vmatprep.subr.mxu0 0.0
        %805 = vmatpush1.msra.mxu0 %v560
        %806 = vmatprep.subr.mxu0 0.0
        %807 = vmatpush1.msra.mxu0 0.0
        %808 = vmatprep.subr.mxu0 0.0
        %809 = vmatpush1.msra.mxu0 0.0
        %810 = vmatprep.subr.mxu0 0.0
        %811 = vmatpush1.msra.mxu0 0.0
        %812 = vmatprep.subr.mxu0 0.0
        %813 = vmatpush1.msra.mxu0 0.0
        %814 = vmatprep.subr.mxu0 0.0
        %815 = vmatpush1.msra.mxu0 0.0
        %816 = vmatprep.subr.mxu0 0.0
        %817 = vmatpush1.msra.mxu0 0.0
        %818 = vmatprep.subr.mxu0 0.0
        %819 = vmatpush1.msra.mxu0 0.0
        %820 = vmatprep.subr.mxu0 0.0
        %821 = vmatpush1.msra.mxu0 0.0
        %822 = vmatprep.subr.mxu0 0.0
        %823 = vmatpush1.msra.mxu0 0.0
        %824 = vmatprep.subr.mxu0 0.0
        %825 = vmatpush1.msra.mxu0 0.0
        %826 = vmatprep.subr.mxu0 0.0
        %827 = vmatpush1.msra.mxu0 0.0
        %828 = vmatprep.subr.mxu0 0.0
        %829 = vmatpush1.msra.mxu0 0.0
        %830 = vmatprep.subr.mxu0 0.0
        %831 = vmatpush1.msra.mxu0 0.0
        %832 = vmatprep.subr.mxu0 0.0
        %833 = vmatpush1.msra.mxu0 0.0
        %834 = vmatprep.subr.mxu0 0.0
        %835 = vmatpush1.msra.mxu0 0.0
        %836 = vmatprep.subr.mxu0 0.0
        %837 = vmatpush1.msra.mxu0 0.0
        %838 = vmatprep.mubr.f32.mxu0 0.0
        %839 = vmatmul.mubr.f32.gmra.mrb[0].mxu0 %v771
        %v840 = vpop.f32.mrb[0].mxu0
        %v841 = vadd.f32 1e-05, %v840
        %v842 = vpop.f32.mrb[0].mxu0
        %843 = vdwg.mxu0
        %v844 = vrsqrt.pop %v841
        %v845 = vmul.f32 %v702, %v844
        %v846 = vld [vmem:[%s3] sm:$0x1]
        %v848 = vlaneseq
        %v849 = vshrl.u32 %v848, 7
        %v850 = vsub.s32 0, %v849
        %v851 = vrot.slane %v846, %v850
        %v853 = vmul.f32 %v845, %v851
        %v854 = vld [vmem:[%s4] sm:$0x1]
        %v856 = vlaneseq
        %v857 = vshrl.u32 %v856, 7
        %v858 = vsub.s32 0, %v857
        %v859 = vrot.slane %v854, %v858
        %v861 = vadd.f32 %v853, %v859
        %v862 = vld [vmem:[#allocation8] sm:$0xff]
        %v863 = vld [vmem:[#allocation8 + $0x8] sm:$0xff]
        %v864 = vld [vmem:[#allocation8 + $0x10] sm:$0xff]
        %v865 = vld [vmem:[#allocation8 + $0x18] sm:$0xff]
        %v866 = vld [vmem:[#allocation8 + $0x20] sm:$0xff]
        %v867 = vld [vmem:[#allocation8 + $0x28] sm:$0xff]
        %v868 = vld [vmem:[#allocation8 + $0x30] sm:$0xff]
        %v869 = vld [vmem:[#allocation8 + $0x38] sm:$0xff]
        %v870 = vld [vmem:[#allocation8 + $0x40] sm:$0xff]
        %v871 = vld [vmem:[#allocation8 + $0x48] sm:$0xff]
        %v872 = vld [vmem:[#allocation8 + $0x50] sm:$0xff]
        %v873 = vld [vmem:[#allocation8 + $0x58] sm:$0xff]
        %v874 = vld [vmem:[#allocation8 + $0x60] sm:$0xff]
        %v875 = vld [vmem:[#allocation8 + $0x68] sm:$0xff]
        %v876 = vld [vmem:[#allocation8 + $0x70] sm:$0xff]
        %v877 = vld [vmem:[#allocation8 + $0x78] sm:$0xff]
        %v878 = vld [vmem:[%s6] sm:$0x1]
        %v880 = vlaneseq
        %v881 = vshrl.u32 %v880, 7
        %v882 = vsub.s32 0, %v881
        %v883 = vrot.slane %v878, %v882
        %885 = vmatprep.subr.mxu0 0.0
        %886 = vmatpush1.msra.mxu0 %v862
        %887 = vmatprep.subr.mxu0 0.0
        %888 = vmatpush1.msra.mxu0 %v863
        %889 = vmatprep.subr.mxu0 0.0
        %890 = vmatpush1.msra.mxu0 %v864
        %891 = vmatprep.subr.mxu0 0.0
        %892 = vmatpush1.msra.mxu0 %v865
        %893 = vmatprep.subr.mxu0 0.0
        %894 = vmatpush1.msra.mxu0 %v866
        %895 = vmatprep.subr.mxu0 0.0
        %896 = vmatpush1.msra.mxu0 %v867
        %897 = vmatprep.subr.mxu0 0.0
        %898 = vmatpush1.msra.mxu0 %v868
        %899 = vmatprep.subr.mxu0 0.0
        %900 = vmatpush1.msra.mxu0 %v869
        %901 = vmatprep.subr.mxu0 0.0
        %902 = vmatpush1.msra.mxu0 %v870
        %903 = vmatprep.subr.mxu0 0.0
        %904 = vmatpush1.msra.mxu0 %v871
        %905 = vmatprep.subr.mxu0 0.0
        %906 = vmatpush1.msra.mxu0 %v872
        %907 = vmatprep.subr.mxu0 0.0
        %908 = vmatpush1.msra.mxu0 %v873
        %909 = vmatprep.subr.mxu0 0.0
        %910 = vmatpush1.msra.mxu0 %v874
        %911 = vmatprep.subr.mxu0 0.0
        %912 = vmatpush1.msra.mxu0 %v875
        %913 = vmatprep.subr.mxu0 0.0
        %914 = vmatpush1.msra.mxu0 %v876
        %915 = vmatprep.subr.mxu0 0.0
        %916 = vmatpush1.msra.mxu0 %v877
        %917 = vmatprep.subr.mxu0 0.0
        %918 = vmatpush1.msra.mxu0 0.0
        %919 = vmatprep.subr.mxu0 0.0
        %920 = vmatpush1.msra.mxu0 0.0
        %921 = vmatprep.subr.mxu0 0.0
        %922 = vmatpush1.msra.mxu0 0.0
        %923 = vmatprep.subr.mxu0 0.0
        %924 = vmatpush1.msra.mxu0 0.0
        %925 = vmatprep.subr.mxu0 0.0
        %926 = vmatpush1.msra.mxu0 0.0
        %927 = vmatprep.subr.mxu0 0.0
        %928 = vmatpush1.msra.mxu0 0.0
        %929 = vmatprep.subr.mxu0 0.0
        %930 = vmatpush1.msra.mxu0 0.0
        %931 = vmatprep.subr.mxu0 0.0
        %932 = vmatpush1.msra.mxu0 0.0
        %933 = vmatprep.subr.mxu0 0.0
        %934 = vmatpush1.msra.mxu0 0.0
        %935 = vmatprep.subr.mxu0 0.0
        %936 = vmatpush1.msra.mxu0 0.0
        %937 = vmatprep.subr.mxu0 0.0
        %938 = vmatpush1.msra.mxu0 0.0
        %939 = vmatprep.subr.mxu0 0.0
        %940 = vmatpush1.msra.mxu0 0.0
        %941 = vmatprep.subr.mxu0 0.0
        %942 = vmatpush1.msra.mxu0 0.0
        %943 = vmatprep.subr.mxu0 0.0
        %944 = vmatpush1.msra.mxu0 0.0
        %945 = vmatprep.subr.mxu0 0.0
        %946 = vmatpush1.msra.mxu0 0.0
        %947 = vmatprep.subr.mxu0 0.0
        %948 = vmatpush1.msra.mxu0 0.0
        %949 = vmatprep.mubr.f32.mxu0 0.0
        %950 = vmatmul.mubr.f32.gmra.mrb[0].mxu0 %v861
        %v951 = vpop.f32.mrb[0].mxu0
        %v952 = vadd.f32 %v883, %v951
        %v953 = vpop.f32.mrb[0].mxu0
        %954 = vdwg.mxu0
        %v955 = vmax.f32 %v952, 0.0
        %v956 = vld [vmem:[#allocation10] sm:$0xff]
        %v957 = vld [vmem:[#allocation10 + $0x8] sm:$0xff]
        %v958 = vld [vmem:[#allocation10 + $0x10] sm:$0xff]
        %v959 = vld [vmem:[#allocation10 + $0x18] sm:$0xff]
        %v960 = vld [vmem:[#allocation10 + $0x20] sm:$0xff]
        %v961 = vld [vmem:[#allocation10 + $0x28] sm:$0xff]
        %v962 = vld [vmem:[#allocation10 + $0x30] sm:$0xff]
        %v963 = vld [vmem:[#allocation10 + $0x38] sm:$0xff]
        %v964 = vld [vmem:[#allocation10 + $0x40] sm:$0xff]
        %v965 = vld [vmem:[#allocation10 + $0x48] sm:$0xff]
        %v966 = vld [vmem:[#allocation10 + $0x50] sm:$0xff]
        %v967 = vld [vmem:[#allocation10 + $0x58] sm:$0xff]
        %v968 = vld [vmem:[#allocation10 + $0x60] sm:$0xff]
        %v969 = vld [vmem:[#allocation10 + $0x68] sm:$0xff]
        %v970 = vld [vmem:[#allocation10 + $0x70] sm:$0xff]
        %v971 = vld [vmem:[#allocation10 + $0x78] sm:$0xff]
        %v972 = vld [vmem:[%s8] sm:$0x1]
        %v974 = vlaneseq
        %v975 = vshrl.u32 %v974, 7
        %v976 = vsub.s32 0, %v975
        %v977 = vrot.slane %v972, %v976
        %979 = vmatprep.subr.mxu0 0.0
        %980 = vmatpush1.msra.mxu0 %v956
        %981 = vmatprep.subr.mxu0 0.0
        %982 = vmatpush1.msra.mxu0 %v957
        %983 = vmatprep.subr.mxu0 0.0
        %984 = vmatpush1.msra.mxu0 %v958
        %985 = vmatprep.subr.mxu0 0.0
        %986 = vmatpush1.msra.mxu0 %v959
        %987 = vmatprep.subr.mxu0 0.0
        %988 = vmatpush1.msra.mxu0 %v960
        %989 = vmatprep.subr.mxu0 0.0
        %990 = vmatpush1.msra.mxu0 %v961
        %991 = vmatprep.subr.mxu0 0.0
        %992 = vmatpush1.msra.mxu0 %v962
        %993 = vmatprep.subr.mxu0 0.0
        %994 = vmatpush1.msra.mxu0 %v963
        %995 = vmatprep.subr.mxu0 0.0
        %996 = vmatpush1.msra.mxu0 %v964
        %997 = vmatprep.subr.mxu0 0.0
        %998 = vmatpush1.msra.mxu0 %v965
        %999 = vmatprep.subr.mxu0 0.0
        %1000 = vmatpush1.msra.mxu0 %v966
        %1001 = vmatprep.subr.mxu0 0.0
        %1002 = vmatpush1.msra.mxu0 %v967
        %1003 = vmatprep.subr.mxu0 0.0
        %1004 = vmatpush1.msra.mxu0 %v968
        %1005 = vmatprep.subr.mxu0 0.0
        %1006 = vmatpush1.msra.mxu0 %v969
        %1007 = vmatprep.subr.mxu0 0.0
        %1008 = vmatpush1.msra.mxu0 %v970
        %1009 = vmatprep.subr.mxu0 0.0
        %1010 = vmatpush1.msra.mxu0 %v971
        %1011 = vmatprep.subr.mxu0 0.0
        %1012 = vmatpush1.msra.mxu0 0.0
        %1013 = vmatprep.subr.mxu0 0.0
        %1014 = vmatpush1.msra.mxu0 0.0
        %1015 = vmatprep.subr.mxu0 0.0
        %1016 = vmatpush1.msra.mxu0 0.0
        %1017 = vmatprep.subr.mxu0 0.0
        %1018 = vmatpush1.msra.mxu0 0.0
        %1019 = vmatprep.subr.mxu0 0.0
        %1020 = vmatpush1.msra.mxu0 0.0
        %1021 = vmatprep.subr.mxu0 0.0
        %1022 = vmatpush1.msra.mxu0 0.0
        %1023 = vmatprep.subr.mxu0 0.0
        %1024 = vmatpush1.msra.mxu0 0.0
        %1025 = vmatprep.subr.mxu0 0.0
        %1026 = vmatpush1.msra.mxu0 0.0
        %1027 = vmatprep.subr.mxu0 0.0
        %1028 = vmatpush1.msra.mxu0 0.0
        %1029 = vmatprep.subr.mxu0 0.0
        %1030 = vmatpush1.msra.mxu0 0.0
        %1031 = vmatprep.subr.mxu0 0.0
        %1032 = vmatpush1.msra.mxu0 0.0
        %1033 = vmatprep.subr.mxu0 0.0
        %1034 = vmatpush1.msra.mxu0 0.0
        %1035 = vmatprep.subr.mxu0 0.0
        %1036 = vmatpush1.msra.mxu0 0.0
        %1037 = vmatprep.subr.mxu0 0.0
        %1038 = vmatpush1.msra.mxu0 0.0
        %1039 = vmatprep.subr.mxu0 0.0
        %1040 = vmatpush1.msra.mxu0 0.0
        %1041 = vmatprep.subr.mxu0 0.0
        %1042 = vmatpush1.msra.mxu0 0.0
        %1043 = vmatprep.mubr.f32.mxu0 0.0
        %1044 = vmatmul.mubr.f32.gmra.mrb[0].mxu0 %v955
        %v1045 = vpop.f32.mrb[0].mxu0
        %v1046 = vadd.f32 %v977, %v1045
        %v1047 = vpop.f32.mrb[0].mxu0
        %1048 = vdwg.mxu0
        %v1049 = vmax.f32 %v1046, 0.0
        %v1050 = vld [vmem:[#allocation11] sm:$0xff]
        %v1051 = vld [vmem:[#allocation11 + $0x8] sm:$0xff]
        %v1052 = vld [vmem:[#allocation11 + $0x10] sm:$0xff]
        %v1053 = vld [vmem:[#allocation11 + $0x18] sm:$0xff]
        %v1054 = vld [vmem:[#allocation11 + $0x20] sm:$0xff]
        %v1055 = vld [vmem:[#allocation11 + $0x28] sm:$0xff]
        %v1056 = vld [vmem:[#allocation11 + $0x30] sm:$0xff]
        %v1057 = vld [vmem:[#allocation11 + $0x38] sm:$0xff]
        %v1058 = vld [vmem:[#allocation11 + $0x40] sm:$0xff]
        %v1059 = vld [vmem:[#allocation11 + $0x48] sm:$0xff]
        %v1060 = vld [vmem:[#allocation11 + $0x50] sm:$0xff]
        %v1061 = vld [vmem:[#allocation11 + $0x58] sm:$0xff]
        %v1062 = vld [vmem:[#allocation11 + $0x60] sm:$0xff]
        %v1063 = vld [vmem:[#allocation11 + $0x68] sm:$0xff]
        %v1064 = vld [vmem:[#allocation11 + $0x70] sm:$0xff]
        %v1065 = vld [vmem:[#allocation11 + $0x78] sm:$0xff]
        %v1066 = vld [vmem:[%s10] sm:$0x1]
        %v1068 = vlaneseq
        %v1069 = vshrl.u32 %v1068, 7
        %v1070 = vsub.s32 0, %v1069
        %v1071 = vrot.slane %v1066, %v1070
        %1073 = vmatprep.subr.mxu0 0.0
        %1074 = vmatpush1.msra.mxu0 %v1050
        %1075 = vmatprep.subr.mxu0 0.0
        %1076 = vmatpush1.msra.mxu0 %v1051
        %1077 = vmatprep.subr.mxu0 0.0
        %1078 = vmatpush1.msra.mxu0 %v1052
        %1079 = vmatprep.subr.mxu0 0.0
        %1080 = vmatpush1.msra.mxu0 %v1053
        %1081 = vmatprep.subr.mxu0 0.0
        %1082 = vmatpush1.msra.mxu0 %v1054
        %1083 = vmatprep.subr.mxu0 0.0
        %1084 = vmatpush1.msra.mxu0 %v1055
        %1085 = vmatprep.subr.mxu0 0.0
        %1086 = vmatpush1.msra.mxu0 %v1056
        %1087 = vmatprep.subr.mxu0 0.0
        %1088 = vmatpush1.msra.mxu0 %v1057
        %1089 = vmatprep.subr.mxu0 0.0
        %1090 = vmatpush1.msra.mxu0 %v1058
        %1091 = vmatprep.subr.mxu0 0.0
        %1092 = vmatpush1.msra.mxu0 %v1059
        %1093 = vmatprep.subr.mxu0 0.0
        %1094 = vmatpush1.msra.mxu0 %v1060
        %1095 = vmatprep.subr.mxu0 0.0
        %1096 = vmatpush1.msra.mxu0 %v1061
        %1097 = vmatprep.subr.mxu0 0.0
        %1098 = vmatpush1.msra.mxu0 %v1062
        %1099 = vmatprep.subr.mxu0 0.0
        %1100 = vmatpush1.msra.mxu0 %v1063
        %1101 = vmatprep.subr.mxu0 0.0
        %1102 = vmatpush1.msra.mxu0 %v1064
        %1103 = vmatprep.subr.mxu0 0.0
        %1104 = vmatpush1.msra.mxu0 %v1065
        %1105 = vmatprep.subr.mxu0 0.0
        %1106 = vmatpush1.msra.mxu0 0.0
        %1107 = vmatprep.subr.mxu0 0.0
        %1108 = vmatpush1.msra.mxu0 0.0
        %1109 = vmatprep.subr.mxu0 0.0
        %1110 = vmatpush1.msra.mxu0 0.0
        %1111 = vmatprep.subr.mxu0 0.0
        %1112 = vmatpush1.msra.mxu0 0.0
        %1113 = vmatprep.subr.mxu0 0.0
        %1114 = vmatpush1.msra.mxu0 0.0
        %1115 = vmatprep.subr.mxu0 0.0
        %1116 = vmatpush1.msra.mxu0 0.0
        %1117 = vmatprep.subr.mxu0 0.0
        %1118 = vmatpush1.msra.mxu0 0.0
        %1119 = vmatprep.subr.mxu0 0.0
        %1120 = vmatpush1.msra.mxu0 0.0
        %1121 = vmatprep.subr.mxu0 0.0
        %1122 = vmatpush1.msra.mxu0 0.0
        %1123 = vmatprep.subr.mxu0 0.0
        %1124 = vmatpush1.msra.mxu0 0.0
        %1125 = vmatprep.subr.mxu0 0.0
        %1126 = vmatpush1.msra.mxu0 0.0
        %1127 = vmatprep.subr.mxu0 0.0
        %1128 = vmatpush1.msra.mxu0 0.0
        %1129 = vmatprep.subr.mxu0 0.0
        %1130 = vmatpush1.msra.mxu0 0.0
        %1131 = vmatprep.subr.mxu0 0.0
        %1132 = vmatpush1.msra.mxu0 0.0
        %1133 = vmatprep.subr.mxu0 0.0
        %1134 = vmatpush1.msra.mxu0 0.0
        %1135 = vmatprep.subr.mxu0 0.0
        %1136 = vmatpush1.msra.mxu0 0.0
        %1137 = vmatprep.mubr.f32.mxu0 0.0
        %1138 = vmatmul.mubr.f32.gmra.mrb[0].mxu0 %v1049
        %v1139 = vpop.f32.mrb[0].mxu0
        %v1140 = vadd.f32 %v1071, %v1139
        %v1141 = vpop.f32.mrb[0].mxu0
        %1142 = vdwg.mxu0
        %1143 = vmatprep.subr.mxu0 0.0
        %1144 = vmatpush1.msra.mxu0 %v529
        %1145 = vmatprep.subr.mxu0 0.0
        %1146 = vmatpush1.msra.mxu0 %v530
        %1147 = vmatprep.subr.mxu0 0.0
        %1148 = vmatpush1.msra.mxu0 %v531
        %1149 = vmatprep.subr.mxu0 0.0
        %1150 = vmatpush1.msra.mxu0 %v532
        %1151 = vmatprep.subr.mxu0 0.0
        %1152 = vmatpush1.msra.mxu0 %v533
        %1153 = vmatprep.subr.mxu0 0.0
        %1154 = vmatpush1.msra.mxu0 %v534
        %1155 = vmatprep.subr.mxu0 0.0
        %1156 = vmatpush1.msra.mxu0 %v535
        %1157 = vmatprep.subr.mxu0 0.0
        %1158 = vmatpush1.msra.mxu0 %v536
        %1159 = vmatprep.subr.mxu0 0.0
        %1160 = vmatpush1.msra.mxu0 %v537
        %1161 = vmatprep.subr.mxu0 0.0
        %1162 = vmatpush1.msra.mxu0 %v538
        %1163 = vmatprep.subr.mxu0 0.0
        %1164 = vmatpush1.msra.mxu0 %v539
        %1165 = vmatprep.subr.mxu0 0.0
        %1166 = vmatpush1.msra.mxu0 %v540
        %1167 = vmatprep.subr.mxu0 0.0
        %1168 = vmatpush1.msra.mxu0 %v541
        %1169 = vmatprep.subr.mxu0 0.0
        %1170 = vmatpush1.msra.mxu0 %v542
        %1171 = vmatprep.subr.mxu0 0.0
        %1172 = vmatpush1.msra.mxu0 %v543
        %1173 = vmatprep.subr.mxu0 0.0
        %1174 = vmatpush1.msra.mxu0 %v544
        %1175 = vmatprep.subr.mxu0 0.0
        %1176 = vmatpush1.msra.mxu0 0.0
        %1177 = vmatprep.subr.mxu0 0.0
        %1178 = vmatpush1.msra.mxu0 0.0
        %1179 = vmatprep.subr.mxu0 0.0
        %1180 = vmatpush1.msra.mxu0 0.0
        %1181 = vmatprep.subr.mxu0 0.0
        %1182 = vmatpush1.msra.mxu0 0.0
        %1183 = vmatprep.subr.mxu0 0.0
        %1184 = vmatpush1.msra.mxu0 0.0
        %1185 = vmatprep.subr.mxu0 0.0
        %1186 = vmatpush1.msra.mxu0 0.0
        %1187 = vmatprep.subr.mxu0 0.0
        %1188 = vmatpush1.msra.mxu0 0.0
        %1189 = vmatprep.subr.mxu0 0.0
        %1190 = vmatpush1.msra.mxu0 0.0
        %1191 = vmatprep.subr.mxu0 0.0
        %1192 = vmatpush1.msra.mxu0 0.0
        %1193 = vmatprep.subr.mxu0 0.0
        %1194 = vmatpush1.msra.mxu0 0.0
        %1195 = vmatprep.subr.mxu0 0.0
        %1196 = vmatpush1.msra.mxu0 0.0
        %1197 = vmatprep.subr.mxu0 0.0
        %1198 = vmatpush1.msra.mxu0 0.0
        %1199 = vmatprep.subr.mxu0 0.0
        %1200 = vmatpush1.msra.mxu0 0.0
        %1201 = vmatprep.subr.mxu0 0.0
        %1202 = vmatpush1.msra.mxu0 0.0
        %1203 = vmatprep.subr.mxu0 0.0
        %1204 = vmatpush1.msra.mxu0 0.0
        %1205 = vmatprep.subr.mxu0 0.0
        %1206 = vmatpush1.msra.mxu0 0.0
        %1207 = vmatprep.mubr.f32.mxu0 0.0
        %1208 = vmatmul.mubr.f32.gmra.mrb[0].mxu0 %v1140
        %v1209 = vpop.f32.mrb[0].mxu0
        %v1210 = vadd.f32 0.0, %v1209
        %v1211 = vpop.f32.mrb[0].mxu0
        %1212 = vdwg.mxu0
        %1213 = vmatprep.subr.mxu0 0.0
        %1214 = vmatpush1.msra.mxu0 %v545
        %1215 = vmatprep.subr.mxu0 0.0
        %1216 = vmatpush1.msra.mxu0 %v546
        %1217 = vmatprep.subr.mxu0 0.0
        %1218 = vmatpush1.msra.mxu0 %v547
        %1219 = vmatprep.subr.mxu0 0.0
        %1220 = vmatpush1.msra.mxu0 %v548
        %1221 = vmatprep.subr.mxu0 0.0
        %1222 = vmatpush1.msra.mxu0 %v549
        %1223 = vmatprep.subr.mxu0 0.0
        %1224 = vmatpush1.msra.mxu0 %v550
        %1225 = vmatprep.subr.mxu0 0.0
        %1226 = vmatpush1.msra.mxu0 %v551
        %1227 = vmatprep.subr.mxu0 0.0
        %1228 = vmatpush1.msra.mxu0 %v552
        %1229 = vmatprep.subr.mxu0 0.0
        %1230 = vmatpush1.msra.mxu0 %v553
        %1231 = vmatprep.subr.mxu0 0.0
        %1232 = vmatpush1.msra.mxu0 %v554
        %1233 = vmatprep.subr.mxu0 0.0
        %1234 = vmatpush1.msra.mxu0 %v555
        %1235 = vmatprep.subr.mxu0 0.0
        %1236 = vmatpush1.msra.mxu0 %v556
        %1237 = vmatprep.subr.mxu0 0.0
        %1238 = vmatpush1.msra.mxu0 %v557
        %1239 = vmatprep.subr.mxu0 0.0
        %1240 = vmatpush1.msra.mxu0 %v558
        %1241 = vmatprep.subr.mxu0 0.0
        %1242 = vmatpush1.msra.mxu0 %v559
        %1243 = vmatprep.subr.mxu0 0.0
        %1244 = vmatpush1.msra.mxu0 %v560
        %1245 = vmatprep.subr.mxu0 0.0
        %1246 = vmatpush1.msra.mxu0 0.0
        %1247 = vmatprep.subr.mxu0 0.0
        %1248 = vmatpush1.msra.mxu0 0.0
        %1249 = vmatprep.subr.mxu0 0.0
        %1250 = vmatpush1.msra.mxu0 0.0
        %1251 = vmatprep.subr.mxu0 0.0
        %1252 = vmatpush1.msra.mxu0 0.0
        %1253 = vmatprep.subr.mxu0 0.0
        %1254 = vmatpush1.msra.mxu0 0.0
        %1255 = vmatprep.subr.mxu0 0.0
        %1256 = vmatpush1.msra.mxu0 0.0
        %1257 = vmatprep.subr.mxu0 0.0
        %1258 = vmatpush1.msra.mxu0 0.0
        %1259 = vmatprep.subr.mxu0 0.0
        %1260 = vmatpush1.msra.mxu0 0.0
        %1261 = vmatprep.subr.mxu0 0.0
        %1262 = vmatpush1.msra.mxu0 0.0
        %1263 = vmatprep.subr.mxu0 0.0
        %1264 = vmatpush1.msra.mxu0 0.0
        %1265 = vmatprep.subr.mxu0 0.0
        %1266 = vmatpush1.msra.mxu0 0.0
        %1267 = vmatprep.subr.mxu0 0.0
        %1268 = vmatpush1.msra.mxu0 0.0
        %1269 = vmatprep.subr.mxu0 0.0
        %1270 = vmatpush1.msra.mxu0 0.0
        %1271 = vmatprep.subr.mxu0 0.0
        %1272 = vmatpush1.msra.mxu0 0.0
        %1273 = vmatprep.subr.mxu0 0.0
        %1274 = vmatpush1.msra.mxu0 0.0
        %1275 = vmatprep.subr.mxu0 0.0
        %1276 = vmatpush1.msra.mxu0 0.0
        %1277 = vmatprep.mubr.f32.mxu0 0.0
        %1278 = vmatmul.mubr.f32.gmra.mrb[0].mxu0 %v1210
        %v1279 = vpop.f32.mrb[0].mxu0
        %v1280 = vadd.f32 0.0, %v1279
        %v1281 = vpop.f32.mrb[0].mxu0
        %1282 = vdwg.mxu0
        %v1283 = vsub.f32 %v1140, %v1280
        %v1284 = vmul.f32 %v1283, %v1283
        %1285 = vmatprep.subr.mxu0 0.0
        %1286 = vmatpush1.msra.mxu0 %v529
        %1287 = vmatprep.subr.mxu0 0.0
        %1288 = vmatpush1.msra.mxu0 %v530
        %1289 = vmatprep.subr.mxu0 0.0
        %1290 = vmatpush1.msra.mxu0 %v531
        %1291 = vmatprep.subr.mxu0 0.0
        %1292 = vmatpush1.msra.mxu0 %v532
        %1293 = vmatprep.subr.mxu0 0.0
        %1294 = vmatpush1.msra.mxu0 %v533
        %1295 = vmatprep.subr.mxu0 0.0
        %1296 = vmatpush1.msra.mxu0 %v534
        %1297 = vmatprep.subr.mxu0 0.0
        %1298 = vmatpush1.msra.mxu0 %v535
        %1299 = vmatprep.subr.mxu0 0.0
        %1300 = vmatpush1.msra.mxu0 %v536
        %1301 = vmatprep.subr.mxu0 0.0
        %1302 = vmatpush1.msra.mxu0 %v537
        %1303 = vmatprep.subr.mxu0 0.0
        %1304 = vmatpush1.msra.mxu0 %v538
        %1305 = vmatprep.subr.mxu0 0.0
        %1306 = vmatpush1.msra.mxu0 %v539
        %1307 = vmatprep.subr.mxu0 0.0
        %1308 = vmatpush1.msra.mxu0 %v540
        %1309 = vmatprep.subr.mxu0 0.0
        %1310 = vmatpush1.msra.mxu0 %v541
        %1311 = vmatprep.subr.mxu0 0.0
        %1312 = vmatpush1.msra.mxu0 %v542
        %1313 = vmatprep.subr.mxu0 0.0
        %1314 = vmatpush1.msra.mxu0 %v543
        %1315 = vmatprep.subr.mxu0 0.0
        %1316 = vmatpush1.msra.mxu0 %v544
        %1317 = vmatprep.subr.mxu0 0.0
        %1318 = vmatpush1.msra.mxu0 0.0
        %1319 = vmatprep.subr.mxu0 0.0
        %1320 = vmatpush1.msra.mxu0 0.0
        %1321 = vmatprep.subr.mxu0 0.0
        %1322 = vmatpush1.msra.mxu0 0.0
        %1323 = vmatprep.subr.mxu0 0.0
        %1324 = vmatpush1.msra.mxu0 0.0
        %1325 = vmatprep.subr.mxu0 0.0
        %1326 = vmatpush1.msra.mxu0 0.0
        %1327 = vmatprep.subr.mxu0 0.0
        %1328 = vmatpush1.msra.mxu0 0.0
        %1329 = vmatprep.subr.mxu0 0.0
        %1330 = vmatpush1.msra.mxu0 0.0
        %1331 = vmatprep.subr.mxu0 0.0
        %1332 = vmatpush1.msra.mxu0 0.0
        %1333 = vmatprep.subr.mxu0 0.0
        %1334 = vmatpush1.msra.mxu0 0.0
        %1335 = vmatprep.subr.mxu0 0.0
        %1336 = vmatpush1.msra.mxu0 0.0
        %1337 = vmatprep.subr.mxu0 0.0
        %1338 = vmatpush1.msra.mxu0 0.0
        %1339 = vmatprep.subr.mxu0 0.0
        %1340 = vmatpush1.msra.mxu0 0.0
        %1341 = vmatprep.subr.mxu0 0.0
        %1342 = vmatpush1.msra.mxu0 0.0
        %1343 = vmatprep.subr.mxu0 0.0
        %1344 = vmatpush1.msra.mxu0 0.0
        %1345 = vmatprep.subr.mxu0 0.0
        %1346 = vmatpush1.msra.mxu0 0.0
        %1347 = vmatprep.subr.mxu0 0.0
        %1348 = vmatpush1.msra.mxu0 0.0
        %1349 = vmatprep.mubr.f32.mxu0 0.0
        %1350 = vmatmul.mubr.f32.gmra.mrb[0].mxu0 %v1284
        %v1351 = vpop.f32.mrb[0].mxu0
        %v1352 = vadd.f32 0.0, %v1351
        %v1353 = vpop.f32.mrb[0].mxu0
        %1354 = vdwg.mxu0
        %1355 = vmatprep.subr.mxu0 0.0
        %1356 = vmatpush1.msra.mxu0 %v545
        %1357 = vmatprep.subr.mxu0 0.0
        %1358 = vmatpush1.msra.mxu0 %v546
        %1359 = vmatprep.subr.mxu0 0.0
        %1360 = vmatpush1.msra.mxu0 %v547
        %1361 = vmatprep.subr.mxu0 0.0
        %1362 = vmatpush1.msra.mxu0 %v548
        %1363 = vmatprep.subr.mxu0 0.0
        %1364 = vmatpush1.msra.mxu0 %v549
        %1365 = vmatprep.subr.mxu0 0.0
        %1366 = vmatpush1.msra.mxu0 %v550
        %1367 = vmatprep.subr.mxu0 0.0
        %1368 = vmatpush1.msra.mxu0 %v551
        %1369 = vmatprep.subr.mxu0 0.0
        %1370 = vmatpush1.msra.mxu0 %v552
        %1371 = vmatprep.subr.mxu0 0.0
        %1372 = vmatpush1.msra.mxu0 %v553
        %1373 = vmatprep.subr.mxu0 0.0
        %1374 = vmatpush1.msra.mxu0 %v554
        %1375 = vmatprep.subr.mxu0 0.0
        %1376 = vmatpush1.msra.mxu0 %v555
        %1377 = vmatprep.subr.mxu0 0.0
        %1378 = vmatpush1.msra.mxu0 %v556
        %1379 = vmatprep.subr.mxu0 0.0
        %1380 = vmatpush1.msra.mxu0 %v557
        %1381 = vmatprep.subr.mxu0 0.0
        %1382 = vmatpush1.msra.mxu0 %v558
        %1383 = vmatprep.subr.mxu0 0.0
        %1384 = vmatpush1.msra.mxu0 %v559
        %1385 = vmatprep.subr.mxu0 0.0
        %1386 = vmatpush1.msra.mxu0 %v560
        %1387 = vmatprep.subr.mxu0 0.0
        %1388 = vmatpush1.msra.mxu0 0.0
        %1389 = vmatprep.subr.mxu0 0.0
        %1390 = vmatpush1.msra.mxu0 0.0
        %1391 = vmatprep.subr.mxu0 0.0
        %1392 = vmatpush1.msra.mxu0 0.0
        %1393 = vmatprep.subr.mxu0 0.0
        %1394 = vmatpush1.msra.mxu0 0.0
        %1395 = vmatprep.subr.mxu0 0.0
        %1396 = vmatpush1.msra.mxu0 0.0
        %1397 = vmatprep.subr.mxu0 0.0
        %1398 = vmatpush1.msra.mxu0 0.0
        %1399 = vmatprep.subr.mxu0 0.0
        %1400 = vmatpush1.msra.mxu0 0.0
        %1401 = vmatprep.subr.mxu0 0.0
        %1402 = vmatpush1.msra.mxu0 0.0
        %1403 = vmatprep.subr.mxu0 0.0
        %1404 = vmatpush1.msra.mxu0 0.0
        %1405 = vmatprep.subr.mxu0 0.0
        %1406 = vmatpush1.msra.mxu0 0.0
        %1407 = vmatprep.subr.mxu0 0.0
        %1408 = vmatpush1.msra.mxu0 0.0
        %1409 = vmatprep.subr.mxu0 0.0
        %1410 = vmatpush1.msra.mxu0 0.0
        %1411 = vmatprep.subr.mxu0 0.0
        %1412 = vmatpush1.msra.mxu0 0.0
        %1413 = vmatprep.subr.mxu0 0.0
        %1414 = vmatpush1.msra.mxu0 0.0
        %1415 = vmatprep.subr.mxu0 0.0
        %1416 = vmatpush1.msra.mxu0 0.0
        %1417 = vmatprep.subr.mxu0 0.0
        %1418 = vmatpush1.msra.mxu0 0.0
        %1419 = vmatprep.mubr.f32.mxu0 0.0
        %1420 = vmatmul.mubr.f32.gmra.mrb[0].mxu0 %v1352
        %v1421 = vpop.f32.mrb[0].mxu0
        %v1422 = vadd.f32 1e-05, %v1421
        %v1423 = vpop.f32.mrb[0].mxu0
        %1424 = vdwg.mxu0
        %v1425 = vrsqrt.pop %v1422
        %v1426 = vmul.f32 %v1283, %v1425
        %v1427 = vld [vmem:[%s11] sm:$0x1]
        %v1429 = vlaneseq
        %v1430 = vshrl.u32 %v1429, 7
        %v1431 = vsub.s32 0, %v1430
        %v1432 = vrot.slane %v1427, %v1431
        %v1434 = vmul.f32 %v1426, %v1432
        %v1435 = vld [vmem:[%s12] sm:$0x1]
        %v1437 = vlaneseq
        %v1438 = vshrl.u32 %v1437, 7
        %v1439 = vsub.s32 0, %v1438
        %v1440 = vrot.slane %v1435, %v1439
        %v1442 = vadd.f32 %v1434, %v1440
        %1443 = vst [vmem:[%s528] sm:$0xff] %v1442
        %s1444 = sand.u32 %s319, 1
        %s1445 = scalar_lea.sflag [#allocation4], %s1444
        %s1446 = sand.u32 %s319, 1
        %s1447 = smul.addr %s1446, 8
        %s1448 = scalar_lea.vmem [#allocation13], %s1447
        // Predicated region
        $region97: #{tpu_custom_call.1} parent=71 // pred_check
          %p1449 = pneg %p329
        $region98: #{tpu_custom_call.1} parent=71 // pred_check_branch
          %1451 = sbr.rel (%p1449) target = $region100
        $region99: #{tpu_custom_call.1} parent=71 // pred_region
          %s1453 = ssub.s32 128, 128
          %1454 = vsyncadd %s1445, %s1453
          %s1455 = smul.addr %s33, 128
          %s1456 = scalar_lea.hbm %s13, %s1455
          %s1458 = sshll.u32 %s1448, 4
          %s1459 = int_to_ptr.vmem [resolvable:$true] %s1458
          %1461 = dma.vmem_to_hbm [thread:$0]  %s1459, 128, %s1456, %s1445
        $region100: #{tpu_custom_call.1} parent=71 // pred_fallthru
          _
      $region72: #{tpu_custom_call.1} parent=5 // pred_fallthru
        _
      %p1462 = scmp.le.s32.totalorder 2, %s28
      // Predicated region
      $region101: #{tpu_custom_call.1} parent=5 // pred_check
        %p1463 = pneg %p1462
      $region102: #{tpu_custom_call.1} parent=5 // pred_check_branch
        %1465 = sbr.rel (%p1463) target = $region104
      $region103: #{tpu_custom_call.1} parent=5 // pred_region
        %s1466 = ssub.s32 %s28, 2
        // Predicated region
        $region105: #{tpu_custom_call.1} parent=103 // pred_check
          %p1467 = pneg %p335
        $region106: #{tpu_custom_call.1} parent=103 // pred_check_branch
          %1469 = sbr.rel (%p1467) target = $region108
        $region107: #{tpu_custom_call.1} parent=103 // pred_region
          %s1470 = sand.u32 %s320, 1
          %s1471 = scalar_lea.sflag [#allocation4], %s1470
          %s1472 = sand.u32 %s320, 1
          %s1473 = smul.addr %s1472, 8
          %s1474 = scalar_lea.vmem [#allocation13], %s1473
          %1475 = dma.done %s1471, 128
        $region108: #{tpu_custom_call.1} parent=103 // pred_fallthru
          _
      $region104: #{tpu_custom_call.1} parent=5 // pred_fallthru
        _
    $region6: #{tpu_custom_call.1} parent=1 // loop_footer
      %s32 = sadd.s32 1, %s28
    $region7: #{tpu_custom_call.1} parent=1 // loop_footer_branch
      %27 = sbr.rel target = $region3
    $region8: #{tpu_custom_call.1} parent=1 // loop_exit
      _
    %1476 = vsyncpa [#allocation3], 1
    %s1477 = scalar_lea.sflag [#allocation3], 1
    %1478 = vsyncpa %s1477, 1
    %1479 = vsyncpa [#allocation6], 1
    %1480 = vsyncpa [#allocation9], 1
    %1481 = vsyncpa [#allocation12], 1
    %1482 = vsyncpa [#allocation4], 1
    %s1483 = scalar_lea.sflag [#allocation4], 1
    %1484 = vsyncpa %s1483, 1

</llo_original>
